<compile_context>
chip_gen: v7x
topology: tpu7x:2x2x1
jax: 0.10.0
libtpu: 0.0.40
codegen_flags: <defaults>
</compile_context>

<pallas_src>
import jax
import jax.numpy as jnp
from jax.experimental import pallas as pl
from jax.experimental.pallas import tpu as pltpu

GAMMA = 0.8
TEMPERATURE = 0.1
LARGE_NUM = 1000000000.0
# fp32 contract precision on the MXU (multi-pass bf16 decomposition). Pinned in
# BOTH the kernel and the reference so they agree to ~1e-6.
_MM_PRECISION = jax.lax.Precision.HIGHEST


def _pick_tq(batch):
    """Row-tile size: multiple of 128, dividing the batch, leaving >=2 grid steps
    when possible (two v7x TensorCores + something for the DMA pipeline)."""
    for tq in (256, 128):
        if batch % tq == 0 and batch // tq >= 2:
            return tq
    for tq in (512, 256, 128):
        if batch % tq == 0:
            return tq
    return batch


def sogclr_kernel(q1_ref, q2_ref, k1t_ref, k2t_ref, u_ref, unew_ref, lrow_ref):
    tq = q1_ref.shape[0]
    B = k1t_ref.shape[1]
    inv_t = 1.0 / TEMPERATURE
    g = GAMMA
    denom = 2.0 * (B - 1)

    q1 = q1_ref[...]                       # (TQ, D) query row tiles (pipelined)
    q2 = q2_ref[...]
    k1t = k1t_ref[...]                     # (D, B) resident transposed keys
    k2t = k2t_ref[...]
    u0 = u_ref[...]                        # (TQ, 1) u[index] slice

    # Positive logit = row-wise dot (diag(q1@h2.T) == diag(q2@h1.T)).
    pos = jnp.sum(q1 * q2, axis=1, keepdims=True)          # (TQ, 1)
    e_pos = jnp.exp(pos * inv_t)                           # (TQ, 1)

    # Fold 1/T into the small query tiles (2 (TQ,D) VPU multiplies) instead of
    # scaling 4 full (TQ,B) logit tiles.
    q1s = q1 * inv_t
    q2s = q2 * inv_t

    # Self-similarity diagonal mask, applied ONLY to the aa/bb tiles (see header
    # note on why a subtract-after-exp correction is not numerically safe there).
    row_off = pl.program_id(0) * tq
    col = jax.lax.broadcasted_iota(jnp.int32, (tq, B), 1)
    row = jax.lax.broadcasted_iota(jnp.int32, (tq, B), 0) + row_off
    is_diag = col == row                                   # (TQ, B) bool

    dn = (((1,), (0,)), ((), ()))          # canonical [TQ, D] @ [D, B]

    def one_side(qs, k_other_t, k_same_t):
        # --- logits vs. the other view (ab or ba): positive pair removed by the
        # exact (TQ,1) correction below instead of a full-tile mask multiply.
        ls_o = jax.lax.dot_general(qs, k_other_t, dn,
                                   precision=_MM_PRECISION,
                                   preferred_element_type=jnp.float32)
        e_o = jnp.exp(ls_o)
        s = jnp.sum(e_o, axis=1, keepdims=True)
        wss = jnp.sum(e_o * ls_o, axis=1, keepdims=True)

        # --- logits vs. the same view (aa or bb): zero the self column exactly.
        ls_s = jax.lax.dot_general(qs, k_same_t, dn,
                                   precision=_MM_PRECISION,
                                   preferred_element_type=jnp.float32)
        e_s = jnp.where(is_diag, 0.0, jnp.exp(ls_s))
        s = s + jnp.sum(e_s, axis=1, keepdims=True)
        wss = wss + jnp.sum(e_s * ls_s, axis=1, keepdims=True)

        # Remove the positive-pair column (neg_mask in the reference) and
        # un-scale the logit-weighted sum (logits were pre-scaled by 1/T).
        s = s - e_pos
        ws = TEMPERATURE * wss - pos * e_pos

        u_new = (1.0 - g) * u0 + g * s / denom             # (TQ, 1)
        expsum = ws / (u_new * denom)                      # (TQ, 1)
        return u_new, expsum

    u1, es1 = one_side(q1s, k2t, k1t)      # loss_a side: [ab | aa]
    u2, es2 = one_side(q2s, k1t, k2t)      # loss_b side: [ba | bb]

    unew_ref[...] = u1 + u2
    lrow_ref[...] = (es1 - pos) + (es2 - pos)              # loss_a + loss_b / row


def sogclr_loss(index, hidden1, hidden2, u):
    """Functional equivalent of SogCLR_Loss.forward. Returns (loss, updated u)."""
    B, D = hidden1.shape
    tq = _pick_tq(B)
    h1 = hidden1.astype(jnp.float32)
    h2 = hidden2.astype(jnp.float32)
    # One XLA transpose each, amortized over all grid steps: the kernel sees a
    # lane-dense (D, B) RHS for the MXU instead of re-transposing per step.
    h1t = h1.T
    h2t = h2.T
    u_old = u[index].reshape(B, 1).astype(jnp.float32)      # gather (glue)

    # Scoped-VMEM budget: resident transposed keys + double-buffered query/u/out
    # tiles + ~6 live (TQ, B) f32 logit/exp intermediates, with 2x headroom.
    est = 4 * (2 * D * B + 4 * tq * D + 6 * tq + 6 * tq * B)
    vmem_limit = int(min(max(2 * est, 32 * 1024 * 1024), 100 * 1024 * 1024))

    def call(single_buffer_keys):
        key_kw = dict(pipeline_mode=pl.Buffered(1)) if single_buffer_keys else {}
        return pl.pallas_call(
            sogclr_kernel,
            grid=(B // tq,),
            in_specs=[
                pl.BlockSpec((tq, D), lambda i: (i, 0)),             # q1 tile
                pl.BlockSpec((tq, D), lambda i: (i, 0)),             # q2 tile
                pl.BlockSpec((D, B), lambda i: (0, 0), **key_kw),    # h1.T keys
                pl.BlockSpec((D, B), lambda i: (0, 0), **key_kw),    # h2.T keys
                pl.BlockSpec((tq, 1), lambda i: (i, 0)),             # u[index]
            ],
            out_specs=(
                pl.BlockSpec((tq, 1), lambda i: (i, 0)),             # new u rows
                pl.BlockSpec((tq, 1), lambda i: (i, 0)),             # loss rows
            ),
            out_shape=(
                jax.ShapeDtypeStruct((B, 1), jnp.float32),
                jax.ShapeDtypeStruct((B, 1), jnp.float32),
            ),
            compiler_params=pltpu.CompilerParams(
                dimension_semantics=("parallel",),
                vmem_limit_bytes=vmem_limit),
        )(h1, h2, h1t, h2t, u_old)

    try:
        # Constant-index resident keys only need a single VMEM buffer.
        unew, lrow = call(True)
    except Exception:
        # Fallback for jax versions without BlockSpec pipeline_mode / Buffered(1).
        unew, lrow = call(False)

    loss = jnp.sum(lrow) / B                                 # tiny glue (mean)
    u = u.at[index].set(unew[:, 0])                          # scatter (glue)
    # TODO(synk): duplicate entries in `index` follow JAX scatter semantics, which
    # are not guaranteed to match PyTorch in-place assignment order.
    return loss, u


def sogclr_loss_ref(index, hidden1, hidden2, u, gamma=GAMMA, T=TEMPERATURE):
    """Pure-JAX reference mirroring the PyTorch module (same matmul precision)."""
    B = hidden1.shape[0]
    mm = lambda a, b: jnp.matmul(a, b, precision=_MM_PRECISION)
    labels = jax.nn.one_hot(jnp.arange(B), 2 * B, dtype=jnp.float32)
    masks = jnp.eye(B, dtype=jnp.float32)
    logits_aa = mm(hidden1, hidden1.T) - masks * LARGE_NUM
    logits_bb = mm(hidden2, hidden2.T) - masks * LARGE_NUM
    logits_ab = mm(hidden1, hidden2.T)
    logits_ba = mm(hidden2, hidden1.T)
    neg_mask = 1.0 - labels
    logits_ab_aa = jnp.concatenate([logits_ab, logits_aa], 1)
    logits_ba_bb = jnp.concatenate([logits_ba, logits_bb], 1)
    neg1 = jnp.exp(logits_ab_aa / T) * neg_mask
    neg2 = jnp.exp(logits_ba_bb / T) * neg_mask
    u_old = u[index]
    u1 = (1 - gamma) * u_old + gamma * jnp.sum(neg1, 1) / (2 * (B - 1))
    u2 = (1 - gamma) * u_old + gamma * jnp.sum(neg2, 1) / (2 * (B - 1))
    u = u.at[index].set(u1 + u2)
    w1 = neg1 / u1[:, None]
    w2 = neg2 / u2[:, None]

    def sce(labels, logits, weights):
        es = jnp.sum(weights * logits, 1, keepdims=True) / (2 * (B - 1))
        return -jnp.sum(labels * (logits - es), 1)

    loss = (sce(labels, logits_ab_aa, w1) + sce(labels, logits_ba_bb, w2)).mean()
    return loss, u


if __name__ == "__main__":
    key = jax.random.PRNGKey(0)

    def run_case(B, D, N):
        k1, k2 = jax.random.split(jax.random.fold_in(key, B))
        # L2-normalized embeddings (standard SimCLR/SogCLR usage) keep exp(./T) finite.
        h1 = jax.random.normal(k1, (B, D), dtype=jnp.float32)
        h2 = jax.random.normal(k2, (B, D), dtype=jnp.float32)
        h1 = h1 / jnp.linalg.norm(h1, axis=1, keepdims=True)
        h2 = h2 / jnp.linalg.norm(h2, axis=1, keepdims=True)
        index = jnp.arange(B, dtype=jnp.int32)
        u = jnp.zeros((N,), dtype=jnp.float32)

        loss, u_out = sogclr_loss(index, h1, h2, u)
        loss = jax.block_until_ready(loss)
        u_out = jax.block_until_ready(u_out)

        loss_ref, u_ref = sogclr_loss_ref(index, h1, h2, u)
        assert jnp.allclose(loss, loss_ref, rtol=1e-4, atol=1e-4), (loss, loss_ref)
        assert jnp.allclose(u_out, u_ref, rtol=1e-4, atol=1e-4)

    run_case(8, 32, 256)      # single-tile path (TQ == B, grid=(1,))
    run_case(256, 64, 1024)   # tiled path (TQ == 128, grid=(2,), parallel axis)
    print("KERNEL_OK")
</pallas_src>

<mosaic_0001>
module attributes {stable_mosaic.version = 11 : i64} {
  func.func @sogclr_kernel(%arg0: i32, %arg1: memref<8x32xf32, #tpu.memory_space<vmem>>, %arg2: memref<8x32xf32, #tpu.memory_space<vmem>>, %arg3: memref<32x8xf32, #tpu.memory_space<vmem>>, %arg4: memref<32x8xf32, #tpu.memory_space<vmem>>, %arg5: memref<8x1xf32, #tpu.memory_space<vmem>>, %arg6: memref<8x1xf32, #tpu.memory_space<vmem>>, %arg7: memref<8x1xf32, #tpu.memory_space<vmem>>) attributes {dimension_semantics = [#tpu.dimension_semantics<parallel>], iteration_bounds = array<i64: 1>, scalar_prefetch = 0 : i64, scratch_operands = 0 : i64, tpu.core_type = #tpu.core_type<tc>, window_params = [{transform_indices = @transform_0, window_bounds = array<i64: 8, 32>}, {transform_indices = @transform_1, window_bounds = array<i64: 8, 32>}, {pipeline_mode = #tpu.pipeline_mode<synchronous>, transform_indices = @transform_2, window_bounds = array<i64: 32, 8>}, {pipeline_mode = #tpu.pipeline_mode<synchronous>, transform_indices = @transform_3, window_bounds = array<i64: 32, 8>}, {transform_indices = @transform_4, window_bounds = array<i64: 8, 1>}, {transform_indices = @transform_5, window_bounds = array<i64: 8, 1>}, {transform_indices = @transform_6, window_bounds = array<i64: 8, 1>}]} {
    %c0 = arith.constant 0 : index
    %c0_0 = arith.constant 0 : index
    %0 = vector.load %arg1[%c0, %c0_0] : memref<8x32xf32, #tpu.memory_space<vmem>>, vector<8x32xf32>
    %c0_1 = arith.constant 0 : index
    %c0_2 = arith.constant 0 : index
    %1 = vector.load %arg2[%c0_1, %c0_2] : memref<8x32xf32, #tpu.memory_space<vmem>>, vector<8x32xf32>
    %c0_3 = arith.constant 0 : index
    %c0_4 = arith.constant 0 : index
    %2 = vector.load %arg3[%c0_3, %c0_4] : memref<32x8xf32, #tpu.memory_space<vmem>>, vector<32x8xf32>
    %c0_5 = arith.constant 0 : index
    %c0_6 = arith.constant 0 : index
    %3 = vector.load %arg4[%c0_5, %c0_6] : memref<32x8xf32, #tpu.memory_space<vmem>>, vector<32x8xf32>
    %c0_7 = arith.constant 0 : index
    %c0_8 = arith.constant 0 : index
    %4 = vector.load %arg5[%c0_7, %c0_8] : memref<8x1xf32, #tpu.memory_space<vmem>>, vector<8x1xf32>
    %5 = arith.mulf %0, %1 : vector<8x32xf32>
    %cst = arith.constant dense<0.000000e+00> : vector<8xf32>
    %6 = vector.multi_reduction <add>, %5, %cst [1] : vector<8x32xf32> to vector<8xf32>
    %7 = vector.shape_cast %6 : vector<8xf32> to vector<8x1xf32>
    %cst_9 = arith.constant 1.000000e+01 : f32
    %8 = vector.broadcast %cst_9 : f32 to vector<8x1xf32>
    %9 = arith.mulf %7, %8 : vector<8x1xf32>
    %10 = math.exp %9 : vector<8x1xf32>
    %cst_10 = arith.constant 1.000000e+01 : f32
    %11 = vector.broadcast %cst_10 : f32 to vector<8x32xf32>
    %12 = arith.mulf %0, %11 : vector<8x32xf32>
    %cst_11 = arith.constant 1.000000e+01 : f32
    %13 = vector.broadcast %cst_11 : f32 to vector<8x32xf32>
    %14 = arith.mulf %1, %13 : vector<8x32xf32>
    %c8_i32 = arith.constant 8 : i32
    %15 = arith.muli %arg0, %c8_i32 : i32
    %16 = tpu.iota {dimensions = array<i32: 1>} : vector<8x8xi32>
    %17 = tpu.iota {dimensions = array<i32: 0>} : vector<8x8xi32>
    %18 = vector.broadcast %15 : i32 to vector<8x8xi32>
    %19 = arith.addi %17, %18 : vector<8x8xi32>
    %20 = arith.cmpi eq, %16, %19 : vector<8x8xi32>
    %cst_12 = arith.constant dense<0.000000e+00> : vector<8x8xf32>
    %21 = tpu.matmul %12, %3, %cst_12 {dimension_numbers = #tpu.dot_dimension_numbers<[1], [0], [0], [1], [0, 0, 1, 1], [], []>, precision = #tpu.contract_precision<fp32>} : vector<8x32xf32>, vector<32x8xf32>, vector<8x8xf32> -> vector<8x8xf32>
    %22 = math.exp %21 : vector<8x8xf32>
    %cst_13 = arith.constant dense<0.000000e+00> : vector<8xf32>
    %23 = vector.multi_reduction <add>, %22, %cst_13 [1] : vector<8x8xf32> to vector<8xf32>
    %24 = vector.shape_cast %23 : vector<8xf32> to vector<8x1xf32>
    %25 = arith.mulf %22, %21 : vector<8x8xf32>
    %cst_14 = arith.constant dense<0.000000e+00> : vector<8xf32>
    %26 = vector.multi_reduction <add>, %25, %cst_14 [1] : vector<8x8xf32> to vector<8xf32>
    %27 = vector.shape_cast %26 : vector<8xf32> to vector<8x1xf32>
    %cst_15 = arith.constant dense<0.000000e+00> : vector<8x8xf32>
    %28 = tpu.matmul %12, %2, %cst_15 {dimension_numbers = #tpu.dot_dimension_numbers<[1], [0], [0], [1], [0, 0, 1, 1], [], []>, precision = #tpu.contract_precision<fp32>} : vector<8x32xf32>, vector<32x8xf32>, vector<8x8xf32> -> vector<8x8xf32>
    %29 = math.exp %28 : vector<8x8xf32>
    %cst_16 = arith.constant 0.000000e+00 : f32
    %30 = vector.broadcast %cst_16 : f32 to vector<8x8xf32>
    %31 = arith.select %20, %30, %29 : vector<8x8xi1>, vector<8x8xf32>
    %cst_17 = arith.constant dense<0.000000e+00> : vector<8xf32>
    %32 = vector.multi_reduction <add>, %31, %cst_17 [1] : vector<8x8xf32> to vector<8xf32>
    %33 = vector.shape_cast %32 : vector<8xf32> to vector<8x1xf32>
    %34 = arith.addf %24, %33 : vector<8x1xf32>
    %35 = arith.mulf %31, %28 : vector<8x8xf32>
    %cst_18 = arith.constant dense<0.000000e+00> : vector<8xf32>
    %36 = vector.multi_reduction <add>, %35, %cst_18 [1] : vector<8x8xf32> to vector<8xf32>
    %37 = vector.shape_cast %36 : vector<8xf32> to vector<8x1xf32>
    %38 = arith.addf %27, %37 : vector<8x1xf32>
    %39 = arith.subf %34, %10 : vector<8x1xf32>
    %cst_19 = arith.constant 1.000000e-01 : f32
    %40 = vector.broadcast %cst_19 : f32 to vector<8x1xf32>
    %41 = arith.mulf %40, %38 : vector<8x1xf32>
    %42 = arith.mulf %7, %10 : vector<8x1xf32>
    %43 = arith.subf %41, %42 : vector<8x1xf32>
    %cst_20 = arith.constant 2.000000e-01 : f32
    %44 = vector.broadcast %cst_20 : f32 to vector<8x1xf32>
    %45 = arith.mulf %44, %4 : vector<8x1xf32>
    %cst_21 = arith.constant 8.000000e-01 : f32
    %46 = vector.broadcast %cst_21 : f32 to vector<8x1xf32>
    %47 = arith.mulf %46, %39 : vector<8x1xf32>
    %cst_22 = arith.constant 1.400000e+01 : f32
    %48 = vector.broadcast %cst_22 : f32 to vector<8x1xf32>
    %49 = arith.divf %47, %48 : vector<8x1xf32>
    %50 = arith.addf %45, %49 : vector<8x1xf32>
    %cst_23 = arith.constant 1.400000e+01 : f32
    %51 = vector.broadcast %cst_23 : f32 to vector<8x1xf32>
    %52 = arith.mulf %50, %51 : vector<8x1xf32>
    %53 = arith.divf %43, %52 : vector<8x1xf32>
    %cst_24 = arith.constant dense<0.000000e+00> : vector<8x8xf32>
    %54 = tpu.matmul %14, %2, %cst_24 {dimension_numbers = #tpu.dot_dimension_numbers<[1], [0], [0], [1], [0, 0, 1, 1], [], []>, precision = #tpu.contract_precision<fp32>} : vector<8x32xf32>, vector<32x8xf32>, vector<8x8xf32> -> vector<8x8xf32>
    %55 = math.exp %54 : vector<8x8xf32>
    %cst_25 = arith.constant dense<0.000000e+00> : vector<8xf32>
    %56 = vector.multi_reduction <add>, %55, %cst_25 [1] : vector<8x8xf32> to vector<8xf32>
    %57 = vector.shape_cast %56 : vector<8xf32> to vector<8x1xf32>
    %58 = arith.mulf %55, %54 : vector<8x8xf32>
    %cst_26 = arith.constant dense<0.000000e+00> : vector<8xf32>
    %59 = vector.multi_reduction <add>, %58, %cst_26 [1] : vector<8x8xf32> to vector<8xf32>
    %60 = vector.shape_cast %59 : vector<8xf32> to vector<8x1xf32>
    %cst_27 = arith.constant dense<0.000000e+00> : vector<8x8xf32>
    %61 = tpu.matmul %14, %3, %cst_27 {dimension_numbers = #tpu.dot_dimension_numbers<[1], [0], [0], [1], [0, 0, 1, 1], [], []>, precision = #tpu.contract_precision<fp32>} : vector<8x32xf32>, vector<32x8xf32>, vector<8x8xf32> -> vector<8x8xf32>
    %62 = math.exp %61 : vector<8x8xf32>
    %cst_28 = arith.constant 0.000000e+00 : f32
    %63 = vector.broadcast %cst_28 : f32 to vector<8x8xf32>
    %64 = arith.select %20, %63, %62 : vector<8x8xi1>, vector<8x8xf32>
    %cst_29 = arith.constant dense<0.000000e+00> : vector<8xf32>
    %65 = vector.multi_reduction <add>, %64, %cst_29 [1] : vector<8x8xf32> to vector<8xf32>
    %66 = vector.shape_cast %65 : vector<8xf32> to vector<8x1xf32>
    %67 = arith.addf %57, %66 : vector<8x1xf32>
    %68 = arith.mulf %64, %61 : vector<8x8xf32>
    %cst_30 = arith.constant dense<0.000000e+00> : vector<8xf32>
    %69 = vector.multi_reduction <add>, %68, %cst_30 [1] : vector<8x8xf32> to vector<8xf32>
    %70 = vector.shape_cast %69 : vector<8xf32> to vector<8x1xf32>
    %71 = arith.addf %60, %70 : vector<8x1xf32>
    %72 = arith.subf %67, %10 : vector<8x1xf32>
    %cst_31 = arith.constant 1.000000e-01 : f32
    %73 = vector.broadcast %cst_31 : f32 to vector<8x1xf32>
    %74 = arith.mulf %73, %71 : vector<8x1xf32>
    %75 = arith.mulf %7, %10 : vector<8x1xf32>
    %76 = arith.subf %74, %75 : vector<8x1xf32>
    %cst_32 = arith.constant 2.000000e-01 : f32
    %77 = vector.broadcast %cst_32 : f32 to vector<8x1xf32>
    %78 = arith.mulf %77, %4 : vector<8x1xf32>
    %cst_33 = arith.constant 8.000000e-01 : f32
    %79 = vector.broadcast %cst_33 : f32 to vector<8x1xf32>
    %80 = arith.mulf %79, %72 : vector<8x1xf32>
    %cst_34 = arith.constant 1.400000e+01 : f32
    %81 = vector.broadcast %cst_34 : f32 to vector<8x1xf32>
    %82 = arith.divf %80, %81 : vector<8x1xf32>
    %83 = arith.addf %78, %82 : vector<8x1xf32>
    %cst_35 = arith.constant 1.400000e+01 : f32
    %84 = vector.broadcast %cst_35 : f32 to vector<8x1xf32>
    %85 = arith.mulf %83, %84 : vector<8x1xf32>
    %86 = arith.divf %76, %85 : vector<8x1xf32>
    %87 = arith.addf %50, %83 : vector<8x1xf32>
    %c0_36 = arith.constant 0 : index
    %c0_37 = arith.constant 0 : index
    %88 = vector.load %arg6[%c0_36, %c0_37] : memref<8x1xf32, #tpu.memory_space<vmem>>, vector<8x1xf32>
    tpu.vector_store %arg6[%c0_36, %c0_37], %87 {strides = array<i32>} : memref<8x1xf32, #tpu.memory_space<vmem>>, vector<8x1xf32>,
    %89 = arith.subf %53, %7 : vector<8x1xf32>
    %90 = arith.subf %86, %7 : vector<8x1xf32>
    %91 = arith.addf %89, %90 : vector<8x1xf32>
    %c0_38 = arith.constant 0 : index
    %c0_39 = arith.constant 0 : index
    %92 = vector.load %arg7[%c0_38, %c0_39] : memref<8x1xf32, #tpu.memory_space<vmem>>, vector<8x1xf32>
    tpu.vector_store %arg7[%c0_38, %c0_39], %91 {strides = array<i32>} : memref<8x1xf32, #tpu.memory_space<vmem>>, vector<8x1xf32>,
    return
  }
  func.func @transform_0(%arg0: i32) -> (i32, i32) {
    %c0_i32 = arith.constant 0 : i32
    %c0_i32_0 = arith.constant 0 : i32
    return %arg0, %c0_i32 : i32, i32
  }
  func.func @transform_1(%arg0: i32) -> (i32, i32) {
    %c0_i32 = arith.constant 0 : i32
    %c0_i32_0 = arith.constant 0 : i32
    return %arg0, %c0_i32 : i32, i32
  }
  func.func @transform_2(%arg0: i32) -> (i32, i32) {
    %c0_i32 = arith.constant 0 : i32
    %c0_i32_0 = arith.constant 0 : i32
    %c0_i32_1 = arith.constant 0 : i32
    return %c0_i32, %c0_i32_0 : i32, i32
  }
  func.func @transform_3(%arg0: i32) -> (i32, i32) {
    %c0_i32 = arith.constant 0 : i32
    %c0_i32_0 = arith.constant 0 : i32
    %c0_i32_1 = arith.constant 0 : i32
    return %c0_i32, %c0_i32_0 : i32, i32
  }
  func.func @transform_4(%arg0: i32) -> (i32, i32) {
    %c0_i32 = arith.constant 0 : i32
    %c0_i32_0 = arith.constant 0 : i32
    return %arg0, %c0_i32 : i32, i32
  }
  func.func @transform_5(%arg0: i32) -> (i32, i32) {
    %c0_i32 = arith.constant 0 : i32
    %c0_i32_0 = arith.constant 0 : i32
    return %arg0, %c0_i32 : i32, i32
  }
  func.func @transform_6(%arg0: i32) -> (i32, i32) {
    %c0_i32 = arith.constant 0 : i32
    %c0_i32_0 = arith.constant 0 : i32
    return %arg0, %c0_i32 : i32, i32
  }
}

module attributes {stable_mosaic.version = 11 : i64} {
  func.func @sogclr_kernel(%arg0: i32, %arg1: memref<8x32xf32, #tpu.memory_space<vmem>>, %arg2: memref<8x32xf32, #tpu.memory_space<vmem>>, %arg3: memref<32x8xf32, #tpu.memory_space<vmem>>, %arg4: memref<32x8xf32, #tpu.memory_space<vmem>>, %arg5: memref<8x1xf32, #tpu.memory_space<vmem>>, %arg6: memref<8x1xf32, #tpu.memory_space<vmem>>, %arg7: memref<8x1xf32, #tpu.memory_space<vmem>>) attributes {dimension_semantics = [#tpu.dimension_semantics<parallel>], iteration_bounds = array<i64: 1>, scalar_prefetch = 0 : i64, scratch_operands = 0 : i64, tpu.core_type = #tpu.core_type<tc>, window_params = [{transform_indices = @transform_0, window_bounds = array<i64: 8, 32>}, {transform_indices = @transform_1, window_bounds = array<i64: 8, 32>}, {pipeline_mode = #tpu.pipeline_mode<synchronous>, transform_indices = @transform_2, window_bounds = array<i64: 32, 8>}, {pipeline_mode = #tpu.pipeline_mode<synchronous>, transform_indices = @transform_3, window_bounds = array<i64: 32, 8>}, {transform_indices = @transform_4, window_bounds = array<i64: 8, 1>}, {transform_indices = @transform_5, window_bounds = array<i64: 8, 1>}, {transform_indices = @transform_6, window_bounds = array<i64: 8, 1>}]} {
    %c0 = arith.constant 0 : index
    %c0_0 = arith.constant 0 : index
    %0 = vector.load %arg1[%c0, %c0_0] : memref<8x32xf32, #tpu.memory_space<vmem>>, vector<8x32xf32>
    %c0_1 = arith.constant 0 : index
    %c0_2 = arith.constant 0 : index
    %1 = vector.load %arg2[%c0_1, %c0_2] : memref<8x32xf32, #tpu.memory_space<vmem>>, vector<8x32xf32>
    %c0_3 = arith.constant 0 : index
    %c0_4 = arith.constant 0 : index
    %2 = vector.load %arg3[%c0_3, %c0_4] : memref<32x8xf32, #tpu.memory_space<vmem>>, vector<32x8xf32>
    %c0_5 = arith.constant 0 : index
    %c0_6 = arith.constant 0 : index
    %3 = vector.load %arg4[%c0_5, %c0_6] : memref<32x8xf32, #tpu.memory_space<vmem>>, vector<32x8xf32>
    %c0_7 = arith.constant 0 : index
    %c0_8 = arith.constant 0 : index
    %4 = vector.load %arg5[%c0_7, %c0_8] : memref<8x1xf32, #tpu.memory_space<vmem>>, vector<8x1xf32>
    %5 = arith.mulf %0, %1 : vector<8x32xf32>
    %cst = arith.constant dense<0.000000e+00> : vector<8xf32>
    %6 = vector.multi_reduction <add>, %5, %cst [1] : vector<8x32xf32> to vector<8xf32>
    %7 = vector.shape_cast %6 : vector<8xf32> to vector<8x1xf32>
    %cst_9 = arith.constant 1.000000e+01 : f32
    %8 = vector.broadcast %cst_9 : f32 to vector<8x1xf32>
    %9 = arith.mulf %7, %8 : vector<8x1xf32>
    %10 = math.exp %9 : vector<8x1xf32>
    %cst_10 = arith.constant 1.000000e+01 : f32
    %11 = vector.broadcast %cst_10 : f32 to vector<8x32xf32>
    %12 = arith.mulf %0, %11 : vector<8x32xf32>
    %cst_11 = arith.constant 1.000000e+01 : f32
    %13 = vector.broadcast %cst_11 : f32 to vector<8x32xf32>
    %14 = arith.mulf %1, %13 : vector<8x32xf32>
    %c8_i32 = arith.constant 8 : i32
    %15 = arith.muli %arg0, %c8_i32 : i32
    %16 = tpu.iota {dimensions = array<i32: 1>} : vector<8x8xi32>
    %17 = tpu.iota {dimensions = array<i32: 0>} : vector<8x8xi32>
    %18 = vector.broadcast %15 : i32 to vector<8x8xi32>
    %19 = arith.addi %17, %18 : vector<8x8xi32>
    %20 = arith.cmpi eq, %16, %19 : vector<8x8xi32>
    %cst_12 = arith.constant dense<0.000000e+00> : vector<8x8xf32>
    %21 = tpu.matmul %12, %3, %cst_12 {dimension_numbers = #tpu.dot_dimension_numbers<[1], [0], [0], [1], [0, 0, 1, 1], [], []>, precision = #tpu.contract_precision<fp32>} : vector<8x32xf32>, vector<32x8xf32>, vector<8x8xf32> -> vector<8x8xf32>
    %22 = math.exp %21 : vector<8x8xf32>
    %cst_13 = arith.constant dense<0.000000e+00> : vector<8xf32>
    %23 = vector.multi_reduction <add>, %22, %cst_13 [1] : vector<8x8xf32> to vector<8xf32>
    %24 = vector.shape_cast %23 : vector<8xf32> to vector<8x1xf32>
    %25 = arith.mulf %22, %21 : vector<8x8xf32>
    %cst_14 = arith.constant dense<0.000000e+00> : vector<8xf32>
    %26 = vector.multi_reduction <add>, %25, %cst_14 [1] : vector<8x8xf32> to vector<8xf32>
    %27 = vector.shape_cast %26 : vector<8xf32> to vector<8x1xf32>
    %cst_15 = arith.constant dense<0.000000e+00> : vector<8x8xf32>
    %28 = tpu.matmul %12, %2, %cst_15 {dimension_numbers = #tpu.dot_dimension_numbers<[1], [0], [0], [1], [0, 0, 1, 1], [], []>, precision = #tpu.contract_precision<fp32>} : vector<8x32xf32>, vector<32x8xf32>, vector<8x8xf32> -> vector<8x8xf32>
    %29 = math.exp %28 : vector<8x8xf32>
    %cst_16 = arith.constant 0.000000e+00 : f32
    %30 = vector.broadcast %cst_16 : f32 to vector<8x8xf32>
    %31 = arith.select %20, %30, %29 : vector<8x8xi1>, vector<8x8xf32>
    %cst_17 = arith.constant dense<0.000000e+00> : vector<8xf32>
    %32 = vector.multi_reduction <add>, %31, %cst_17 [1] : vector<8x8xf32> to vector<8xf32>
    %33 = vector.shape_cast %32 : vector<8xf32> to vector<8x1xf32>
    %34 = arith.addf %24, %33 : vector<8x1xf32>
    %35 = arith.mulf %31, %28 : vector<8x8xf32>
    %cst_18 = arith.constant dense<0.000000e+00> : vector<8xf32>
    %36 = vector.multi_reduction <add>, %35, %cst_18 [1] : vector<8x8xf32> to vector<8xf32>
    %37 = vector.shape_cast %36 : vector<8xf32> to vector<8x1xf32>
    %38 = arith.addf %27, %37 : vector<8x1xf32>
    %39 = arith.subf %34, %10 : vector<8x1xf32>
    %cst_19 = arith.constant 1.000000e-01 : f32
    %40 = vector.broadcast %cst_19 : f32 to vector<8x1xf32>
    %41 = arith.mulf %40, %38 : vector<8x1xf32>
    %42 = arith.mulf %7, %10 : vector<8x1xf32>
    %43 = arith.subf %41, %42 : vector<8x1xf32>
    %cst_20 = arith.constant 2.000000e-01 : f32
    %44 = vector.broadcast %cst_20 : f32 to vector<8x1xf32>
    %45 = arith.mulf %44, %4 : vector<8x1xf32>
    %cst_21 = arith.constant 8.000000e-01 : f32
    %46 = vector.broadcast %cst_21 : f32 to vector<8x1xf32>
    %47 = arith.mulf %46, %39 : vector<8x1xf32>
    %cst_22 = arith.constant 1.400000e+01 : f32
    %48 = vector.broadcast %cst_22 : f32 to vector<8x1xf32>
    %49 = arith.divf %47, %48 : vector<8x1xf32>
    %50 = arith.addf %45, %49 : vector<8x1xf32>
    %cst_23 = arith.constant 1.400000e+01 : f32
    %51 = vector.broadcast %cst_23 : f32 to vector<8x1xf32>
    %52 = arith.mulf %50, %51 : vector<8x1xf32>
    %53 = arith.divf %43, %52 : vector<8x1xf32>
    %cst_24 = arith.constant dense<0.000000e+00> : vector<8x8xf32>
    %54 = tpu.matmul %14, %2, %cst_24 {dimension_numbers = #tpu.dot_dimension_numbers<[1], [0], [0], [1], [0, 0, 1, 1], [], []>, precision = #tpu.contract_precision<fp32>} : vector<8x32xf32>, vector<32x8xf32>, vector<8x8xf32> -> vector<8x8xf32>
    %55 = math.exp %54 : vector<8x8xf32>
    %cst_25 = arith.constant dense<0.000000e+00> : vector<8xf32>
    %56 = vector.multi_reduction <add>, %55, %cst_25 [1] : vector<8x8xf32> to vector<8xf32>
    %57 = vector.shape_cast %56 : vector<8xf32> to vector<8x1xf32>
    %58 = arith.mulf %55, %54 : vector<8x8xf32>
    %cst_26 = arith.constant dense<0.000000e+00> : vector<8xf32>
    %59 = vector.multi_reduction <add>, %58, %cst_26 [1] : vector<8x8xf32> to vector<8xf32>
    %60 = vector.shape_cast %59 : vector<8xf32> to vector<8x1xf32>
    %cst_27 = arith.constant dense<0.000000e+00> : vector<8x8xf32>
    %61 = tpu.matmul %14, %3, %cst_27 {dimension_numbers = #tpu.dot_dimension_numbers<[1], [0], [0], [1], [0, 0, 1, 1], [], []>, precision = #tpu.contract_precision<fp32>} : vector<8x32xf32>, vector<32x8xf32>, vector<8x8xf32> -> vector<8x8xf32>
    %62 = math.exp %61 : vector<8x8xf32>
    %cst_28 = arith.constant 0.000000e+00 : f32
    %63 = vector.broadcast %cst_28 : f32 to vector<8x8xf32>
    %64 = arith.select %20, %63, %62 : vector<8x8xi1>, vector<8x8xf32>
    %cst_29 = arith.constant dense<0.000000e+00> : vector<8xf32>
    %65 = vector.multi_reduction <add>, %64, %cst_29 [1] : vector<8x8xf32> to vector<8xf32>
    %66 = vector.shape_cast %65 : vector<8xf32> to vector<8x1xf32>
    %67 = arith.addf %57, %66 : vector<8x1xf32>
    %68 = arith.mulf %64, %61 : vector<8x8xf32>
    %cst_30 = arith.constant dense<0.000000e+00> : vector<8xf32>
    %69 = vector.multi_reduction <add>, %68, %cst_30 [1] : vector<8x8xf32> to vector<8xf32>
    %70 = vector.shape_cast %69 : vector<8xf32> to vector<8x1xf32>
    %71 = arith.addf %60, %70 : vector<8x1xf32>
    %72 = arith.subf %67, %10 : vector<8x1xf32>
    %cst_31 = arith.constant 1.000000e-01 : f32
    %73 = vector.broadcast %cst_31 : f32 to vector<8x1xf32>
    %74 = arith.mulf %73, %71 : vector<8x1xf32>
    %75 = arith.mulf %7, %10 : vector<8x1xf32>
    %76 = arith.subf %74, %75 : vector<8x1xf32>
    %cst_32 = arith.constant 2.000000e-01 : f32
    %77 = vector.broadcast %cst_32 : f32 to vector<8x1xf32>
    %78 = arith.mulf %77, %4 : vector<8x1xf32>
    %cst_33 = arith.constant 8.000000e-01 : f32
    %79 = vector.broadcast %cst_33 : f32 to vector<8x1xf32>
    %80 = arith.mulf %79, %72 : vector<8x1xf32>
    %cst_34 = arith.constant 1.400000e+01 : f32
    %81 = vector.broadcast %cst_34 : f32 to vector<8x1xf32>
    %82 = arith.divf %80, %81 : vector<8x1xf32>
    %83 = arith.addf %78, %82 : vector<8x1xf32>
    %cst_35 = arith.constant 1.400000e+01 : f32
    %84 = vector.broadcast %cst_35 : f32 to vector<8x1xf32>
    %85 = arith.mulf %83, %84 : vector<8x1xf32>
    %86 = arith.divf %76, %85 : vector<8x1xf32>
    %87 = arith.addf %50, %83 : vector<8x1xf32>
    %c0_36 = arith.constant 0 : index
    %c0_37 = arith.constant 0 : index
    %88 = vector.load %arg6[%c0_36, %c0_37] : memref<8x1xf32, #tpu.memory_space<vmem>>, vector<8x1xf32>
    tpu.vector_store %arg6[%c0_36, %c0_37], %87 {strides = array<i32>} : memref<8x1xf32, #tpu.memory_space<vmem>>, vector<8x1xf32>,
    %89 = arith.subf %53, %7 : vector<8x1xf32>
    %90 = arith.subf %86, %7 : vector<8x1xf32>
    %91 = arith.addf %89, %90 : vector<8x1xf32>
    %c0_38 = arith.constant 0 : index
    %c0_39 = arith.constant 0 : index
    %92 = vector.load %arg7[%c0_38, %c0_39] : memref<8x1xf32, #tpu.memory_space<vmem>>, vector<8x1xf32>
    tpu.vector_store %arg7[%c0_38, %c0_39], %91 {strides = array<i32>} : memref<8x1xf32, #tpu.memory_space<vmem>>, vector<8x1xf32>,
    return
  }
  func.func @transform_0(%arg0: i32) -> (i32, i32) {
    %c0_i32 = arith.constant 0 : i32
    %c0_i32_0 = arith.constant 0 : i32
    return %arg0, %c0_i32 : i32, i32
  }
  func.func @transform_1(%arg0: i32) -> (i32, i32) {
    %c0_i32 = arith.constant 0 : i32
    %c0_i32_0 = arith.constant 0 : i32
    return %arg0, %c0_i32 : i32, i32
  }
  func.func @transform_2(%arg0: i32) -> (i32, i32) {
    %c0_i32 = arith.constant 0 : i32
    %c0_i32_0 = arith.constant 0 : i32
    %c0_i32_1 = arith.constant 0 : i32
    return %c0_i32, %c0_i32_0 : i32, i32
  }
  func.func @transform_3(%arg0: i32) -> (i32, i32) {
    %c0_i32 = arith.constant 0 : i32
    %c0_i32_0 = arith.constant 0 : i32
    %c0_i32_1 = arith.constant 0 : i32
    return %c0_i32, %c0_i32_0 : i32, i32
  }
  func.func @transform_4(%arg0: i32) -> (i32, i32) {
    %c0_i32 = arith.constant 0 : i32
    %c0_i32_0 = arith.constant 0 : i32
    return %arg0, %c0_i32 : i32, i32
  }
  func.func @transform_5(%arg0: i32) -> (i32, i32) {
    %c0_i32 = arith.constant 0 : i32
    %c0_i32_0 = arith.constant 0 : i32
    return %arg0, %c0_i32 : i32, i32
  }
  func.func @transform_6(%arg0: i32) -> (i32, i32) {
    %c0_i32 = arith.constant 0 : i32
    %c0_i32_0 = arith.constant 0 : i32
    return %arg0, %c0_i32 : i32, i32
  }
}

</mosaic_0001>

<llo_original>
// kernel: tpu_custom_call.1
$region0: #{tpu_custom_call.1}
  #allocation0 [shape = 'u32[]', space=smem, size = 0x4, offset = 0x4, fixed_abs, tag = 'smem constant byte address 0x4 - core index']
  #allocation1 [shape = 'u32[144,128]{1,0:T(1,128)}', space=vmem, size = 0x12000, scoped, tag = 'internal scratch']
  %s0 = inlined_call_operand.vmem [shape: f32[8,32], index: 0, kind: input, shape index: {}]
  %s1 = inlined_call_operand.vmem [shape: f32[8,32], index: 1, kind: input, shape index: {}]
  %s2 = inlined_call_operand.vmem [shape: f32[32,8], index: 2, kind: input, shape index: {}]
  %s3 = inlined_call_operand.vmem [shape: f32[32,8], index: 3, kind: input, shape index: {}]
  %s4 = inlined_call_operand.vmem [shape: f32[8,1], index: 4, kind: input, shape index: {}]
  %s5 = inlined_call_operand.vmem [shape: f32[8,1], index: 5, kind: output, shape index: {0}]
  %s6 = inlined_call_operand.vmem [shape: f32[8,1], index: 6, kind: output, shape index: {1}]
  %7 = xla_tuple %s5, %s6
  %s8 = sld [smem:[#allocation0]]
  $region38: #{tpu_custom_call.1} parent=0
    _
  %s10 = ssub.s32 1, %s8
  %s11 = scalar_select 0, %s10, %s8
  // Predicated region
  $region2: #{tpu_custom_call.1} parent=0 // pred_check
    _
  $region3: #{tpu_custom_call.1} parent=0 // pred_check_branch
    %13 = sbr.rel (0) target = $region5
  $region4: #{tpu_custom_call.1} parent=0 // pred_region
    _
  $region5: #{tpu_custom_call.1} parent=0 // pred_fallthru
    _
  // Predicated region
  $region6: #{tpu_custom_call.1} parent=0 // pred_check
    _
  $region7: #{tpu_custom_call.1} parent=0 // pred_check_branch
    %15 = sbr.rel (0) target = $region9
  $region8: #{tpu_custom_call.1} parent=0 // pred_region
    _
  $region9: #{tpu_custom_call.1} parent=0 // pred_fallthru
    _
  // Predicated region
  $region10: #{tpu_custom_call.1} parent=0 // pred_check
    _
  $region11: #{tpu_custom_call.1} parent=0 // pred_check_branch
    %17 = sbr.rel (0) target = $region13
  $region12: #{tpu_custom_call.1} parent=0 // pred_region
    _
  $region13: #{tpu_custom_call.1} parent=0 // pred_fallthru
    _
  // Predicated region
  $region14: #{tpu_custom_call.1} parent=0 // pred_check
    _
  $region15: #{tpu_custom_call.1} parent=0 // pred_check_branch
    %19 = sbr.rel (0) target = $region17
  $region16: #{tpu_custom_call.1} parent=0 // pred_region
    _
  $region17: #{tpu_custom_call.1} parent=0 // pred_fallthru
    _
  // Predicated region
  $region18: #{tpu_custom_call.1} parent=0 // pred_check
    _
  $region19: #{tpu_custom_call.1} parent=0 // pred_check_branch
    %21 = sbr.rel (0) target = $region21
  $region20: #{tpu_custom_call.1} parent=0 // pred_region
    _
  $region21: #{tpu_custom_call.1} parent=0 // pred_fallthru
    _
  %v22 = vld [vmem:[%s0] sm:$0xff]
  %v23 = vld [vmem:[%s1] sm:$0xff]
  %v24 = vld [vmem:[%s2] sm:$0xff]
  %v25 = vld [vmem:[%s2 + $0x8] sm:$0xff]
  %v26 = vld [vmem:[%s2 + $0x10] sm:$0xff]
  %v27 = vld [vmem:[%s2 + $0x18] sm:$0xff]
  %v28 = vld [vmem:[%s3] sm:$0xff]
  %v29 = vld [vmem:[%s3 + $0x8] sm:$0xff]
  %v30 = vld [vmem:[%s3 + $0x10] sm:$0xff]
  %v31 = vld [vmem:[%s3 + $0x18] sm:$0xff]
  %v32 = vld [vmem:[%s4] sm:$0xff]
  %v33 = vmul.f32 %v22, %v23
  %vm34 = vcmask 261120
  %v35 = vsel %vm34, %v33, 0.0
  %36 = vadd.xlane.f32.xlu0 %v35
  %v37 = vpop.xlane.xlu0 %36
  %v38 = vmul.f32 %v37, 10.0
  %v39 = vmul.f32 %v38, 1.442695
  %v40 = vpow.pop %v39
  %v41 = vmul.f32 %v22, 10.0
  %v42 = vmul.f32 %v23, 10.0
  %s43 = smul.u32 0, 8
  %v44 = vlaneseq
  %v45 = vand.u32 %v44, 127
  %v46 = vlaneseq
  %v47 = vshrl.u32 %v46, 7
  %v48 = vstv %s43
  %v49 = vadd.s32 %v47, %v48
  %vm50 = vcmp.eq.s32.totalorder %v45, %v49
  %v52 = vsel %vm34, %v41, 0
  %54 = vmatprep.subr.mxu0 0.0
  %v55 = vand.u32 %v28, 4294901760
  %56 = vmatpush1.msra.mxu0 %v55
  %57 = vmatprep.subr.mxu0 0.0
  %v58 = vand.u32 %v29, 4294901760
  %59 = vmatpush1.msra.mxu0 %v58
  %60 = vmatprep.subr.mxu0 0.0
  %v61 = vand.u32 %v30, 4294901760
  %62 = vmatpush1.msra.mxu0 %v61
  %63 = vmatprep.subr.mxu0 0.0
  %v64 = vand.u32 %v31, 4294901760
  %65 = vmatpush1.msra.mxu0 %v64
  %66 = vmatprep.subr.mxu0 0.0
  %67 = vmatpush1.msra.mxu0 0.0
  %68 = vmatprep.subr.mxu0 0.0
  %69 = vmatpush1.msra.mxu0 0.0
  %70 = vmatprep.subr.mxu0 0.0
  %71 = vmatpush1.msra.mxu0 0.0
  %72 = vmatprep.subr.mxu0 0.0
  %73 = vmatpush1.msra.mxu0 0.0
  %74 = vmatprep.subr.mxu0 0.0
  %75 = vmatpush1.msra.mxu0 0.0
  %76 = vmatprep.subr.mxu0 0.0
  %77 = vmatpush1.msra.mxu0 0.0
  %78 = vmatprep.subr.mxu0 0.0
  %79 = vmatpush1.msra.mxu0 0.0
  %80 = vmatprep.subr.mxu0 0.0
  %81 = vmatpush1.msra.mxu0 0.0
  %82 = vmatprep.subr.mxu0 0.0
  %83 = vmatpush1.msra.mxu0 0.0
  %84 = vmatprep.subr.mxu0 0.0
  %85 = vmatpush1.msra.mxu0 0.0
  %86 = vmatprep.subr.mxu0 0.0
  %87 = vmatpush1.msra.mxu0 0.0
  %88 = vmatprep.subr.mxu0 0.0
  %89 = vmatpush1.msra.mxu0 0.0
  %90 = vmatprep.subr.mxu0 0.0
  %91 = vmatpush1.msra.mxu0 0.0
  %92 = vmatprep.subr.mxu0 0.0
  %93 = vmatpush1.msra.mxu0 0.0
  %94 = vmatprep.subr.mxu0 0.0
  %95 = vmatpush1.msra.mxu0 0.0
  %96 = vmatprep.subr.mxu0 0.0
  %97 = vmatpush1.msra.mxu0 0.0
  %98 = vmatprep.subr.mxu0 0.0
  %99 = vmatpush1.msra.mxu0 0.0
  %100 = vmatprep.subr.mxu0 0.0
  %101 = vmatpush1.msra.mxu0 0.0
  %102 = vmatprep.subr.mxu0 0.0
  %103 = vmatpush1.msra.mxu0 0.0
  %104 = vmatprep.subr.mxu0 0.0
  %105 = vmatpush1.msra.mxu0 0.0
  %106 = vmatprep.subr.mxu0 0.0
  %107 = vmatpush1.msra.mxu0 0.0
  %108 = vmatprep.subr.mxu0 0.0
  %109 = vmatpush1.msra.mxu0 0.0
  %110 = vmatprep.subr.mxu0 0.0
  %111 = vmatpush1.msra.mxu0 0.0
  %112 = vmatprep.subr.mxu0 0.0
  %113 = vmatpush1.msra.mxu0 0.0
  %114 = vmatprep.subr.mxu0 0.0
  %115 = vmatpush1.msra.mxu0 0.0
  %116 = vmatprep.subr.mxu0 0.0
  %117 = vmatpush1.msra.mxu0 0.0
  %118 = vmatprep.subr.mxu0 0.0
  %119 = vmatpush1.msra.mxu0 0.0
  %120 = vmatprep.subr.mxu0 0.0
  %121 = vmatpush1.msra.mxu0 0.0
  %122 = vmatprep.mubr.f32.mxu0 0.0
  %v123 = vand.u32 %v52, 4294901760
  %v124 = vsub.f32 %v52, %v123
  %v125 = vand.u32 %v124, 4294901760
  %v126 = vsub.f32 %v124, %v125
  %v127 = vand.u32 %v126, 4294901760
  %128 = vmatmul.mubr.f32.gmra.mrb[0].mxu0 %v127
  %v129 = vpop.f32.mrb[0].mxu0
  %v130 = vadd.f32 0.0, %v129
  %v131 = vpop.f32.mrb[0].mxu0
  %132 = vdwg.mxu0
  %133 = vmatprep.subr.mxu0 0.0
  %v134 = vand.u32 %v28, 4294901760
  %v135 = vsub.f32 %v28, %v134
  %v136 = vand.u32 %v135, 4294901760
  %v137 = vsub.f32 %v135, %v136
  %v138 = vand.u32 %v137, 4294901760
  %139 = vmatpush1.msra.mxu0 %v138
  %140 = vmatprep.subr.mxu0 0.0
  %v141 = vand.u32 %v29, 4294901760
  %v142 = vsub.f32 %v29, %v141
  %v143 = vand.u32 %v142, 4294901760
  %v144 = vsub.f32 %v142, %v143
  %v145 = vand.u32 %v144, 4294901760
  %146 = vmatpush1.msra.mxu0 %v145
  %147 = vmatprep.subr.mxu0 0.0
  %v148 = vand.u32 %v30, 4294901760
  %v149 = vsub.f32 %v30, %v148
  %v150 = vand.u32 %v149, 4294901760
  %v151 = vsub.f32 %v149, %v150
  %v152 = vand.u32 %v151, 4294901760
  %153 = vmatpush1.msra.mxu0 %v152
  %154 = vmatprep.subr.mxu0 0.0
  %v155 = vand.u32 %v31, 4294901760
  %v156 = vsub.f32 %v31, %v155
  %v157 = vand.u32 %v156, 4294901760
  %v158 = vsub.f32 %v156, %v157
  %v159 = vand.u32 %v158, 4294901760
  %160 = vmatpush1.msra.mxu0 %v159
  %161 = vmatprep.subr.mxu0 0.0
  %162 = vmatpush1.msra.mxu0 0.0
  %163 = vmatprep.subr.mxu0 0.0
  %164 = vmatpush1.msra.mxu0 0.0
  %165 = vmatprep.subr.mxu0 0.0
  %166 = vmatpush1.msra.mxu0 0.0
  %167 = vmatprep.subr.mxu0 0.0
  %168 = vmatpush1.msra.mxu0 0.0
  %169 = vmatprep.subr.mxu0 0.0
  %170 = vmatpush1.msra.mxu0 0.0
  %171 = vmatprep.subr.mxu0 0.0
  %172 = vmatpush1.msra.mxu0 0.0
  %173 = vmatprep.subr.mxu0 0.0
  %174 = vmatpush1.msra.mxu0 0.0
  %175 = vmatprep.subr.mxu0 0.0
  %176 = vmatpush1.msra.mxu0 0.0
  %177 = vmatprep.subr.mxu0 0.0
  %178 = vmatpush1.msra.mxu0 0.0
  %179 = vmatprep.subr.mxu0 0.0
  %180 = vmatpush1.msra.mxu0 0.0
  %181 = vmatprep.subr.mxu0 0.0
  %182 = vmatpush1.msra.mxu0 0.0
  %183 = vmatprep.subr.mxu0 0.0
  %184 = vmatpush1.msra.mxu0 0.0
  %185 = vmatprep.subr.mxu0 0.0
  %186 = vmatpush1.msra.mxu0 0.0
  %187 = vmatprep.subr.mxu0 0.0
  %188 = vmatpush1.msra.mxu0 0.0
  %189 = vmatprep.subr.mxu0 0.0
  %190 = vmatpush1.msra.mxu0 0.0
  %191 = vmatprep.subr.mxu0 0.0
  %192 = vmatpush1.msra.mxu0 0.0
  %193 = vmatprep.subr.mxu0 0.0
  %194 = vmatpush1.msra.mxu0 0.0
  %195 = vmatprep.subr.mxu0 0.0
  %196 = vmatpush1.msra.mxu0 0.0
  %197 = vmatprep.subr.mxu0 0.0
  %198 = vmatpush1.msra.mxu0 0.0
  %199 = vmatprep.subr.mxu0 0.0
  %200 = vmatpush1.msra.mxu0 0.0
  %201 = vmatprep.subr.mxu0 0.0
  %202 = vmatpush1.msra.mxu0 0.0
  %203 = vmatprep.subr.mxu0 0.0
  %204 = vmatpush1.msra.mxu0 0.0
  %205 = vmatprep.subr.mxu0 0.0
  %206 = vmatpush1.msra.mxu0 0.0
  %207 = vmatprep.subr.mxu0 0.0
  %208 = vmatpush1.msra.mxu0 0.0
  %209 = vmatprep.subr.mxu0 0.0
  %210 = vmatpush1.msra.mxu0 0.0
  %211 = vmatprep.subr.mxu0 0.0
  %212 = vmatpush1.msra.mxu0 0.0
  %213 = vmatprep.subr.mxu0 0.0
  %214 = vmatpush1.msra.mxu0 0.0
  %215 = vmatprep.subr.mxu0 0.0
  %216 = vmatpush1.msra.mxu0 0.0
  %217 = vmatprep.mubr.f32.mxu0 0.0
  %v218 = vand.u32 %v52, 4294901760
  %219 = vmatmul.mubr.f32.gmra.mrb[0].mxu0 %v218
  %v220 = vpop.f32.mrb[0].mxu0
  %v221 = vadd.f32 %v130, %v220
  %v222 = vpop.f32.mrb[0].mxu0
  %223 = vdwg.mxu0
  %224 = vmatprep.subr.mxu0 0.0
  %v225 = vand.u32 %v28, 4294901760
  %v226 = vsub.f32 %v28, %v225
  %227 = vmatpush1.msra.mxu0 %v226
  %228 = vmatprep.subr.mxu0 0.0
  %v229 = vand.u32 %v29, 4294901760
  %v230 = vsub.f32 %v29, %v229
  %231 = vmatpush1.msra.mxu0 %v230
  %232 = vmatprep.subr.mxu0 0.0
  %v233 = vand.u32 %v30, 4294901760
  %v234 = vsub.f32 %v30, %v233
  %235 = vmatpush1.msra.mxu0 %v234
  %236 = vmatprep.subr.mxu0 0.0
  %v237 = vand.u32 %v31, 4294901760
  %v238 = vsub.f32 %v31, %v237
  %239 = vmatpush1.msra.mxu0 %v238
  %240 = vmatprep.subr.mxu0 0.0
  %241 = vmatpush1.msra.mxu0 0.0
  %242 = vmatprep.subr.mxu0 0.0
  %243 = vmatpush1.msra.mxu0 0.0
  %244 = vmatprep.subr.mxu0 0.0
  %245 = vmatpush1.msra.mxu0 0.0
  %246 = vmatprep.subr.mxu0 0.0
  %247 = vmatpush1.msra.mxu0 0.0
  %248 = vmatprep.subr.mxu0 0.0
  %249 = vmatpush1.msra.mxu0 0.0
  %250 = vmatprep.subr.mxu0 0.0
  %251 = vmatpush1.msra.mxu0 0.0
  %252 = vmatprep.subr.mxu0 0.0
  %253 = vmatpush1.msra.mxu0 0.0
  %254 = vmatprep.subr.mxu0 0.0
  %255 = vmatpush1.msra.mxu0 0.0
  %256 = vmatprep.subr.mxu0 0.0
  %257 = vmatpush1.msra.mxu0 0.0
  %258 = vmatprep.subr.mxu0 0.0
  %259 = vmatpush1.msra.mxu0 0.0
  %260 = vmatprep.subr.mxu0 0.0
  %261 = vmatpush1.msra.mxu0 0.0
  %262 = vmatprep.subr.mxu0 0.0
  %263 = vmatpush1.msra.mxu0 0.0
  %264 = vmatprep.subr.mxu0 0.0
  %265 = vmatpush1.msra.mxu0 0.0
  %266 = vmatprep.subr.mxu0 0.0
  %267 = vmatpush1.msra.mxu0 0.0
  %268 = vmatprep.subr.mxu0 0.0
  %269 = vmatpush1.msra.mxu0 0.0
  %270 = vmatprep.subr.mxu0 0.0
  %271 = vmatpush1.msra.mxu0 0.0
  %272 = vmatprep.subr.mxu0 0.0
  %273 = vmatpush1.msra.mxu0 0.0
  %274 = vmatprep.subr.mxu0 0.0
  %275 = vmatpush1.msra.mxu0 0.0
  %276 = vmatprep.subr.mxu0 0.0
  %277 = vmatpush1.msra.mxu0 0.0
  %278 = vmatprep.subr.mxu0 0.0
  %279 = vmatpush1.msra.mxu0 0.0
  %280 = vmatprep.subr.mxu0 0.0
  %281 = vmatpush1.msra.mxu0 0.0
  %282 = vmatprep.subr.mxu0 0.0
  %283 = vmatpush1.msra.mxu0 0.0
  %284 = vmatprep.subr.mxu0 0.0
  %285 = vmatpush1.msra.mxu0 0.0
  %286 = vmatprep.subr.mxu0 0.0
  %287 = vmatpush1.msra.mxu0 0.0
  %288 = vmatprep.subr.mxu0 0.0
  %289 = vmatpush1.msra.mxu0 0.0
  %290 = vmatprep.subr.mxu0 0.0
  %291 = vmatpush1.msra.mxu0 0.0
  %292 = vmatprep.subr.mxu0 0.0
  %293 = vmatpush1.msra.mxu0 0.0
  %294 = vmatprep.subr.mxu0 0.0
  %295 = vmatpush1.msra.mxu0 0.0
  %296 = vmatprep.mubr.f32.mxu0 0.0
  %v297 = vand.u32 %v52, 4294901760
  %v298 = vsub.f32 %v52, %v297
  %299 = vmatmul.mubr.f32.gmra.mrb[0].mxu0 %v298
  %v300 = vpop.f32.mrb[0].mxu0
  %v301 = vadd.f32 %v221, %v300
  %v302 = vpop.f32.mrb[0].mxu0
  %303 = vdwg.mxu0
  %304 = vmatprep.subr.mxu0 0.0
  %v305 = vand.u32 %v28, 4294901760
  %306 = vmatpush1.msra.mxu0 %v305
  %307 = vmatprep.subr.mxu0 0.0
  %v308 = vand.u32 %v29, 4294901760
  %309 = vmatpush1.msra.mxu0 %v308
  %310 = vmatprep.subr.mxu0 0.0
  %v311 = vand.u32 %v30, 4294901760
  %312 = vmatpush1.msra.mxu0 %v311
  %313 = vmatprep.subr.mxu0 0.0
  %v314 = vand.u32 %v31, 4294901760
  %315 = vmatpush1.msra.mxu0 %v314
  %316 = vmatprep.subr.mxu0 0.0
  %317 = vmatpush1.msra.mxu0 0.0
  %318 = vmatprep.subr.mxu0 0.0
  %319 = vmatpush1.msra.mxu0 0.0
  %320 = vmatprep.subr.mxu0 0.0
  %321 = vmatpush1.msra.mxu0 0.0
  %322 = vmatprep.subr.mxu0 0.0
  %323 = vmatpush1.msra.mxu0 0.0
  %324 = vmatprep.subr.mxu0 0.0
  %325 = vmatpush1.msra.mxu0 0.0
  %326 = vmatprep.subr.mxu0 0.0
  %327 = vmatpush1.msra.mxu0 0.0
  %328 = vmatprep.subr.mxu0 0.0
  %329 = vmatpush1.msra.mxu0 0.0
  %330 = vmatprep.subr.mxu0 0.0
  %331 = vmatpush1.msra.mxu0 0.0
  %332 = vmatprep.subr.mxu0 0.0
  %333 = vmatpush1.msra.mxu0 0.0
  %334 = vmatprep.subr.mxu0 0.0
  %335 = vmatpush1.msra.mxu0 0.0
  %336 = vmatprep.subr.mxu0 0.0
  %337 = vmatpush1.msra.mxu0 0.0
  %338 = vmatprep.subr.mxu0 0.0
  %339 = vmatpush1.msra.mxu0 0.0
  %340 = vmatprep.subr.mxu0 0.0
  %341 = vmatpush1.msra.mxu0 0.0
  %342 = vmatprep.subr.mxu0 0.0
  %343 = vmatpush1.msra.mxu0 0.0
  %344 = vmatprep.subr.mxu0 0.0
  %345 = vmatpush1.msra.mxu0 0.0
  %346 = vmatprep.subr.mxu0 0.0
  %347 = vmatpush1.msra.mxu0 0.0
  %348 = vmatprep.subr.mxu0 0.0
  %349 = vmatpush1.msra.mxu0 0.0
  %350 = vmatprep.subr.mxu0 0.0
  %351 = vmatpush1.msra.mxu0 0.0
  %352 = vmatprep.subr.mxu0 0.0
  %353 = vmatpush1.msra.mxu0 0.0
  %354 = vmatprep.subr.mxu0 0.0
  %355 = vmatpush1.msra.mxu0 0.0
  %356 = vmatprep.subr.mxu0 0.0
  %357 = vmatpush1.msra.mxu0 0.0
  %358 = vmatprep.subr.mxu0 0.0
  %359 = vmatpush1.msra.mxu0 0.0
  %360 = vmatprep.subr.mxu0 0.0
  %361 = vmatpush1.msra.mxu0 0.0
  %362 = vmatprep.subr.mxu0 0.0
  %363 = vmatpush1.msra.mxu0 0.0
  %364 = vmatprep.subr.mxu0 0.0
  %365 = vmatpush1.msra.mxu0 0.0
  %366 = vmatprep.subr.mxu0 0.0
  %367 = vmatpush1.msra.mxu0 0.0
  %368 = vmatprep.subr.mxu0 0.0
  %369 = vmatpush1.msra.mxu0 0.0
  %370 = vmatprep.subr.mxu0 0.0
  %371 = vmatpush1.msra.mxu0 0.0
  %372 = vmatprep.mubr.f32.mxu0 0.0
  %v373 = vand.u32 %v52, 4294901760
  %v374 = vsub.f32 %v52, %v373
  %v375 = vand.u32 %v374, 4294901760
  %376 = vmatmul.mubr.f32.gmra.mrb[0].mxu0 %v375
  %v377 = vpop.f32.mrb[0].mxu0
  %v378 = vadd.f32 %v301, %v377
  %v379 = vpop.f32.mrb[0].mxu0
  %380 = vdwg.mxu0
  %381 = vmatprep.subr.mxu0 0.0
  %v382 = vand.u32 %v28, 4294901760
  %v383 = vsub.f32 %v28, %v382
  %v384 = vand.u32 %v383, 4294901760
  %385 = vmatpush1.msra.mxu0 %v384
  %386 = vmatprep.subr.mxu0 0.0
  %v387 = vand.u32 %v29, 4294901760
  %v388 = vsub.f32 %v29, %v387
  %v389 = vand.u32 %v388, 4294901760
  %390 = vmatpush1.msra.mxu0 %v389
  %391 = vmatprep.subr.mxu0 0.0
  %v392 = vand.u32 %v30, 4294901760
  %v393 = vsub.f32 %v30, %v392
  %v394 = vand.u32 %v393, 4294901760
  %395 = vmatpush1.msra.mxu0 %v394
  %396 = vmatprep.subr.mxu0 0.0
  %v397 = vand.u32 %v31, 4294901760
  %v398 = vsub.f32 %v31, %v397
  %v399 = vand.u32 %v398, 4294901760
  %400 = vmatpush1.msra.mxu0 %v399
  %401 = vmatprep.subr.mxu0 0.0
  %402 = vmatpush1.msra.mxu0 0.0
  %403 = vmatprep.subr.mxu0 0.0
  %404 = vmatpush1.msra.mxu0 0.0
  %405 = vmatprep.subr.mxu0 0.0
  %406 = vmatpush1.msra.mxu0 0.0
  %407 = vmatprep.subr.mxu0 0.0
  %408 = vmatpush1.msra.mxu0 0.0
  %409 = vmatprep.subr.mxu0 0.0
  %410 = vmatpush1.msra.mxu0 0.0
  %411 = vmatprep.subr.mxu0 0.0
  %412 = vmatpush1.msra.mxu0 0.0
  %413 = vmatprep.subr.mxu0 0.0
  %414 = vmatpush1.msra.mxu0 0.0
  %415 = vmatprep.subr.mxu0 0.0
  %416 = vmatpush1.msra.mxu0 0.0
  %417 = vmatprep.subr.mxu0 0.0
  %418 = vmatpush1.msra.mxu0 0.0
  %419 = vmatprep.subr.mxu0 0.0
  %420 = vmatpush1.msra.mxu0 0.0
  %421 = vmatprep.subr.mxu0 0.0
  %422 = vmatpush1.msra.mxu0 0.0
  %423 = vmatprep.subr.mxu0 0.0
  %424 = vmatpush1.msra.mxu0 0.0
  %425 = vmatprep.subr.mxu0 0.0
  %426 = vmatpush1.msra.mxu0 0.0
  %427 = vmatprep.subr.mxu0 0.0
  %428 = vmatpush1.msra.mxu0 0.0
  %429 = vmatprep.subr.mxu0 0.0
  %430 = vmatpush1.msra.mxu0 0.0
  %431 = vmatprep.subr.mxu0 0.0
  %432 = vmatpush1.msra.mxu0 0.0
  %433 = vmatprep.subr.mxu0 0.0
  %434 = vmatpush1.msra.mxu0 0.0
  %435 = vmatprep.subr.mxu0 0.0
  %436 = vmatpush1.msra.mxu0 0.0
  %437 = vmatprep.subr.mxu0 0.0
  %438 = vmatpush1.msra.mxu0 0.0
  %439 = vmatprep.subr.mxu0 0.0
  %440 = vmatpush1.msra.mxu0 0.0
  %441 = vmatprep.subr.mxu0 0.0
  %442 = vmatpush1.msra.mxu0 0.0
  %443 = vmatprep.subr.mxu0 0.0
  %444 = vmatpush1.msra.mxu0 0.0
  %445 = vmatprep.subr.mxu0 0.0
  %446 = vmatpush1.msra.mxu0 0.0
  %447 = vmatprep.subr.mxu0 0.0
  %448 = vmatpush1.msra.mxu0 0.0
  %449 = vmatprep.subr.mxu0 0.0
  %450 = vmatpush1.msra.mxu0 0.0
  %451 = vmatprep.subr.mxu0 0.0
  %452 = vmatpush1.msra.mxu0 0.0
  %453 = vmatprep.subr.mxu0 0.0
  %454 = vmatpush1.msra.mxu0 0.0
  %455 = vmatprep.subr.mxu0 0.0
  %456 = vmatpush1.msra.mxu0 0.0
  %457 = vmatprep.mubr.f32.mxu0 0.0
  %v458 = vand.u32 %v52, 4294901760
  %459 = vmatmul.mubr.f32.gmra.mrb[0].mxu0 %v458
  %v460 = vpop.f32.mrb[0].mxu0
  %v461 = vadd.f32 %v378, %v460
  %v462 = vpop.f32.mrb[0].mxu0
  %463 = vdwg.mxu0
  %464 = vmatprep.subr.mxu0 0.0
  %v465 = vand.u32 %v28, 4294901760
  %466 = vmatpush1.msra.mxu0 %v465
  %467 = vmatprep.subr.mxu0 0.0
  %v468 = vand.u32 %v29, 4294901760
  %469 = vmatpush1.msra.mxu0 %v468
  %470 = vmatprep.subr.mxu0 0.0
  %v471 = vand.u32 %v30, 4294901760
  %472 = vmatpush1.msra.mxu0 %v471
  %473 = vmatprep.subr.mxu0 0.0
  %v474 = vand.u32 %v31, 4294901760
  %475 = vmatpush1.msra.mxu0 %v474
  %476 = vmatprep.subr.mxu0 0.0
  %477 = vmatpush1.msra.mxu0 0.0
  %478 = vmatprep.subr.mxu0 0.0
  %479 = vmatpush1.msra.mxu0 0.0
  %480 = vmatprep.subr.mxu0 0.0
  %481 = vmatpush1.msra.mxu0 0.0
  %482 = vmatprep.subr.mxu0 0.0
  %483 = vmatpush1.msra.mxu0 0.0
  %484 = vmatprep.subr.mxu0 0.0
  %485 = vmatpush1.msra.mxu0 0.0
  %486 = vmatprep.subr.mxu0 0.0
  %487 = vmatpush1.msra.mxu0 0.0
  %488 = vmatprep.subr.mxu0 0.0
  %489 = vmatpush1.msra.mxu0 0.0
  %490 = vmatprep.subr.mxu0 0.0
  %491 = vmatpush1.msra.mxu0 0.0
  %492 = vmatprep.subr.mxu0 0.0
  %493 = vmatpush1.msra.mxu0 0.0
  %494 = vmatprep.subr.mxu0 0.0
  %495 = vmatpush1.msra.mxu0 0.0
  %496 = vmatprep.subr.mxu0 0.0
  %497 = vmatpush1.msra.mxu0 0.0
  %498 = vmatprep.subr.mxu0 0.0
  %499 = vmatpush1.msra.mxu0 0.0
  %500 = vmatprep.subr.mxu0 0.0
  %501 = vmatpush1.msra.mxu0 0.0
  %502 = vmatprep.subr.mxu0 0.0
  %503 = vmatpush1.msra.mxu0 0.0
  %504 = vmatprep.subr.mxu0 0.0
  %505 = vmatpush1.msra.mxu0 0.0
  %506 = vmatprep.subr.mxu0 0.0
  %507 = vmatpush1.msra.mxu0 0.0
  %508 = vmatprep.subr.mxu0 0.0
  %509 = vmatpush1.msra.mxu0 0.0
  %510 = vmatprep.subr.mxu0 0.0
  %511 = vmatpush1.msra.mxu0 0.0
  %512 = vmatprep.subr.mxu0 0.0
  %513 = vmatpush1.msra.mxu0 0.0
  %514 = vmatprep.subr.mxu0 0.0
  %515 = vmatpush1.msra.mxu0 0.0
  %516 = vmatprep.subr.mxu0 0.0
  %517 = vmatpush1.msra.mxu0 0.0
  %518 = vmatprep.subr.mxu0 0.0
  %519 = vmatpush1.msra.mxu0 0.0
  %520 = vmatprep.subr.mxu0 0.0
  %521 = vmatpush1.msra.mxu0 0.0
  %522 = vmatprep.subr.mxu0 0.0
  %523 = vmatpush1.msra.mxu0 0.0
  %524 = vmatprep.subr.mxu0 0.0
  %525 = vmatpush1.msra.mxu0 0.0
  %526 = vmatprep.subr.mxu0 0.0
  %527 = vmatpush1.msra.mxu0 0.0
  %528 = vmatprep.subr.mxu0 0.0
  %529 = vmatpush1.msra.mxu0 0.0
  %530 = vmatprep.subr.mxu0 0.0
  %531 = vmatpush1.msra.mxu0 0.0
  %532 = vmatprep.mubr.f32.mxu0 0.0
  %v533 = vand.u32 %v52, 4294901760
  %534 = vmatmul.mubr.f32.gmra.mrb[0].mxu0 %v533
  %v535 = vpop.f32.mrb[0].mxu0
  %v536 = vadd.f32 %v461, %v535
  %v537 = vpop.f32.mrb[0].mxu0
  %538 = vdwg.mxu0
  %v539 = vmul.f32 %v536, 1.442695
  %v540 = vpow.pop %v539
  %vm541 = vcmask 64512
  %v542 = vsel %vm541, %v540, 0.0
  %543 = vadd.xlane.f32.xlu0 %v542
  %v544 = vpop.xlane.xlu0 %543
  %v545 = vmul.f32 %v540, %v536
  %v546 = vsel %vm541, %v545, 0.0
  %547 = vadd.xlane.f32.xlu0 %v546
  %v548 = vpop.xlane.xlu0 %547
  %549 = vmatprep.subr.mxu0 0.0
  %v550 = vand.u32 %v24, 4294901760
  %551 = vmatpush1.msra.mxu0 %v550
  %552 = vmatprep.subr.mxu0 0.0
  %v553 = vand.u32 %v25, 4294901760
  %554 = vmatpush1.msra.mxu0 %v553
  %555 = vmatprep.subr.mxu0 0.0
  %v556 = vand.u32 %v26, 4294901760
  %557 = vmatpush1.msra.mxu0 %v556
  %558 = vmatprep.subr.mxu0 0.0
  %v559 = vand.u32 %v27, 4294901760
  %560 = vmatpush1.msra.mxu0 %v559
  %561 = vmatprep.subr.mxu0 0.0
  %562 = vmatpush1.msra.mxu0 0.0
  %563 = vmatprep.subr.mxu0 0.0
  %564 = vmatpush1.msra.mxu0 0.0
  %565 = vmatprep.subr.mxu0 0.0
  %566 = vmatpush1.msra.mxu0 0.0
  %567 = vmatprep.subr.mxu0 0.0
  %568 = vmatpush1.msra.mxu0 0.0
  %569 = vmatprep.subr.mxu0 0.0
  %570 = vmatpush1.msra.mxu0 0.0
  %571 = vmatprep.subr.mxu0 0.0
  %572 = vmatpush1.msra.mxu0 0.0
  %573 = vmatprep.subr.mxu0 0.0
  %574 = vmatpush1.msra.mxu0 0.0
  %575 = vmatprep.subr.mxu0 0.0
  %576 = vmatpush1.msra.mxu0 0.0
  %577 = vmatprep.subr.mxu0 0.0
  %578 = vmatpush1.msra.mxu0 0.0
  %579 = vmatprep.subr.mxu0 0.0
  %580 = vmatpush1.msra.mxu0 0.0
  %581 = vmatprep.subr.mxu0 0.0
  %582 = vmatpush1.msra.mxu0 0.0
  %583 = vmatprep.subr.mxu0 0.0
  %584 = vmatpush1.msra.mxu0 0.0
  %585 = vmatprep.subr.mxu0 0.0
  %586 = vmatpush1.msra.mxu0 0.0
  %587 = vmatprep.subr.mxu0 0.0
  %588 = vmatpush1.msra.mxu0 0.0
  %589 = vmatprep.subr.mxu0 0.0
  %590 = vmatpush1.msra.mxu0 0.0
  %591 = vmatprep.subr.mxu0 0.0
  %592 = vmatpush1.msra.mxu0 0.0
  %593 = vmatprep.subr.mxu0 0.0
  %594 = vmatpush1.msra.mxu0 0.0
  %595 = vmatprep.subr.mxu0 0.0
  %596 = vmatpush1.msra.mxu0 0.0
  %597 = vmatprep.subr.mxu0 0.0
  %598 = vmatpush1.msra.mxu0 0.0
  %599 = vmatprep.subr.mxu0 0.0
  %600 = vmatpush1.msra.mxu0 0.0
  %601 = vmatprep.subr.mxu0 0.0
  %602 = vmatpush1.msra.mxu0 0.0
  %603 = vmatprep.subr.mxu0 0.0
  %604 = vmatpush1.msra.mxu0 0.0
  %605 = vmatprep.subr.mxu0 0.0
  %606 = vmatpush1.msra.mxu0 0.0
  %607 = vmatprep.subr.mxu0 0.0
  %608 = vmatpush1.msra.mxu0 0.0
  %609 = vmatprep.subr.mxu0 0.0
  %610 = vmatpush1.msra.mxu0 0.0
  %611 = vmatprep.subr.mxu0 0.0
  %612 = vmatpush1.msra.mxu0 0.0
  %613 = vmatprep.subr.mxu0 0.0
  %614 = vmatpush1.msra.mxu0 0.0
  %615 = vmatprep.subr.mxu0 0.0
  %616 = vmatpush1.msra.mxu0 0.0
  %617 = vmatprep.mubr.f32.mxu0 0.0
  %v618 = vand.u32 %v52, 4294901760
  %v619 = vsub.f32 %v52, %v618
  %v620 = vand.u32 %v619, 4294901760
  %v621 = vsub.f32 %v619, %v620
  %v622 = vand.u32 %v621, 4294901760
  %623 = vmatmul.mubr.f32.gmra.mrb[0].mxu0 %v622
  %v624 = vpop.f32.mrb[0].mxu0
  %v625 = vadd.f32 0.0, %v624
  %v626 = vpop.f32.mrb[0].mxu0
  %627 = vdwg.mxu0
  %628 = vmatprep.subr.mxu0 0.0
  %v629 = vand.u32 %v24, 4294901760
  %v630 = vsub.f32 %v24, %v629
  %v631 = vand.u32 %v630, 4294901760
  %v632 = vsub.f32 %v630, %v631
  %v633 = vand.u32 %v632, 4294901760
  %634 = vmatpush1.msra.mxu0 %v633
  %635 = vmatprep.subr.mxu0 0.0
  %v636 = vand.u32 %v25, 4294901760
  %v637 = vsub.f32 %v25, %v636
  %v638 = vand.u32 %v637, 4294901760
  %v639 = vsub.f32 %v637, %v638
  %v640 = vand.u32 %v639, 4294901760
  %641 = vmatpush1.msra.mxu0 %v640
  %642 = vmatprep.subr.mxu0 0.0
  %v643 = vand.u32 %v26, 4294901760
  %v644 = vsub.f32 %v26, %v643
  %v645 = vand.u32 %v644, 4294901760
  %v646 = vsub.f32 %v644, %v645
  %v647 = vand.u32 %v646, 4294901760
  %648 = vmatpush1.msra.mxu0 %v647
  %649 = vmatprep.subr.mxu0 0.0
  %v650 = vand.u32 %v27, 4294901760
  %v651 = vsub.f32 %v27, %v650
  %v652 = vand.u32 %v651, 4294901760
  %v653 = vsub.f32 %v651, %v652
  %v654 = vand.u32 %v653, 4294901760
  %655 = vmatpush1.msra.mxu0 %v654
  %656 = vmatprep.subr.mxu0 0.0
  %657 = vmatpush1.msra.mxu0 0.0
  %658 = vmatprep.subr.mxu0 0.0
  %659 = vmatpush1.msra.mxu0 0.0
  %660 = vmatprep.subr.mxu0 0.0
  %661 = vmatpush1.msra.mxu0 0.0
  %662 = vmatprep.subr.mxu0 0.0
  %663 = vmatpush1.msra.mxu0 0.0
  %664 = vmatprep.subr.mxu0 0.0
  %665 = vmatpush1.msra.mxu0 0.0
  %666 = vmatprep.subr.mxu0 0.0
  %667 = vmatpush1.msra.mxu0 0.0
  %668 = vmatprep.subr.mxu0 0.0
  %669 = vmatpush1.msra.mxu0 0.0
  %670 = vmatprep.subr.mxu0 0.0
  %671 = vmatpush1.msra.mxu0 0.0
  %672 = vmatprep.subr.mxu0 0.0
  %673 = vmatpush1.msra.mxu0 0.0
  %674 = vmatprep.subr.mxu0 0.0
  %675 = vmatpush1.msra.mxu0 0.0
  %676 = vmatprep.subr.mxu0 0.0
  %677 = vmatpush1.msra.mxu0 0.0
  %678 = vmatprep.subr.mxu0 0.0
  %679 = vmatpush1.msra.mxu0 0.0
  %680 = vmatprep.subr.mxu0 0.0
  %681 = vmatpush1.msra.mxu0 0.0
  %682 = vmatprep.subr.mxu0 0.0
  %683 = vmatpush1.msra.mxu0 0.0
  %684 = vmatprep.subr.mxu0 0.0
  %685 = vmatpush1.msra.mxu0 0.0
  %686 = vmatprep.subr.mxu0 0.0
  %687 = vmatpush1.msra.mxu0 0.0
  %688 = vmatprep.subr.mxu0 0.0
  %689 = vmatpush1.msra.mxu0 0.0
  %690 = vmatprep.subr.mxu0 0.0
  %691 = vmatpush1.msra.mxu0 0.0
  %692 = vmatprep.subr.mxu0 0.0
  %693 = vmatpush1.msra.mxu0 0.0
  %694 = vmatprep.subr.mxu0 0.0
  %695 = vmatpush1.msra.mxu0 0.0
  %696 = vmatprep.subr.mxu0 0.0
  %697 = vmatpush1.msra.mxu0 0.0
  %698 = vmatprep.subr.mxu0 0.0
  %699 = vmatpush1.msra.mxu0 0.0
  %700 = vmatprep.subr.mxu0 0.0
  %701 = vmatpush1.msra.mxu0 0.0
  %702 = vmatprep.subr.mxu0 0.0
  %703 = vmatpush1.msra.mxu0 0.0
  %704 = vmatprep.subr.mxu0 0.0
  %705 = vmatpush1.msra.mxu0 0.0
  %706 = vmatprep.subr.mxu0 0.0
  %707 = vmatpush1.msra.mxu0 0.0
  %708 = vmatprep.subr.mxu0 0.0
  %709 = vmatpush1.msra.mxu0 0.0
  %710 = vmatprep.subr.mxu0 0.0
  %711 = vmatpush1.msra.mxu0 0.0
  %712 = vmatprep.mubr.f32.mxu0 0.0
  %v713 = vand.u32 %v52, 4294901760
  %714 = vmatmul.mubr.f32.gmra.mrb[0].mxu0 %v713
  %v715 = vpop.f32.mrb[0].mxu0
  %v716 = vadd.f32 %v625, %v715
  %v717 = vpop.f32.mrb[0].mxu0
  %718 = vdwg.mxu0
  %719 = vmatprep.subr.mxu0 0.0
  %v720 = vand.u32 %v24, 4294901760
  %v721 = vsub.f32 %v24, %v720
  %722 = vmatpush1.msra.mxu0 %v721
  %723 = vmatprep.subr.mxu0 0.0
  %v724 = vand.u32 %v25, 4294901760
  %v725 = vsub.f32 %v25, %v724
  %726 = vmatpush1.msra.mxu0 %v725
  %727 = vmatprep.subr.mxu0 0.0
  %v728 = vand.u32 %v26, 4294901760
  %v729 = vsub.f32 %v26, %v728
  %730 = vmatpush1.msra.mxu0 %v729
  %731 = vmatprep.subr.mxu0 0.0
  %v732 = vand.u32 %v27, 4294901760
  %v733 = vsub.f32 %v27, %v732
  %734 = vmatpush1.msra.mxu0 %v733
  %735 = vmatprep.subr.mxu0 0.0
  %736 = vmatpush1.msra.mxu0 0.0
  %737 = vmatprep.subr.mxu0 0.0
  %738 = vmatpush1.msra.mxu0 0.0
  %739 = vmatprep.subr.mxu0 0.0
  %740 = vmatpush1.msra.mxu0 0.0
  %741 = vmatprep.subr.mxu0 0.0
  %742 = vmatpush1.msra.mxu0 0.0
  %743 = vmatprep.subr.mxu0 0.0
  %744 = vmatpush1.msra.mxu0 0.0
  %745 = vmatprep.subr.mxu0 0.0
  %746 = vmatpush1.msra.mxu0 0.0
  %747 = vmatprep.subr.mxu0 0.0
  %748 = vmatpush1.msra.mxu0 0.0
  %749 = vmatprep.subr.mxu0 0.0
  %750 = vmatpush1.msra.mxu0 0.0
  %751 = vmatprep.subr.mxu0 0.0
  %752 = vmatpush1.msra.mxu0 0.0
  %753 = vmatprep.subr.mxu0 0.0
  %754 = vmatpush1.msra.mxu0 0.0
  %755 = vmatprep.subr.mxu0 0.0
  %756 = vmatpush1.msra.mxu0 0.0
  %757 = vmatprep.subr.mxu0 0.0
  %758 = vmatpush1.msra.mxu0 0.0
  %759 = vmatprep.subr.mxu0 0.0
  %760 = vmatpush1.msra.mxu0 0.0
  %761 = vmatprep.subr.mxu0 0.0
  %762 = vmatpush1.msra.mxu0 0.0
  %763 = vmatprep.subr.mxu0 0.0
  %764 = vmatpush1.msra.mxu0 0.0
  %765 = vmatprep.subr.mxu0 0.0
  %766 = vmatpush1.msra.mxu0 0.0
  %767 = vmatprep.subr.mxu0 0.0
  %768 = vmatpush1.msra.mxu0 0.0
  %769 = vmatprep.subr.mxu0 0.0
  %770 = vmatpush1.msra.mxu0 0.0
  %771 = vmatprep.subr.mxu0 0.0
  %772 = vmatpush1.msra.mxu0 0.0
  %773 = vmatprep.subr.mxu0 0.0
  %774 = vmatpush1.msra.mxu0 0.0
  %775 = vmatprep.subr.mxu0 0.0
  %776 = vmatpush1.msra.mxu0 0.0
  %777 = vmatprep.subr.mxu0 0.0
  %778 = vmatpush1.msra.mxu0 0.0
  %779 = vmatprep.subr.mxu0 0.0
  %780 = vmatpush1.msra.mxu0 0.0
  %781 = vmatprep.subr.mxu0 0.0
  %782 = vmatpush1.msra.mxu0 0.0
  %783 = vmatprep.subr.mxu0 0.0
  %784 = vmatpush1.msra.mxu0 0.0
  %785 = vmatprep.subr.mxu0 0.0
  %786 = vmatpush1.msra.mxu0 0.0
  %787 = vmatprep.subr.mxu0 0.0
  %788 = vmatpush1.msra.mxu0 0.0
  %789 = vmatprep.subr.mxu0 0.0
  %790 = vmatpush1.msra.mxu0 0.0
  %791 = vmatprep.mubr.f32.mxu0 0.0
  %v792 = vand.u32 %v52, 4294901760
  %v793 = vsub.f32 %v52, %v792
  %794 = vmatmul.mubr.f32.gmra.mrb[0].mxu0 %v793
  %v795 = vpop.f32.mrb[0].mxu0
  %v796 = vadd.f32 %v716, %v795
  %v797 = vpop.f32.mrb[0].mxu0
  %798 = vdwg.mxu0
  %799 = vmatprep.subr.mxu0 0.0
  %v800 = vand.u32 %v24, 4294901760
  %801 = vmatpush1.msra.mxu0 %v800
  %802 = vmatprep.subr.mxu0 0.0
  %v803 = vand.u32 %v25, 4294901760
  %804 = vmatpush1.msra.mxu0 %v803
  %805 = vmatprep.subr.mxu0 0.0
  %v806 = vand.u32 %v26, 4294901760
  %807 = vmatpush1.msra.mxu0 %v806
  %808 = vmatprep.subr.mxu0 0.0
  %v809 = vand.u32 %v27, 4294901760
  %810 = vmatpush1.msra.mxu0 %v809
  %811 = vmatprep.subr.mxu0 0.0
  %812 = vmatpush1.msra.mxu0 0.0
  %813 = vmatprep.subr.mxu0 0.0
  %814 = vmatpush1.msra.mxu0 0.0
  %815 = vmatprep.subr.mxu0 0.0
  %816 = vmatpush1.msra.mxu0 0.0
  %817 = vmatprep.subr.mxu0 0.0
  %818 = vmatpush1.msra.mxu0 0.0
  %819 = vmatprep.subr.mxu0 0.0
  %820 = vmatpush1.msra.mxu0 0.0
  %821 = vmatprep.subr.mxu0 0.0
  %822 = vmatpush1.msra.mxu0 0.0
  %823 = vmatprep.subr.mxu0 0.0
  %824 = vmatpush1.msra.mxu0 0.0
  %825 = vmatprep.subr.mxu0 0.0
  %826 = vmatpush1.msra.mxu0 0.0
  %827 = vmatprep.subr.mxu0 0.0
  %828 = vmatpush1.msra.mxu0 0.0
  %829 = vmatprep.subr.mxu0 0.0
  %830 = vmatpush1.msra.mxu0 0.0
  %831 = vmatprep.subr.mxu0 0.0
  %832 = vmatpush1.msra.mxu0 0.0
  %833 = vmatprep.subr.mxu0 0.0
  %834 = vmatpush1.msra.mxu0 0.0
  %835 = vmatprep.subr.mxu0 0.0
  %836 = vmatpush1.msra.mxu0 0.0
  %837 = vmatprep.subr.mxu0 0.0
  %838 = vmatpush1.msra.mxu0 0.0
  %839 = vmatprep.subr.mxu0 0.0
  %840 = vmatpush1.msra.mxu0 0.0
  %841 = vmatprep.subr.mxu0 0.0
  %842 = vmatpush1.msra.mxu0 0.0
  %843 = vmatprep.subr.mxu0 0.0
  %844 = vmatpush1.msra.mxu0 0.0
  %845 = vmatprep.subr.mxu0 0.0
  %846 = vmatpush1.msra.mxu0 0.0
  %847 = vmatprep.subr.mxu0 0.0
  %848 = vmatpush1.msra.mxu0 0.0
  %849 = vmatprep.subr.mxu0 0.0
  %850 = vmatpush1.msra.mxu0 0.0
  %851 = vmatprep.subr.mxu0 0.0
  %852 = vmatpush1.msra.mxu0 0.0
  %853 = vmatprep.subr.mxu0 0.0
  %854 = vmatpush1.msra.mxu0 0.0
  %855 = vmatprep.subr.mxu0 0.0
  %856 = vmatpush1.msra.mxu0 0.0
  %857 = vmatprep.subr.mxu0 0.0
  %858 = vmatpush1.msra.mxu0 0.0
  %859 = vmatprep.subr.mxu0 0.0
  %860 = vmatpush1.msra.mxu0 0.0
  %861 = vmatprep.subr.mxu0 0.0
  %862 = vmatpush1.msra.mxu0 0.0
  %863 = vmatprep.subr.mxu0 0.0
  %864 = vmatpush1.msra.mxu0 0.0
  %865 = vmatprep.subr.mxu0 0.0
  %866 = vmatpush1.msra.mxu0 0.0
  %867 = vmatprep.mubr.f32.mxu0 0.0
  %v868 = vand.u32 %v52, 4294901760
  %v869 = vsub.f32 %v52, %v868
  %v870 = vand.u32 %v869, 4294901760
  %871 = vmatmul.mubr.f32.gmra.mrb[0].mxu0 %v870
  %v872 = vpop.f32.mrb[0].mxu0
  %v873 = vadd.f32 %v796, %v872
  %v874 = vpop.f32.mrb[0].mxu0
  %875 = vdwg.mxu0
  %876 = vmatprep.subr.mxu0 0.0
  %v877 = vand.u32 %v24, 4294901760
  %v878 = vsub.f32 %v24, %v877
  %v879 = vand.u32 %v878, 4294901760
  %880 = vmatpush1.msra.mxu0 %v879
  %881 = vmatprep.subr.mxu0 0.0
  %v882 = vand.u32 %v25, 4294901760
  %v883 = vsub.f32 %v25, %v882
  %v884 = vand.u32 %v883, 4294901760
  %885 = vmatpush1.msra.mxu0 %v884
  %886 = vmatprep.subr.mxu0 0.0
  %v887 = vand.u32 %v26, 4294901760
  %v888 = vsub.f32 %v26, %v887
  %v889 = vand.u32 %v888, 4294901760
  %890 = vmatpush1.msra.mxu0 %v889
  %891 = vmatprep.subr.mxu0 0.0
  %v892 = vand.u32 %v27, 4294901760
  %v893 = vsub.f32 %v27, %v892
  %v894 = vand.u32 %v893, 4294901760
  %895 = vmatpush1.msra.mxu0 %v894
  %896 = vmatprep.subr.mxu0 0.0
  %897 = vmatpush1.msra.mxu0 0.0
  %898 = vmatprep.subr.mxu0 0.0
  %899 = vmatpush1.msra.mxu0 0.0
  %900 = vmatprep.subr.mxu0 0.0
  %901 = vmatpush1.msra.mxu0 0.0
  %902 = vmatprep.subr.mxu0 0.0
  %903 = vmatpush1.msra.mxu0 0.0
  %904 = vmatprep.subr.mxu0 0.0
  %905 = vmatpush1.msra.mxu0 0.0
  %906 = vmatprep.subr.mxu0 0.0
  %907 = vmatpush1.msra.mxu0 0.0
  %908 = vmatprep.subr.mxu0 0.0
  %909 = vmatpush1.msra.mxu0 0.0
  %910 = vmatprep.subr.mxu0 0.0
  %911 = vmatpush1.msra.mxu0 0.0
  %912 = vmatprep.subr.mxu0 0.0
  %913 = vmatpush1.msra.mxu0 0.0
  %914 = vmatprep.subr.mxu0 0.0
  %915 = vmatpush1.msra.mxu0 0.0
  %916 = vmatprep.subr.mxu0 0.0
  %917 = vmatpush1.msra.mxu0 0.0
  %918 = vmatprep.subr.mxu0 0.0
  %919 = vmatpush1.msra.mxu0 0.0
  %920 = vmatprep.subr.mxu0 0.0
  %921 = vmatpush1.msra.mxu0 0.0
  %922 = vmatprep.subr.mxu0 0.0
  %923 = vmatpush1.msra.mxu0 0.0
  %924 = vmatprep.subr.mxu0 0.0
  %925 = vmatpush1.msra.mxu0 0.0
  %926 = vmatprep.subr.mxu0 0.0
  %927 = vmatpush1.msra.mxu0 0.0
  %928 = vmatprep.subr.mxu0 0.0
  %929 = vmatpush1.msra.mxu0 0.0
  %930 = vmatprep.subr.mxu0 0.0
  %931 = vmatpush1.msra.mxu0 0.0
  %932 = vmatprep.subr.mxu0 0.0
  %933 = vmatpush1.msra.mxu0 0.0
  %934 = vmatprep.subr.mxu0 0.0
  %935 = vmatpush1.msra.mxu0 0.0
  %936 = vmatprep.subr.mxu0 0.0
  %937 = vmatpush1.msra.mxu0 0.0
  %938 = vmatprep.subr.mxu0 0.0
  %939 = vmatpush1.msra.mxu0 0.0
  %940 = vmatprep.subr.mxu0 0.0
  %941 = vmatpush1.msra.mxu0 0.0
  %942 = vmatprep.subr.mxu0 0.0
  %943 = vmatpush1.msra.mxu0 0.0
  %944 = vmatprep.subr.mxu0 0.0
  %945 = vmatpush1.msra.mxu0 0.0
  %946 = vmatprep.subr.mxu0 0.0
  %947 = vmatpush1.msra.mxu0 0.0
  %948 = vmatprep.subr.mxu0 0.0
  %949 = vmatpush1.msra.mxu0 0.0
  %950 = vmatprep.subr.mxu0 0.0
  %951 = vmatpush1.msra.mxu0 0.0
  %952 = vmatprep.mubr.f32.mxu0 0.0
  %v953 = vand.u32 %v52, 4294901760
  %954 = vmatmul.mubr.f32.gmra.mrb[0].mxu0 %v953
  %v955 = vpop.f32.mrb[0].mxu0
  %v956 = vadd.f32 %v873, %v955
  %v957 = vpop.f32.mrb[0].mxu0
  %958 = vdwg.mxu0
  %959 = vmatprep.subr.mxu0 0.0
  %v960 = vand.u32 %v24, 4294901760
  %961 = vmatpush1.msra.mxu0 %v960
  %962 = vmatprep.subr.mxu0 0.0
  %v963 = vand.u32 %v25, 4294901760
  %964 = vmatpush1.msra.mxu0 %v963
  %965 = vmatprep.subr.mxu0 0.0
  %v966 = vand.u32 %v26, 4294901760
  %967 = vmatpush1.msra.mxu0 %v966
  %968 = vmatprep.subr.mxu0 0.0
  %v969 = vand.u32 %v27, 4294901760
  %970 = vmatpush1.msra.mxu0 %v969
  %971 = vmatprep.subr.mxu0 0.0
  %972 = vmatpush1.msra.mxu0 0.0
  %973 = vmatprep.subr.mxu0 0.0
  %974 = vmatpush1.msra.mxu0 0.0
  %975 = vmatprep.subr.mxu0 0.0
  %976 = vmatpush1.msra.mxu0 0.0
  %977 = vmatprep.subr.mxu0 0.0
  %978 = vmatpush1.msra.mxu0 0.0
  %979 = vmatprep.subr.mxu0 0.0
  %980 = vmatpush1.msra.mxu0 0.0
  %981 = vmatprep.subr.mxu0 0.0
  %982 = vmatpush1.msra.mxu0 0.0
  %983 = vmatprep.subr.mxu0 0.0
  %984 = vmatpush1.msra.mxu0 0.0
  %985 = vmatprep.subr.mxu0 0.0
  %986 = vmatpush1.msra.mxu0 0.0
  %987 = vmatprep.subr.mxu0 0.0
  %988 = vmatpush1.msra.mxu0 0.0
  %989 = vmatprep.subr.mxu0 0.0
  %990 = vmatpush1.msra.mxu0 0.0
  %991 = vmatprep.subr.mxu0 0.0
  %992 = vmatpush1.msra.mxu0 0.0
  %993 = vmatprep.subr.mxu0 0.0
  %994 = vmatpush1.msra.mxu0 0.0
  %995 = vmatprep.subr.mxu0 0.0
  %996 = vmatpush1.msra.mxu0 0.0
  %997 = vmatprep.subr.mxu0 0.0
  %998 = vmatpush1.msra.mxu0 0.0
  %999 = vmatprep.subr.mxu0 0.0
  %1000 = vmatpush1.msra.mxu0 0.0
  %1001 = vmatprep.subr.mxu0 0.0
  %1002 = vmatpush1.msra.mxu0 0.0
  %1003 = vmatprep.subr.mxu0 0.0
  %1004 = vmatpush1.msra.mxu0 0.0
  %1005 = vmatprep.subr.mxu0 0.0
  %1006 = vmatpush1.msra.mxu0 0.0
  %1007 = vmatprep.subr.mxu0 0.0
  %1008 = vmatpush1.msra.mxu0 0.0
  %1009 = vmatprep.subr.mxu0 0.0
  %1010 = vmatpush1.msra.mxu0 0.0
  %1011 = vmatprep.subr.mxu0 0.0
  %1012 = vmatpush1.msra.mxu0 0.0
  %1013 = vmatprep.subr.mxu0 0.0
  %1014 = vmatpush1.msra.mxu0 0.0
  %1015 = vmatprep.subr.mxu0 0.0
  %1016 = vmatpush1.msra.mxu0 0.0
  %1017 = vmatprep.subr.mxu0 0.0
  %1018 = vmatpush1.msra.mxu0 0.0
  %1019 = vmatprep.subr.mxu0 0.0
  %1020 = vmatpush1.msra.mxu0 0.0
  %1021 = vmatprep.subr.mxu0 0.0
  %1022 = vmatpush1.msra.mxu0 0.0
  %1023 = vmatprep.subr.mxu0 0.0
  %1024 = vmatpush1.msra.mxu0 0.0
  %1025 = vmatprep.subr.mxu0 0.0
  %1026 = vmatpush1.msra.mxu0 0.0
  %1027 = vmatprep.mubr.f32.mxu0 0.0
  %v1028 = vand.u32 %v52, 4294901760
  %1029 = vmatmul.mubr.f32.gmra.mrb[0].mxu0 %v1028
  %v1030 = vpop.f32.mrb[0].mxu0
  %v1031 = vadd.f32 %v956, %v1030
  %v1032 = vpop.f32.mrb[0].mxu0
  %1033 = vdwg.mxu0
  %v1034 = vmul.f32 %v1031, 1.442695
  %v1035 = vpow.pop %v1034
  %v1036 = vsel %vm50, 0.0, %v1035
  %v1037 = vsel %vm541, %v1036, 0.0
  %1038 = vadd.xlane.f32.xlu0 %v1037
  %v1039 = vpop.xlane.xlu0 %1038
  %v1040 = vadd.f32 %v544, %v1039
  %v1041 = vmul.f32 %v1036, %v1031
  %v1042 = vsel %vm541, %v1041, 0.0
  %1043 = vadd.xlane.f32.xlu0 %v1042
  %v1044 = vpop.xlane.xlu0 %1043
  %v1045 = vadd.f32 %v548, %v1044
  %v1046 = vsub.f32 %v1040, %v40
  %v1047 = vmul.f32 %v1045, 0.1
  %v1048 = vmul.f32 %v37, %v40
  %v1049 = vsub.f32 %v1047, %v1048
  %v1050 = vmul.f32 %v32, 0.2
  %v1051 = vmul.f32 %v1046, 0.8
  %v1052 = vrcp.pop 14.0
  %v1053 = vmul.f32 %v1051, %v1052
  %v1054 = vadd.f32 %v1050, %v1053
  %v1055 = vmul.f32 %v1054, 14.0
  %v1056 = vrcp.pop %v1055
  %v1057 = vmul.f32 %v1049, %v1056
  %v1059 = vsel %vm34, %v42, 0
  %1061 = vmatprep.subr.mxu0 0.0
  %v1062 = vand.u32 %v24, 4294901760
  %1063 = vmatpush1.msra.mxu0 %v1062
  %1064 = vmatprep.subr.mxu0 0.0
  %v1065 = vand.u32 %v25, 4294901760
  %1066 = vmatpush1.msra.mxu0 %v1065
  %1067 = vmatprep.subr.mxu0 0.0
  %v1068 = vand.u32 %v26, 4294901760
  %1069 = vmatpush1.msra.mxu0 %v1068
  %1070 = vmatprep.subr.mxu0 0.0
  %v1071 = vand.u32 %v27, 4294901760
  %1072 = vmatpush1.msra.mxu0 %v1071
  %1073 = vmatprep.subr.mxu0 0.0
  %1074 = vmatpush1.msra.mxu0 0.0
  %1075 = vmatprep.subr.mxu0 0.0
  %1076 = vmatpush1.msra.mxu0 0.0
  %1077 = vmatprep.subr.mxu0 0.0
  %1078 = vmatpush1.msra.mxu0 0.0
  %1079 = vmatprep.subr.mxu0 0.0
  %1080 = vmatpush1.msra.mxu0 0.0
  %1081 = vmatprep.subr.mxu0 0.0
  %1082 = vmatpush1.msra.mxu0 0.0
  %1083 = vmatprep.subr.mxu0 0.0
  %1084 = vmatpush1.msra.mxu0 0.0
  %1085 = vmatprep.subr.mxu0 0.0
  %1086 = vmatpush1.msra.mxu0 0.0
  %1087 = vmatprep.subr.mxu0 0.0
  %1088 = vmatpush1.msra.mxu0 0.0
  %1089 = vmatprep.subr.mxu0 0.0
  %1090 = vmatpush1.msra.mxu0 0.0
  %1091 = vmatprep.subr.mxu0 0.0
  %1092 = vmatpush1.msra.mxu0 0.0
  %1093 = vmatprep.subr.mxu0 0.0
  %1094 = vmatpush1.msra.mxu0 0.0
  %1095 = vmatprep.subr.mxu0 0.0
  %1096 = vmatpush1.msra.mxu0 0.0
  %1097 = vmatprep.subr.mxu0 0.0
  %1098 = vmatpush1.msra.mxu0 0.0
  %1099 = vmatprep.subr.mxu0 0.0
  %1100 = vmatpush1.msra.mxu0 0.0
  %1101 = vmatprep.subr.mxu0 0.0
  %1102 = vmatpush1.msra.mxu0 0.0
  %1103 = vmatprep.subr.mxu0 0.0
  %1104 = vmatpush1.msra.mxu0 0.0
  %1105 = vmatprep.subr.mxu0 0.0
  %1106 = vmatpush1.msra.mxu0 0.0
  %1107 = vmatprep.subr.mxu0 0.0
  %1108 = vmatpush1.msra.mxu0 0.0
  %1109 = vmatprep.subr.mxu0 0.0
  %1110 = vmatpush1.msra.mxu0 0.0
  %1111 = vmatprep.subr.mxu0 0.0
  %1112 = vmatpush1.msra.mxu0 0.0
  %1113 = vmatprep.subr.mxu0 0.0
  %1114 = vmatpush1.msra.mxu0 0.0
  %1115 = vmatprep.subr.mxu0 0.0
  %1116 = vmatpush1.msra.mxu0 0.0
  %1117 = vmatprep.subr.mxu0 0.0
  %1118 = vmatpush1.msra.mxu0 0.0
  %1119 = vmatprep.subr.mxu0 0.0
  %1120 = vmatpush1.msra.mxu0 0.0
  %1121 = vmatprep.subr.mxu0 0.0
  %1122 = vmatpush1.msra.mxu0 0.0
  %1123 = vmatprep.subr.mxu0 0.0
  %1124 = vmatpush1.msra.mxu0 0.0
  %1125 = vmatprep.subr.mxu0 0.0
  %1126 = vmatpush1.msra.mxu0 0.0
  %1127 = vmatprep.subr.mxu0 0.0
  %1128 = vmatpush1.msra.mxu0 0.0
  %1129 = vmatprep.mubr.f32.mxu0 0.0
  %v1130 = vand.u32 %v1059, 4294901760
  %v1131 = vsub.f32 %v1059, %v1130
  %v1132 = vand.u32 %v1131, 4294901760
  %v1133 = vsub.f32 %v1131, %v1132
  %v1134 = vand.u32 %v1133, 4294901760
  %1135 = vmatmul.mubr.f32.gmra.mrb[0].mxu0 %v1134
  %v1136 = vpop.f32.mrb[0].mxu0
  %v1137 = vadd.f32 0.0, %v1136
  %v1138 = vpop.f32.mrb[0].mxu0
  %1139 = vdwg.mxu0
  %1140 = vmatprep.subr.mxu0 0.0
  %v1141 = vand.u32 %v24, 4294901760
  %v1142 = vsub.f32 %v24, %v1141
  %v1143 = vand.u32 %v1142, 4294901760
  %v1144 = vsub.f32 %v1142, %v1143
  %v1145 = vand.u32 %v1144, 4294901760
  %1146 = vmatpush1.msra.mxu0 %v1145
  %1147 = vmatprep.subr.mxu0 0.0
  %v1148 = vand.u32 %v25, 4294901760
  %v1149 = vsub.f32 %v25, %v1148
  %v1150 = vand.u32 %v1149, 4294901760
  %v1151 = vsub.f32 %v1149, %v1150
  %v1152 = vand.u32 %v1151, 4294901760
  %1153 = vmatpush1.msra.mxu0 %v1152
  %1154 = vmatprep.subr.mxu0 0.0
  %v1155 = vand.u32 %v26, 4294901760
  %v1156 = vsub.f32 %v26, %v1155
  %v1157 = vand.u32 %v1156, 4294901760
  %v1158 = vsub.f32 %v1156, %v1157
  %v1159 = vand.u32 %v1158, 4294901760
  %1160 = vmatpush1.msra.mxu0 %v1159
  %1161 = vmatprep.subr.mxu0 0.0
  %v1162 = vand.u32 %v27, 4294901760
  %v1163 = vsub.f32 %v27, %v1162
  %v1164 = vand.u32 %v1163, 4294901760
  %v1165 = vsub.f32 %v1163, %v1164
  %v1166 = vand.u32 %v1165, 4294901760
  %1167 = vmatpush1.msra.mxu0 %v1166
  %1168 = vmatprep.subr.mxu0 0.0
  %1169 = vmatpush1.msra.mxu0 0.0
  %1170 = vmatprep.subr.mxu0 0.0
  %1171 = vmatpush1.msra.mxu0 0.0
  %1172 = vmatprep.subr.mxu0 0.0
  %1173 = vmatpush1.msra.mxu0 0.0
  %1174 = vmatprep.subr.mxu0 0.0
  %1175 = vmatpush1.msra.mxu0 0.0
  %1176 = vmatprep.subr.mxu0 0.0
  %1177 = vmatpush1.msra.mxu0 0.0
  %1178 = vmatprep.subr.mxu0 0.0
  %1179 = vmatpush1.msra.mxu0 0.0
  %1180 = vmatprep.subr.mxu0 0.0
  %1181 = vmatpush1.msra.mxu0 0.0
  %1182 = vmatprep.subr.mxu0 0.0
  %1183 = vmatpush1.msra.mxu0 0.0
  %1184 = vmatprep.subr.mxu0 0.0
  %1185 = vmatpush1.msra.mxu0 0.0
  %1186 = vmatprep.subr.mxu0 0.0
  %1187 = vmatpush1.msra.mxu0 0.0
  %1188 = vmatprep.subr.mxu0 0.0
  %1189 = vmatpush1.msra.mxu0 0.0
  %1190 = vmatprep.subr.mxu0 0.0
  %1191 = vmatpush1.msra.mxu0 0.0
  %1192 = vmatprep.subr.mxu0 0.0
  %1193 = vmatpush1.msra.mxu0 0.0
  %1194 = vmatprep.subr.mxu0 0.0
  %1195 = vmatpush1.msra.mxu0 0.0
  %1196 = vmatprep.subr.mxu0 0.0
  %1197 = vmatpush1.msra.mxu0 0.0
  %1198 = vmatprep.subr.mxu0 0.0
  %1199 = vmatpush1.msra.mxu0 0.0
  %1200 = vmatprep.subr.mxu0 0.0
  %1201 = vmatpush1.msra.mxu0 0.0
  %1202 = vmatprep.subr.mxu0 0.0
  %1203 = vmatpush1.msra.mxu0 0.0
  %1204 = vmatprep.subr.mxu0 0.0
  %1205 = vmatpush1.msra.mxu0 0.0
  %1206 = vmatprep.subr.mxu0 0.0
  %1207 = vmatpush1.msra.mxu0 0.0
  %1208 = vmatprep.subr.mxu0 0.0
  %1209 = vmatpush1.msra.mxu0 0.0
  %1210 = vmatprep.subr.mxu0 0.0
  %1211 = vmatpush1.msra.mxu0 0.0
  %1212 = vmatprep.subr.mxu0 0.0
  %1213 = vmatpush1.msra.mxu0 0.0
  %1214 = vmatprep.subr.mxu0 0.0
  %1215 = vmatpush1.msra.mxu0 0.0
  %1216 = vmatprep.subr.mxu0 0.0
  %1217 = vmatpush1.msra.mxu0 0.0
  %1218 = vmatprep.subr.mxu0 0.0
  %1219 = vmatpush1.msra.mxu0 0.0
  %1220 = vmatprep.subr.mxu0 0.0
  %1221 = vmatpush1.msra.mxu0 0.0
  %1222 = vmatprep.subr.mxu0 0.0
  %1223 = vmatpush1.msra.mxu0 0.0
  %1224 = vmatprep.mubr.f32.mxu0 0.0
  %v1225 = vand.u32 %v1059, 4294901760
  %1226 = vmatmul.mubr.f32.gmra.mrb[0].mxu0 %v1225
  %v1227 = vpop.f32.mrb[0].mxu0
  %v1228 = vadd.f32 %v1137, %v1227
  %v1229 = vpop.f32.mrb[0].mxu0
  %1230 = vdwg.mxu0
  %1231 = vmatprep.subr.mxu0 0.0
  %v1232 = vand.u32 %v24, 4294901760
  %v1233 = vsub.f32 %v24, %v1232
  %1234 = vmatpush1.msra.mxu0 %v1233
  %1235 = vmatprep.subr.mxu0 0.0
  %v1236 = vand.u32 %v25, 4294901760
  %v1237 = vsub.f32 %v25, %v1236
  %1238 = vmatpush1.msra.mxu0 %v1237
  %1239 = vmatprep.subr.mxu0 0.0
  %v1240 = vand.u32 %v26, 4294901760
  %v1241 = vsub.f32 %v26, %v1240
  %1242 = vmatpush1.msra.mxu0 %v1241
  %1243 = vmatprep.subr.mxu0 0.0
  %v1244 = vand.u32 %v27, 4294901760
  %v1245 = vsub.f32 %v27, %v1244
  %1246 = vmatpush1.msra.mxu0 %v1245
  %1247 = vmatprep.subr.mxu0 0.0
  %1248 = vmatpush1.msra.mxu0 0.0
  %1249 = vmatprep.subr.mxu0 0.0
  %1250 = vmatpush1.msra.mxu0 0.0
  %1251 = vmatprep.subr.mxu0 0.0
  %1252 = vmatpush1.msra.mxu0 0.0
  %1253 = vmatprep.subr.mxu0 0.0
  %1254 = vmatpush1.msra.mxu0 0.0
  %1255 = vmatprep.subr.mxu0 0.0
  %1256 = vmatpush1.msra.mxu0 0.0
  %1257 = vmatprep.subr.mxu0 0.0
  %1258 = vmatpush1.msra.mxu0 0.0
  %1259 = vmatprep.subr.mxu0 0.0
  %1260 = vmatpush1.msra.mxu0 0.0
  %1261 = vmatprep.subr.mxu0 0.0
  %1262 = vmatpush1.msra.mxu0 0.0
  %1263 = vmatprep.subr.mxu0 0.0
  %1264 = vmatpush1.msra.mxu0 0.0
  %1265 = vmatprep.subr.mxu0 0.0
  %1266 = vmatpush1.msra.mxu0 0.0
  %1267 = vmatprep.subr.mxu0 0.0
  %1268 = vmatpush1.msra.mxu0 0.0
  %1269 = vmatprep.subr.mxu0 0.0
  %1270 = vmatpush1.msra.mxu0 0.0
  %1271 = vmatprep.subr.mxu0 0.0
  %1272 = vmatpush1.msra.mxu0 0.0
  %1273 = vmatprep.subr.mxu0 0.0
  %1274 = vmatpush1.msra.mxu0 0.0
  %1275 = vmatprep.subr.mxu0 0.0
  %1276 = vmatpush1.msra.mxu0 0.0
  %1277 = vmatprep.subr.mxu0 0.0
  %1278 = vmatpush1.msra.mxu0 0.0
  %1279 = vmatprep.subr.mxu0 0.0
  %1280 = vmatpush1.msra.mxu0 0.0
  %1281 = vmatprep.subr.mxu0 0.0
  %1282 = vmatpush1.msra.mxu0 0.0
  %1283 = vmatprep.subr.mxu0 0.0
  %1284 = vmatpush1.msra.mxu0 0.0
  %1285 = vmatprep.subr.mxu0 0.0
  %1286 = vmatpush1.msra.mxu0 0.0
  %1287 = vmatprep.subr.mxu0 0.0
  %1288 = vmatpush1.msra.mxu0 0.0
  %1289 = vmatprep.subr.mxu0 0.0
  %1290 = vmatpush1.msra.mxu0 0.0
  %1291 = vmatprep.subr.mxu0 0.0
  %1292 = vmatpush1.msra.mxu0 0.0
  %1293 = vmatprep.subr.mxu0 0.0
  %1294 = vmatpush1.msra.mxu0 0.0
  %1295 = vmatprep.subr.mxu0 0.0
  %1296 = vmatpush1.msra.mxu0 0.0
  %1297 = vmatprep.subr.mxu0 0.0
  %1298 = vmatpush1.msra.mxu0 0.0
  %1299 = vmatprep.subr.mxu0 0.0
  %1300 = vmatpush1.msra.mxu0 0.0
  %1301 = vmatprep.subr.mxu0 0.0
  %1302 = vmatpush1.msra.mxu0 0.0
  %1303 = vmatprep.mubr.f32.mxu0 0.0
  %v1304 = vand.u32 %v1059, 4294901760
  %v1305 = vsub.f32 %v1059, %v1304
  %1306 = vmatmul.mubr.f32.gmra.mrb[0].mxu0 %v1305
  %v1307 = vpop.f32.mrb[0].mxu0
  %v1308 = vadd.f32 %v1228, %v1307
  %v1309 = vpop.f32.mrb[0].mxu0
  %1310 = vdwg.mxu0
  %1311 = vmatprep.subr.mxu0 0.0
  %v1312 = vand.u32 %v24, 4294901760
  %1313 = vmatpush1.msra.mxu0 %v1312
  %1314 = vmatprep.subr.mxu0 0.0
  %v1315 = vand.u32 %v25, 4294901760
  %1316 = vmatpush1.msra.mxu0 %v1315
  %1317 = vmatprep.subr.mxu0 0.0
  %v1318 = vand.u32 %v26, 4294901760
  %1319 = vmatpush1.msra.mxu0 %v1318
  %1320 = vmatprep.subr.mxu0 0.0
  %v1321 = vand.u32 %v27, 4294901760
  %1322 = vmatpush1.msra.mxu0 %v1321
  %1323 = vmatprep.subr.mxu0 0.0
  %1324 = vmatpush1.msra.mxu0 0.0
  %1325 = vmatprep.subr.mxu0 0.0
  %1326 = vmatpush1.msra.mxu0 0.0
  %1327 = vmatprep.subr.mxu0 0.0
  %1328 = vmatpush1.msra.mxu0 0.0
  %1329 = vmatprep.subr.mxu0 0.0
  %1330 = vmatpush1.msra.mxu0 0.0
  %1331 = vmatprep.subr.mxu0 0.0
  %1332 = vmatpush1.msra.mxu0 0.0
  %1333 = vmatprep.subr.mxu0 0.0
  %1334 = vmatpush1.msra.mxu0 0.0
  %1335 = vmatprep.subr.mxu0 0.0
  %1336 = vmatpush1.msra.mxu0 0.0
  %1337 = vmatprep.subr.mxu0 0.0
  %1338 = vmatpush1.msra.mxu0 0.0
  %1339 = vmatprep.subr.mxu0 0.0
  %1340 = vmatpush1.msra.mxu0 0.0
  %1341 = vmatprep.subr.mxu0 0.0
  %1342 = vmatpush1.msra.mxu0 0.0
  %1343 = vmatprep.subr.mxu0 0.0
  %1344 = vmatpush1.msra.mxu0 0.0
  %1345 = vmatprep.subr.mxu0 0.0
  %1346 = vmatpush1.msra.mxu0 0.0
  %1347 = vmatprep.subr.mxu0 0.0
  %1348 = vmatpush1.msra.mxu0 0.0
  %1349 = vmatprep.subr.mxu0 0.0
  %1350 = vmatpush1.msra.mxu0 0.0
  %1351 = vmatprep.subr.mxu0 0.0
  %1352 = vmatpush1.msra.mxu0 0.0
  %1353 = vmatprep.subr.mxu0 0.0
  %1354 = vmatpush1.msra.mxu0 0.0
  %1355 = vmatprep.subr.mxu0 0.0
  %1356 = vmatpush1.msra.mxu0 0.0
  %1357 = vmatprep.subr.mxu0 0.0
  %1358 = vmatpush1.msra.mxu0 0.0
  %1359 = vmatprep.subr.mxu0 0.0
  %1360 = vmatpush1.msra.mxu0 0.0
  %1361 = vmatprep.subr.mxu0 0.0
  %1362 = vmatpush1.msra.mxu0 0.0
  %1363 = vmatprep.subr.mxu0 0.0
  %1364 = vmatpush1.msra.mxu0 0.0
  %1365 = vmatprep.subr.mxu0 0.0
  %1366 = vmatpush1.msra.mxu0 0.0
  %1367 = vmatprep.subr.mxu0 0.0
  %1368 = vmatpush1.msra.mxu0 0.0
  %1369 = vmatprep.subr.mxu0 0.0
  %1370 = vmatpush1.msra.mxu0 0.0
  %1371 = vmatprep.subr.mxu0 0.0
  %1372 = vmatpush1.msra.mxu0 0.0
  %1373 = vmatprep.subr.mxu0 0.0
  %1374 = vmatpush1.msra.mxu0 0.0
  %1375 = vmatprep.subr.mxu0 0.0
  %1376 = vmatpush1.msra.mxu0 0.0
  %1377 = vmatprep.subr.mxu0 0.0
  %1378 = vmatpush1.msra.mxu0 0.0
  %1379 = vmatprep.mubr.f32.mxu0 0.0
  %v1380 = vand.u32 %v1059, 4294901760
  %v1381 = vsub.f32 %v1059, %v1380
  %v1382 = vand.u32 %v1381, 4294901760
  %1383 = vmatmul.mubr.f32.gmra.mrb[0].mxu0 %v1382
  %v1384 = vpop.f32.mrb[0].mxu0
  %v1385 = vadd.f32 %v1308, %v1384
  %v1386 = vpop.f32.mrb[0].mxu0
  %1387 = vdwg.mxu0
  %1388 = vmatprep.subr.mxu0 0.0
  %v1389 = vand.u32 %v24, 4294901760
  %v1390 = vsub.f32 %v24, %v1389
  %v1391 = vand.u32 %v1390, 4294901760
  %1392 = vmatpush1.msra.mxu0 %v1391
  %1393 = vmatprep.subr.mxu0 0.0
  %v1394 = vand.u32 %v25, 4294901760
  %v1395 = vsub.f32 %v25, %v1394
  %v1396 = vand.u32 %v1395, 4294901760
  %1397 = vmatpush1.msra.mxu0 %v1396
  %1398 = vmatprep.subr.mxu0 0.0
  %v1399 = vand.u32 %v26, 4294901760
  %v1400 = vsub.f32 %v26, %v1399
  %v1401 = vand.u32 %v1400, 4294901760
  %1402 = vmatpush1.msra.mxu0 %v1401
  %1403 = vmatprep.subr.mxu0 0.0
  %v1404 = vand.u32 %v27, 4294901760
  %v1405 = vsub.f32 %v27, %v1404
  %v1406 = vand.u32 %v1405, 4294901760
  %1407 = vmatpush1.msra.mxu0 %v1406
  %1408 = vmatprep.subr.mxu0 0.0
  %1409 = vmatpush1.msra.mxu0 0.0
  %1410 = vmatprep.subr.mxu0 0.0
  %1411 = vmatpush1.msra.mxu0 0.0
  %1412 = vmatprep.subr.mxu0 0.0
  %1413 = vmatpush1.msra.mxu0 0.0
  %1414 = vmatprep.subr.mxu0 0.0
  %1415 = vmatpush1.msra.mxu0 0.0
  %1416 = vmatprep.subr.mxu0 0.0
  %1417 = vmatpush1.msra.mxu0 0.0
  %1418 = vmatprep.subr.mxu0 0.0
  %1419 = vmatpush1.msra.mxu0 0.0
  %1420 = vmatprep.subr.mxu0 0.0
  %1421 = vmatpush1.msra.mxu0 0.0
  %1422 = vmatprep.subr.mxu0 0.0
  %1423 = vmatpush1.msra.mxu0 0.0
  %1424 = vmatprep.subr.mxu0 0.0
  %1425 = vmatpush1.msra.mxu0 0.0
  %1426 = vmatprep.subr.mxu0 0.0
  %1427 = vmatpush1.msra.mxu0 0.0
  %1428 = vmatprep.subr.mxu0 0.0
  %1429 = vmatpush1.msra.mxu0 0.0
  %1430 = vmatprep.subr.mxu0 0.0
  %1431 = vmatpush1.msra.mxu0 0.0
  %1432 = vmatprep.subr.mxu0 0.0
  %1433 = vmatpush1.msra.mxu0 0.0
  %1434 = vmatprep.subr.mxu0 0.0
  %1435 = vmatpush1.msra.mxu0 0.0
  %1436 = vmatprep.subr.mxu0 0.0
  %1437 = vmatpush1.msra.mxu0 0.0
  %1438 = vmatprep.subr.mxu0 0.0
  %1439 = vmatpush1.msra.mxu0 0.0
  %1440 = vmatprep.subr.mxu0 0.0
  %1441 = vmatpush1.msra.mxu0 0.0
  %1442 = vmatprep.subr.mxu0 0.0
  %1443 = vmatpush1.msra.mxu0 0.0
  %1444 = vmatprep.subr.mxu0 0.0
  %1445 = vmatpush1.msra.mxu0 0.0
  %1446 = vmatprep.subr.mxu0 0.0
  %1447 = vmatpush1.msra.mxu0 0.0
  %1448 = vmatprep.subr.mxu0 0.0
  %1449 = vmatpush1.msra.mxu0 0.0
  %1450 = vmatprep.subr.mxu0 0.0
  %1451 = vmatpush1.msra.mxu0 0.0
  %1452 = vmatprep.subr.mxu0 0.0
  %1453 = vmatpush1.msra.mxu0 0.0
  %1454 = vmatprep.subr.mxu0 0.0
  %1455 = vmatpush1.msra.mxu0 0.0
  %1456 = vmatprep.subr.mxu0 0.0
  %1457 = vmatpush1.msra.mxu0 0.0
  %1458 = vmatprep.subr.mxu0 0.0
  %1459 = vmatpush1.msra.mxu0 0.0
  %1460 = vmatprep.subr.mxu0 0.0
  %1461 = vmatpush1.msra.mxu0 0.0
  %1462 = vmatprep.subr.mxu0 0.0
  %1463 = vmatpush1.msra.mxu0 0.0
  %1464 = vmatprep.mubr.f32.mxu0 0.0
  %v1465 = vand.u32 %v1059, 4294901760
  %1466 = vmatmul.mubr.f32.gmra.mrb[0].mxu0 %v1465
  %v1467 = vpop.f32.mrb[0].mxu0
  %v1468 = vadd.f32 %v1385, %v1467
  %v1469 = vpop.f32.mrb[0].mxu0
  %1470 = vdwg.mxu0
  %1471 = vmatprep.subr.mxu0 0.0
  %v1472 = vand.u32 %v24, 4294901760
  %1473 = vmatpush1.msra.mxu0 %v1472
  %1474 = vmatprep.subr.mxu0 0.0
  %v1475 = vand.u32 %v25, 4294901760
  %1476 = vmatpush1.msra.mxu0 %v1475
  %1477 = vmatprep.subr.mxu0 0.0
  %v1478 = vand.u32 %v26, 4294901760
  %1479 = vmatpush1.msra.mxu0 %v1478
  %1480 = vmatprep.subr.mxu0 0.0
  %v1481 = vand.u32 %v27, 4294901760
  %1482 = vmatpush1.msra.mxu0 %v1481
  %1483 = vmatprep.subr.mxu0 0.0
  %1484 = vmatpush1.msra.mxu0 0.0
  %1485 = vmatprep.subr.mxu0 0.0
  %1486 = vmatpush1.msra.mxu0 0.0
  %1487 = vmatprep.subr.mxu0 0.0
  %1488 = vmatpush1.msra.mxu0 0.0
  %1489 = vmatprep.subr.mxu0 0.0
  %1490 = vmatpush1.msra.mxu0 0.0
  %1491 = vmatprep.subr.mxu0 0.0
  %1492 = vmatpush1.msra.mxu0 0.0
  %1493 = vmatprep.subr.mxu0 0.0
  %1494 = vmatpush1.msra.mxu0 0.0
  %1495 = vmatprep.subr.mxu0 0.0
  %1496 = vmatpush1.msra.mxu0 0.0
  %1497 = vmatprep.subr.mxu0 0.0
  %1498 = vmatpush1.msra.mxu0 0.0
  %1499 = vmatprep.subr.mxu0 0.0
  %1500 = vmatpush1.msra.mxu0 0.0
  %1501 = vmatprep.subr.mxu0 0.0
  %1502 = vmatpush1.msra.mxu0 0.0
  %1503 = vmatprep.subr.mxu0 0.0
  %1504 = vmatpush1.msra.mxu0 0.0
  %1505 = vmatprep.subr.mxu0 0.0
  %1506 = vmatpush1.msra.mxu0 0.0
  %1507 = vmatprep.subr.mxu0 0.0
  %1508 = vmatpush1.msra.mxu0 0.0
  %1509 = vmatprep.subr.mxu0 0.0
  %1510 = vmatpush1.msra.mxu0 0.0
  %1511 = vmatprep.subr.mxu0 0.0
  %1512 = vmatpush1.msra.mxu0 0.0
  %1513 = vmatprep.subr.mxu0 0.0
  %1514 = vmatpush1.msra.mxu0 0.0
  %1515 = vmatprep.subr.mxu0 0.0
  %1516 = vmatpush1.msra.mxu0 0.0
  %1517 = vmatprep.subr.mxu0 0.0
  %1518 = vmatpush1.msra.mxu0 0.0
  %1519 = vmatprep.subr.mxu0 0.0
  %1520 = vmatpush1.msra.mxu0 0.0
  %1521 = vmatprep.subr.mxu0 0.0
  %1522 = vmatpush1.msra.mxu0 0.0
  %1523 = vmatprep.subr.mxu0 0.0
  %1524 = vmatpush1.msra.mxu0 0.0
  %1525 = vmatprep.subr.mxu0 0.0
  %1526 = vmatpush1.msra.mxu0 0.0
  %1527 = vmatprep.subr.mxu0 0.0
  %1528 = vmatpush1.msra.mxu0 0.0
  %1529 = vmatprep.subr.mxu0 0.0
  %1530 = vmatpush1.msra.mxu0 0.0
  %1531 = vmatprep.subr.mxu0 0.0
  %1532 = vmatpush1.msra.mxu0 0.0
  %1533 = vmatprep.subr.mxu0 0.0
  %1534 = vmatpush1.msra.mxu0 0.0
  %1535 = vmatprep.subr.mxu0 0.0
  %1536 = vmatpush1.msra.mxu0 0.0
  %1537 = vmatprep.subr.mxu0 0.0
  %1538 = vmatpush1.msra.mxu0 0.0
  %1539 = vmatprep.mubr.f32.mxu0 0.0
  %v1540 = vand.u32 %v1059, 4294901760
  %1541 = vmatmul.mubr.f32.gmra.mrb[0].mxu0 %v1540
  %v1542 = vpop.f32.mrb[0].mxu0
  %v1543 = vadd.f32 %v1468, %v1542
  %v1544 = vpop.f32.mrb[0].mxu0
  %1545 = vdwg.mxu0
  %v1546 = vmul.f32 %v1543, 1.442695
  %v1547 = vpow.pop %v1546
  %v1548 = vsel %vm541, %v1547, 0.0
  %1549 = vadd.xlane.f32.xlu0 %v1548
  %v1550 = vpop.xlane.xlu0 %1549
  %v1551 = vmul.f32 %v1547, %v1543
  %v1552 = vsel %vm541, %v1551, 0.0
  %1553 = vadd.xlane.f32.xlu0 %v1552
  %v1554 = vpop.xlane.xlu0 %1553
  %1555 = vmatprep.subr.mxu0 0.0
  %v1556 = vand.u32 %v28, 4294901760
  %1557 = vmatpush1.msra.mxu0 %v1556
  %1558 = vmatprep.subr.mxu0 0.0
  %v1559 = vand.u32 %v29, 4294901760
  %1560 = vmatpush1.msra.mxu0 %v1559
  %1561 = vmatprep.subr.mxu0 0.0
  %v1562 = vand.u32 %v30, 4294901760
  %1563 = vmatpush1.msra.mxu0 %v1562
  %1564 = vmatprep.subr.mxu0 0.0
  %v1565 = vand.u32 %v31, 4294901760
  %1566 = vmatpush1.msra.mxu0 %v1565
  %1567 = vmatprep.subr.mxu0 0.0
  %1568 = vmatpush1.msra.mxu0 0.0
  %1569 = vmatprep.subr.mxu0 0.0
  %1570 = vmatpush1.msra.mxu0 0.0
  %1571 = vmatprep.subr.mxu0 0.0
  %1572 = vmatpush1.msra.mxu0 0.0
  %1573 = vmatprep.subr.mxu0 0.0
  %1574 = vmatpush1.msra.mxu0 0.0
  %1575 = vmatprep.subr.mxu0 0.0
  %1576 = vmatpush1.msra.mxu0 0.0
  %1577 = vmatprep.subr.mxu0 0.0
  %1578 = vmatpush1.msra.mxu0 0.0
  %1579 = vmatprep.subr.mxu0 0.0
  %1580 = vmatpush1.msra.mxu0 0.0
  %1581 = vmatprep.subr.mxu0 0.0
  %1582 = vmatpush1.msra.mxu0 0.0
  %1583 = vmatprep.subr.mxu0 0.0
  %1584 = vmatpush1.msra.mxu0 0.0
  %1585 = vmatprep.subr.mxu0 0.0
  %1586 = vmatpush1.msra.mxu0 0.0
  %1587 = vmatprep.subr.mxu0 0.0
  %1588 = vmatpush1.msra.mxu0 0.0
  %1589 = vmatprep.subr.mxu0 0.0
  %1590 = vmatpush1.msra.mxu0 0.0
  %1591 = vmatprep.subr.mxu0 0.0
  %1592 = vmatpush1.msra.mxu0 0.0
  %1593 = vmatprep.subr.mxu0 0.0
  %1594 = vmatpush1.msra.mxu0 0.0
  %1595 = vmatprep.subr.mxu0 0.0
  %1596 = vmatpush1.msra.mxu0 0.0
  %1597 = vmatprep.subr.mxu0 0.0
  %1598 = vmatpush1.msra.mxu0 0.0
  %1599 = vmatprep.subr.mxu0 0.0
  %1600 = vmatpush1.msra.mxu0 0.0
  %1601 = vmatprep.subr.mxu0 0.0
  %1602 = vmatpush1.msra.mxu0 0.0
  %1603 = vmatprep.subr.mxu0 0.0
  %1604 = vmatpush1.msra.mxu0 0.0
  %1605 = vmatprep.subr.mxu0 0.0
  %1606 = vmatpush1.msra.mxu0 0.0
  %1607 = vmatprep.subr.mxu0 0.0
  %1608 = vmatpush1.msra.mxu0 0.0
  %1609 = vmatprep.subr.mxu0 0.0
  %1610 = vmatpush1.msra.mxu0 0.0
  %1611 = vmatprep.subr.mxu0 0.0
  %1612 = vmatpush1.msra.mxu0 0.0
  %1613 = vmatprep.subr.mxu0 0.0
  %1614 = vmatpush1.msra.mxu0 0.0
  %1615 = vmatprep.subr.mxu0 0.0
  %1616 = vmatpush1.msra.mxu0 0.0
  %1617 = vmatprep.subr.mxu0 0.0
  %1618 = vmatpush1.msra.mxu0 0.0
  %1619 = vmatprep.subr.mxu0 0.0
  %1620 = vmatpush1.msra.mxu0 0.0
  %1621 = vmatprep.subr.mxu0 0.0
  %1622 = vmatpush1.msra.mxu0 0.0
  %1623 = vmatprep.mubr.f32.mxu0 0.0
  %v1624 = vand.u32 %v1059, 4294901760
  %v1625 = vsub.f32 %v1059, %v1624
  %v1626 = vand.u32 %v1625, 4294901760
  %v1627 = vsub.f32 %v1625, %v1626
  %v1628 = vand.u32 %v1627, 4294901760
  %1629 = vmatmul.mubr.f32.gmra.mrb[0].mxu0 %v1628
  %v1630 = vpop.f32.mrb[0].mxu0
  %v1631 = vadd.f32 0.0, %v1630
  %v1632 = vpop.f32.mrb[0].mxu0
  %1633 = vdwg.mxu0
  %1634 = vmatprep.subr.mxu0 0.0
  %v1635 = vand.u32 %v28, 4294901760
  %v1636 = vsub.f32 %v28, %v1635
  %v1637 = vand.u32 %v1636, 4294901760
  %v1638 = vsub.f32 %v1636, %v1637
  %v1639 = vand.u32 %v1638, 4294901760
  %1640 = vmatpush1.msra.mxu0 %v1639
  %1641 = vmatprep.subr.mxu0 0.0
  %v1642 = vand.u32 %v29, 4294901760
  %v1643 = vsub.f32 %v29, %v1642
  %v1644 = vand.u32 %v1643, 4294901760
  %v1645 = vsub.f32 %v1643, %v1644
  %v1646 = vand.u32 %v1645, 4294901760
  %1647 = vmatpush1.msra.mxu0 %v1646
  %1648 = vmatprep.subr.mxu0 0.0
  %v1649 = vand.u32 %v30, 4294901760
  %v1650 = vsub.f32 %v30, %v1649
  %v1651 = vand.u32 %v1650, 4294901760
  %v1652 = vsub.f32 %v1650, %v1651
  %v1653 = vand.u32 %v1652, 4294901760
  %1654 = vmatpush1.msra.mxu0 %v1653
  %1655 = vmatprep.subr.mxu0 0.0
  %v1656 = vand.u32 %v31, 4294901760
  %v1657 = vsub.f32 %v31, %v1656
  %v1658 = vand.u32 %v1657, 4294901760
  %v1659 = vsub.f32 %v1657, %v1658
  %v1660 = vand.u32 %v1659, 4294901760
  %1661 = vmatpush1.msra.mxu0 %v1660
  %1662 = vmatprep.subr.mxu0 0.0
  %1663 = vmatpush1.msra.mxu0 0.0
  %1664 = vmatprep.subr.mxu0 0.0
  %1665 = vmatpush1.msra.mxu0 0.0
  %1666 = vmatprep.subr.mxu0 0.0
  %1667 = vmatpush1.msra.mxu0 0.0
  %1668 = vmatprep.subr.mxu0 0.0
  %1669 = vmatpush1.msra.mxu0 0.0
  %1670 = vmatprep.subr.mxu0 0.0
  %1671 = vmatpush1.msra.mxu0 0.0
  %1672 = vmatprep.subr.mxu0 0.0
  %1673 = vmatpush1.msra.mxu0 0.0
  %1674 = vmatprep.subr.mxu0 0.0
  %1675 = vmatpush1.msra.mxu0 0.0
  %1676 = vmatprep.subr.mxu0 0.0
  %1677 = vmatpush1.msra.mxu0 0.0
  %1678 = vmatprep.subr.mxu0 0.0
  %1679 = vmatpush1.msra.mxu0 0.0
  %1680 = vmatprep.subr.mxu0 0.0
  %1681 = vmatpush1.msra.mxu0 0.0
  %1682 = vmatprep.subr.mxu0 0.0
  %1683 = vmatpush1.msra.mxu0 0.0
  %1684 = vmatprep.subr.mxu0 0.0
  %1685 = vmatpush1.msra.mxu0 0.0
  %1686 = vmatprep.subr.mxu0 0.0
  %1687 = vmatpush1.msra.mxu0 0.0
  %1688 = vmatprep.subr.mxu0 0.0
  %1689 = vmatpush1.msra.mxu0 0.0
  %1690 = vmatprep.subr.mxu0 0.0
  %1691 = vmatpush1.msra.mxu0 0.0
  %1692 = vmatprep.subr.mxu0 0.0
  %1693 = vmatpush1.msra.mxu0 0.0
  %1694 = vmatprep.subr.mxu0 0.0
  %1695 = vmatpush1.msra.mxu0 0.0
  %1696 = vmatprep.subr.mxu0 0.0
  %1697 = vmatpush1.msra.mxu0 0.0
  %1698 = vmatprep.subr.mxu0 0.0
  %1699 = vmatpush1.msra.mxu0 0.0
  %1700 = vmatprep.subr.mxu0 0.0
  %1701 = vmatpush1.msra.mxu0 0.0
  %1702 = vmatprep.subr.mxu0 0.0
  %1703 = vmatpush1.msra.mxu0 0.0
  %1704 = vmatprep.subr.mxu0 0.0
  %1705 = vmatpush1.msra.mxu0 0.0
  %1706 = vmatprep.subr.mxu0 0.0
  %1707 = vmatpush1.msra.mxu0 0.0
  %1708 = vmatprep.subr.mxu0 0.0
  %1709 = vmatpush1.msra.mxu0 0.0
  %1710 = vmatprep.subr.mxu0 0.0
  %1711 = vmatpush1.msra.mxu0 0.0
  %1712 = vmatprep.subr.mxu0 0.0
  %1713 = vmatpush1.msra.mxu0 0.0
  %1714 = vmatprep.subr.mxu0 0.0
  %1715 = vmatpush1.msra.mxu0 0.0
  %1716 = vmatprep.subr.mxu0 0.0
  %1717 = vmatpush1.msra.mxu0 0.0
  %1718 = vmatprep.mubr.f32.mxu0 0.0
  %v1719 = vand.u32 %v1059, 4294901760
  %1720 = vmatmul.mubr.f32.gmra.mrb[0].mxu0 %v1719
  %v1721 = vpop.f32.mrb[0].mxu0
  %v1722 = vadd.f32 %v1631, %v1721
  %v1723 = vpop.f32.mrb[0].mxu0
  %1724 = vdwg.mxu0
  %1725 = vmatprep.subr.mxu0 0.0
  %v1726 = vand.u32 %v28, 4294901760
  %v1727 = vsub.f32 %v28, %v1726
  %1728 = vmatpush1.msra.mxu0 %v1727
  %1729 = vmatprep.subr.mxu0 0.0
  %v1730 = vand.u32 %v29, 4294901760
  %v1731 = vsub.f32 %v29, %v1730
  %1732 = vmatpush1.msra.mxu0 %v1731
  %1733 = vmatprep.subr.mxu0 0.0
  %v1734 = vand.u32 %v30, 4294901760
  %v1735 = vsub.f32 %v30, %v1734
  %1736 = vmatpush1.msra.mxu0 %v1735
  %1737 = vmatprep.subr.mxu0 0.0
  %v1738 = vand.u32 %v31, 4294901760
  %v1739 = vsub.f32 %v31, %v1738
  %1740 = vmatpush1.msra.mxu0 %v1739
  %1741 = vmatprep.subr.mxu0 0.0
  %1742 = vmatpush1.msra.mxu0 0.0
  %1743 = vmatprep.subr.mxu0 0.0
  %1744 = vmatpush1.msra.mxu0 0.0
  %1745 = vmatprep.subr.mxu0 0.0
  %1746 = vmatpush1.msra.mxu0 0.0
  %1747 = vmatprep.subr.mxu0 0.0
  %1748 = vmatpush1.msra.mxu0 0.0
  %1749 = vmatprep.subr.mxu0 0.0
  %1750 = vmatpush1.msra.mxu0 0.0
  %1751 = vmatprep.subr.mxu0 0.0
  %1752 = vmatpush1.msra.mxu0 0.0
  %1753 = vmatprep.subr.mxu0 0.0
  %1754 = vmatpush1.msra.mxu0 0.0
  %1755 = vmatprep.subr.mxu0 0.0
  %1756 = vmatpush1.msra.mxu0 0.0
  %1757 = vmatprep.subr.mxu0 0.0
  %1758 = vmatpush1.msra.mxu0 0.0
  %1759 = vmatprep.subr.mxu0 0.0
  %1760 = vmatpush1.msra.mxu0 0.0
  %1761 = vmatprep.subr.mxu0 0.0
  %1762 = vmatpush1.msra.mxu0 0.0
  %1763 = vmatprep.subr.mxu0 0.0
  %1764 = vmatpush1.msra.mxu0 0.0
  %1765 = vmatprep.subr.mxu0 0.0
  %1766 = vmatpush1.msra.mxu0 0.0
  %1767 = vmatprep.subr.mxu0 0.0
  %1768 = vmatpush1.msra.mxu0 0.0
  %1769 = vmatprep.subr.mxu0 0.0
  %1770 = vmatpush1.msra.mxu0 0.0
  %1771 = vmatprep.subr.mxu0 0.0
  %1772 = vmatpush1.msra.mxu0 0.0
  %1773 = vmatprep.subr.mxu0 0.0
  %1774 = vmatpush1.msra.mxu0 0.0
  %1775 = vmatprep.subr.mxu0 0.0
  %1776 = vmatpush1.msra.mxu0 0.0
  %1777 = vmatprep.subr.mxu0 0.0
  %1778 = vmatpush1.msra.mxu0 0.0
  %1779 = vmatprep.subr.mxu0 0.0
  %1780 = vmatpush1.msra.mxu0 0.0
  %1781 = vmatprep.subr.mxu0 0.0
  %1782 = vmatpush1.msra.mxu0 0.0
  %1783 = vmatprep.subr.mxu0 0.0
  %1784 = vmatpush1.msra.mxu0 0.0
  %1785 = vmatprep.subr.mxu0 0.0
  %1786 = vmatpush1.msra.mxu0 0.0
  %1787 = vmatprep.subr.mxu0 0.0
  %1788 = vmatpush1.msra.mxu0 0.0
  %1789 = vmatprep.subr.mxu0 0.0
  %1790 = vmatpush1.msra.mxu0 0.0
  %1791 = vmatprep.subr.mxu0 0.0
  %1792 = vmatpush1.msra.mxu0 0.0
  %1793 = vmatprep.subr.mxu0 0.0
  %1794 = vmatpush1.msra.mxu0 0.0
  %1795 = vmatprep.subr.mxu0 0.0
  %1796 = vmatpush1.msra.mxu0 0.0
  %1797 = vmatprep.mubr.f32.mxu0 0.0
  %v1798 = vand.u32 %v1059, 4294901760
  %v1799 = vsub.f32 %v1059, %v1798
  %1800 = vmatmul.mubr.f32.gmra.mrb[0].mxu0 %v1799
  %v1801 = vpop.f32.mrb[0].mxu0
  %v1802 = vadd.f32 %v1722, %v1801
  %v1803 = vpop.f32.mrb[0].mxu0
  %1804 = vdwg.mxu0
  %1805 = vmatprep.subr.mxu0 0.0
  %v1806 = vand.u32 %v28, 4294901760
  %1807 = vmatpush1.msra.mxu0 %v1806
  %1808 = vmatprep.subr.mxu0 0.0
  %v1809 = vand.u32 %v29, 4294901760
  %1810 = vmatpush1.msra.mxu0 %v1809
  %1811 = vmatprep.subr.mxu0 0.0
  %v1812 = vand.u32 %v30, 4294901760
  %1813 = vmatpush1.msra.mxu0 %v1812
  %1814 = vmatprep.subr.mxu0 0.0
  %v1815 = vand.u32 %v31, 4294901760
  %1816 = vmatpush1.msra.mxu0 %v1815
  %1817 = vmatprep.subr.mxu0 0.0
  %1818 = vmatpush1.msra.mxu0 0.0
  %1819 = vmatprep.subr.mxu0 0.0
  %1820 = vmatpush1.msra.mxu0 0.0
  %1821 = vmatprep.subr.mxu0 0.0
  %1822 = vmatpush1.msra.mxu0 0.0
  %1823 = vmatprep.subr.mxu0 0.0
  %1824 = vmatpush1.msra.mxu0 0.0
  %1825 = vmatprep.subr.mxu0 0.0
  %1826 = vmatpush1.msra.mxu0 0.0
  %1827 = vmatprep.subr.mxu0 0.0
  %1828 = vmatpush1.msra.mxu0 0.0
  %1829 = vmatprep.subr.mxu0 0.0
  %1830 = vmatpush1.msra.mxu0 0.0
  %1831 = vmatprep.subr.mxu0 0.0
  %1832 = vmatpush1.msra.mxu0 0.0
  %1833 = vmatprep.subr.mxu0 0.0
  %1834 = vmatpush1.msra.mxu0 0.0
  %1835 = vmatprep.subr.mxu0 0.0
  %1836 = vmatpush1.msra.mxu0 0.0
  %1837 = vmatprep.subr.mxu0 0.0
  %1838 = vmatpush1.msra.mxu0 0.0
  %1839 = vmatprep.subr.mxu0 0.0
  %1840 = vmatpush1.msra.mxu0 0.0
  %1841 = vmatprep.subr.mxu0 0.0
  %1842 = vmatpush1.msra.mxu0 0.0
  %1843 = vmatprep.subr.mxu0 0.0
  %1844 = vmatpush1.msra.mxu0 0.0
  %1845 = vmatprep.subr.mxu0 0.0
  %1846 = vmatpush1.msra.mxu0 0.0
  %1847 = vmatprep.subr.mxu0 0.0
  %1848 = vmatpush1.msra.mxu0 0.0
  %1849 = vmatprep.subr.mxu0 0.0
  %1850 = vmatpush1.msra.mxu0 0.0
  %1851 = vmatprep.subr.mxu0 0.0
  %1852 = vmatpush1.msra.mxu0 0.0
  %1853 = vmatprep.subr.mxu0 0.0
  %1854 = vmatpush1.msra.mxu0 0.0
  %1855 = vmatprep.subr.mxu0 0.0
  %1856 = vmatpush1.msra.mxu0 0.0
  %1857 = vmatprep.subr.mxu0 0.0
  %1858 = vmatpush1.msra.mxu0 0.0
  %1859 = vmatprep.subr.mxu0 0.0
  %1860 = vmatpush1.msra.mxu0 0.0
  %1861 = vmatprep.subr.mxu0 0.0
  %1862 = vmatpush1.msra.mxu0 0.0
  %1863 = vmatprep.subr.mxu0 0.0
  %1864 = vmatpush1.msra.mxu0 0.0
  %1865 = vmatprep.subr.mxu0 0.0
  %1866 = vmatpush1.msra.mxu0 0.0
  %1867 = vmatprep.subr.mxu0 0.0
  %1868 = vmatpush1.msra.mxu0 0.0
  %1869 = vmatprep.subr.mxu0 0.0
  %1870 = vmatpush1.msra.mxu0 0.0
  %1871 = vmatprep.subr.mxu0 0.0
  %1872 = vmatpush1.msra.mxu0 0.0
  %1873 = vmatprep.mubr.f32.mxu0 0.0
  %v1874 = vand.u32 %v1059, 4294901760
  %v1875 = vsub.f32 %v1059, %v1874
  %v1876 = vand.u32 %v1875, 4294901760
  %1877 = vmatmul.mubr.f32.gmra.mrb[0].mxu0 %v1876
  %v1878 = vpop.f32.mrb[0].mxu0
  %v1879 = vadd.f32 %v1802, %v1878
  %v1880 = vpop.f32.mrb[0].mxu0
  %1881 = vdwg.mxu0
  %1882 = vmatprep.subr.mxu0 0.0
  %v1883 = vand.u32 %v28, 4294901760
  %v1884 = vsub.f32 %v28, %v1883
  %v1885 = vand.u32 %v1884, 4294901760
  %1886 = vmatpush1.msra.mxu0 %v1885
  %1887 = vmatprep.subr.mxu0 0.0
  %v1888 = vand.u32 %v29, 4294901760
  %v1889 = vsub.f32 %v29, %v1888
  %v1890 = vand.u32 %v1889, 4294901760
  %1891 = vmatpush1.msra.mxu0 %v1890
  %1892 = vmatprep.subr.mxu0 0.0
  %v1893 = vand.u32 %v30, 4294901760
  %v1894 = vsub.f32 %v30, %v1893
  %v1895 = vand.u32 %v1894, 4294901760
  %1896 = vmatpush1.msra.mxu0 %v1895
  %1897 = vmatprep.subr.mxu0 0.0
  %v1898 = vand.u32 %v31, 4294901760
  %v1899 = vsub.f32 %v31, %v1898
  %v1900 = vand.u32 %v1899, 4294901760
  %1901 = vmatpush1.msra.mxu0 %v1900
  %1902 = vmatprep.subr.mxu0 0.0
  %1903 = vmatpush1.msra.mxu0 0.0
  %1904 = vmatprep.subr.mxu0 0.0
  %1905 = vmatpush1.msra.mxu0 0.0
  %1906 = vmatprep.subr.mxu0 0.0
  %1907 = vmatpush1.msra.mxu0 0.0
  %1908 = vmatprep.subr.mxu0 0.0
  %1909 = vmatpush1.msra.mxu0 0.0
  %1910 = vmatprep.subr.mxu0 0.0
  %1911 = vmatpush1.msra.mxu0 0.0
  %1912 = vmatprep.subr.mxu0 0.0
  %1913 = vmatpush1.msra.mxu0 0.0
  %1914 = vmatprep.subr.mxu0 0.0
  %1915 = vmatpush1.msra.mxu0 0.0
  %1916 = vmatprep.subr.mxu0 0.0
  %1917 = vmatpush1.msra.mxu0 0.0
  %1918 = vmatprep.subr.mxu0 0.0
  %1919 = vmatpush1.msra.mxu0 0.0
  %1920 = vmatprep.subr.mxu0 0.0
  %1921 = vmatpush1.msra.mxu0 0.0
  %1922 = vmatprep.subr.mxu0 0.0
  %1923 = vmatpush1.msra.mxu0 0.0
  %1924 = vmatprep.subr.mxu0 0.0
  %1925 = vmatpush1.msra.mxu0 0.0
  %1926 = vmatprep.subr.mxu0 0.0
  %1927 = vmatpush1.msra.mxu0 0.0
  %1928 = vmatprep.subr.mxu0 0.0
  %1929 = vmatpush1.msra.mxu0 0.0
  %1930 = vmatprep.subr.mxu0 0.0
  %1931 = vmatpush1.msra.mxu0 0.0
  %1932 = vmatprep.subr.mxu0 0.0
  %1933 = vmatpush1.msra.mxu0 0.0
  %1934 = vmatprep.subr.mxu0 0.0
  %1935 = vmatpush1.msra.mxu0 0.0
  %1936 = vmatprep.subr.mxu0 0.0
  %1937 = vmatpush1.msra.mxu0 0.0
  %1938 = vmatprep.subr.mxu0 0.0
  %1939 = vmatpush1.msra.mxu0 0.0
  %1940 = vmatprep.subr.mxu0 0.0
  %1941 = vmatpush1.msra.mxu0 0.0
  %1942 = vmatprep.subr.mxu0 0.0
  %1943 = vmatpush1.msra.mxu0 0.0
  %1944 = vmatprep.subr.mxu0 0.0
  %1945 = vmatpush1.msra.mxu0 0.0
  %1946 = vmatprep.subr.mxu0 0.0
  %1947 = vmatpush1.msra.mxu0 0.0
  %1948 = vmatprep.subr.mxu0 0.0
  %1949 = vmatpush1.msra.mxu0 0.0
  %1950 = vmatprep.subr.mxu0 0.0
  %1951 = vmatpush1.msra.mxu0 0.0
  %1952 = vmatprep.subr.mxu0 0.0
  %1953 = vmatpush1.msra.mxu0 0.0
  %1954 = vmatprep.subr.mxu0 0.0
  %1955 = vmatpush1.msra.mxu0 0.0
  %1956 = vmatprep.subr.mxu0 0.0
  %1957 = vmatpush1.msra.mxu0 0.0
  %1958 = vmatprep.mubr.f32.mxu0 0.0
  %v1959 = vand.u32 %v1059, 4294901760
  %1960 = vmatmul.mubr.f32.gmra.mrb[0].mxu0 %v1959
  %v1961 = vpop.f32.mrb[0].mxu0
  %v1962 = vadd.f32 %v1879, %v1961
  %v1963 = vpop.f32.mrb[0].mxu0
  %1964 = vdwg.mxu0
  %1965 = vmatprep.subr.mxu0 0.0
  %v1966 = vand.u32 %v28, 4294901760
  %1967 = vmatpush1.msra.mxu0 %v1966
  %1968 = vmatprep.subr.mxu0 0.0
  %v1969 = vand.u32 %v29, 4294901760
  %1970 = vmatpush1.msra.mxu0 %v1969
  %1971 = vmatprep.subr.mxu0 0.0
  %v1972 = vand.u32 %v30, 4294901760
  %1973 = vmatpush1.msra.mxu0 %v1972
  %1974 = vmatprep.subr.mxu0 0.0
  %v1975 = vand.u32 %v31, 4294901760
  %1976 = vmatpush1.msra.mxu0 %v1975
  %1977 = vmatprep.subr.mxu0 0.0
  %1978 = vmatpush1.msra.mxu0 0.0
  %1979 = vmatprep.subr.mxu0 0.0
  %1980 = vmatpush1.msra.mxu0 0.0
  %1981 = vmatprep.subr.mxu0 0.0
  %1982 = vmatpush1.msra.mxu0 0.0
  %1983 = vmatprep.subr.mxu0 0.0
  %1984 = vmatpush1.msra.mxu0 0.0
  %1985 = vmatprep.subr.mxu0 0.0
  %1986 = vmatpush1.msra.mxu0 0.0
  %1987 = vmatprep.subr.mxu0 0.0
  %1988 = vmatpush1.msra.mxu0 0.0
  %1989 = vmatprep.subr.mxu0 0.0
  %1990 = vmatpush1.msra.mxu0 0.0
  %1991 = vmatprep.subr.mxu0 0.0
  %1992 = vmatpush1.msra.mxu0 0.0
  %1993 = vmatprep.subr.mxu0 0.0
  %1994 = vmatpush1.msra.mxu0 0.0
  %1995 = vmatprep.subr.mxu0 0.0
  %1996 = vmatpush1.msra.mxu0 0.0
  %1997 = vmatprep.subr.mxu0 0.0
  %1998 = vmatpush1.msra.mxu0 0.0
  %1999 = vmatprep.subr.mxu0 0.0
  %2000 = vmatpush1.msra.mxu0 0.0
  %2001 = vmatprep.subr.mxu0 0.0
  %2002 = vmatpush1.msra.mxu0 0.0
  %2003 = vmatprep.subr.mxu0 0.0
  %2004 = vmatpush1.msra.mxu0 0.0
  %2005 = vmatprep.subr.mxu0 0.0
  %2006 = vmatpush1.msra.mxu0 0.0
  %2007 = vmatprep.subr.mxu0 0.0
  %2008 = vmatpush1.msra.mxu0 0.0
  %2009 = vmatprep.subr.mxu0 0.0
  %2010 = vmatpush1.msra.mxu0 0.0
  %2011 = vmatprep.subr.mxu0 0.0
  %2012 = vmatpush1.msra.mxu0 0.0
  %2013 = vmatprep.subr.mxu0 0.0
  %2014 = vmatpush1.msra.mxu0 0.0
  %2015 = vmatprep.subr.mxu0 0.0
  %2016 = vmatpush1.msra.mxu0 0.0
  %2017 = vmatprep.subr.mxu0 0.0
  %2018 = vmatpush1.msra.mxu0 0.0
  %2019 = vmatprep.subr.mxu0 0.0
  %2020 = vmatpush1.msra.mxu0 0.0
  %2021 = vmatprep.subr.mxu0 0.0
  %2022 = vmatpush1.msra.mxu0 0.0
  %2023 = vmatprep.subr.mxu0 0.0
  %2024 = vmatpush1.msra.mxu0 0.0
  %2025 = vmatprep.subr.mxu0 0.0
  %2026 = vmatpush1.msra.mxu0 0.0
  %2027 = vmatprep.subr.mxu0 0.0
  %2028 = vmatpush1.msra.mxu0 0.0
  %2029 = vmatprep.subr.mxu0 0.0
  %2030 = vmatpush1.msra.mxu0 0.0
  %2031 = vmatprep.subr.mxu0 0.0
  %2032 = vmatpush1.msra.mxu0 0.0
  %2033 = vmatprep.mubr.f32.mxu0 0.0
  %v2034 = vand.u32 %v1059, 4294901760
  %2035 = vmatmul.mubr.f32.gmra.mrb[0].mxu0 %v2034
  %v2036 = vpop.f32.mrb[0].mxu0
  %v2037 = vadd.f32 %v1962, %v2036
  %v2038 = vpop.f32.mrb[0].mxu0
  %2039 = vdwg.mxu0
  %v2040 = vmul.f32 %v2037, 1.442695
  %v2041 = vpow.pop %v2040
  %v2042 = vsel %vm50, 0.0, %v2041
  %v2043 = vsel %vm541, %v2042, 0.0
  %2044 = vadd.xlane.f32.xlu0 %v2043
  %v2045 = vpop.xlane.xlu0 %2044
  %v2046 = vadd.f32 %v1550, %v2045
  %v2047 = vmul.f32 %v2042, %v2037
  %v2048 = vsel %vm541, %v2047, 0.0
  %2049 = vadd.xlane.f32.xlu0 %v2048
  %v2050 = vpop.xlane.xlu0 %2049
  %v2051 = vadd.f32 %v1554, %v2050
  %v2052 = vsub.f32 %v2046, %v40
  %v2053 = vmul.f32 %v2051, 0.1
  %v2054 = vsub.f32 %v2053, %v1048
  %v2055 = vmul.f32 %v2052, 0.8
  %v2056 = vmul.f32 %v2055, %v1052
  %v2057 = vadd.f32 %v1050, %v2056
  %v2058 = vmul.f32 %v2057, 14.0
  %v2059 = vrcp.pop %v2058
  %v2060 = vmul.f32 %v2054, %v2059
  %v2061 = vadd.f32 %v1054, %v2057
  %vm2062 = vcmask 7168
  %2063 = vst.msk [vmem:[%s5] sm:$0xff] %vm2062, %v2061
  %v2064 = vsub.f32 %v1057, %v37
  %v2065 = vsub.f32 %v2060, %v37
  %v2066 = vadd.f32 %v2064, %v2065
  %2067 = vst.msk [vmem:[%s6] sm:$0xff] %vm2062, %v2066
  // Predicated region
  $region22: #{tpu_custom_call.1} parent=0 // pred_check
    _
  $region23: #{tpu_custom_call.1} parent=0 // pred_check_branch
    %2069 = sbr.rel (0) target = $region25
  $region24: #{tpu_custom_call.1} parent=0 // pred_region
    _
  $region25: #{tpu_custom_call.1} parent=0 // pred_fallthru
    _
  // Predicated region
  $region26: #{tpu_custom_call.1} parent=0 // pred_check
    _
  $region27: #{tpu_custom_call.1} parent=0 // pred_check_branch
    %2071 = sbr.rel (0) target = $region29
  $region28: #{tpu_custom_call.1} parent=0 // pred_region
    _
  $region29: #{tpu_custom_call.1} parent=0 // pred_fallthru
    _
  // Predicated region
  $region30: #{tpu_custom_call.1} parent=0 // pred_check
    _
  $region31: #{tpu_custom_call.1} parent=0 // pred_check_branch
    %2073 = sbr.rel (0) target = $region33
  $region32: #{tpu_custom_call.1} parent=0 // pred_region
    _
  $region33: #{tpu_custom_call.1} parent=0 // pred_fallthru
    _
  // Predicated region
  $region34: #{tpu_custom_call.1} parent=0 // pred_check
    _
  $region35: #{tpu_custom_call.1} parent=0 // pred_check_branch
    %2075 = sbr.rel (0) target = $region37
  $region36: #{tpu_custom_call.1} parent=0 // pred_region
    _
  $region37: #{tpu_custom_call.1} parent=0 // pred_fallthru
    _

// kernel: tpu_custom_call.1
$region0: #{tpu_custom_call.1}
  #allocation0 [shape = 'u32[]', space=smem, size = 0x4, offset = 0x4, fixed_abs, tag = 'smem constant byte address 0x4 - core index']
  #allocation1 [shape = 'u32[144,128]{1,0:T(1,128)}', space=vmem, size = 0x12000, scoped, tag = 'internal scratch']
  %s0 = inlined_call_operand.vmem [shape: f32[8,32], index: 0, kind: input, shape index: {}]
  %s1 = inlined_call_operand.vmem [shape: f32[8,32], index: 1, kind: input, shape index: {}]
  %s2 = inlined_call_operand.vmem [shape: f32[32,8], index: 2, kind: input, shape index: {}]
  %s3 = inlined_call_operand.vmem [shape: f32[32,8], index: 3, kind: input, shape index: {}]
  %s4 = inlined_call_operand.vmem [shape: f32[8,1], index: 4, kind: input, shape index: {}]
  %s5 = inlined_call_operand.vmem [shape: f32[8,1], index: 5, kind: output, shape index: {0}]
  %s6 = inlined_call_operand.vmem [shape: f32[8,1], index: 6, kind: output, shape index: {1}]
  %7 = xla_tuple %s5, %s6
  %s8 = sld [smem:[#allocation0]]
  $region38: #{tpu_custom_call.1} parent=0
    _
  %s10 = ssub.s32 1, %s8
  %s11 = scalar_select 0, %s10, %s8
  // Predicated region
  $region2: #{tpu_custom_call.1} parent=0 // pred_check
    _
  $region3: #{tpu_custom_call.1} parent=0 // pred_check_branch
    %13 = sbr.rel (0) target = $region5
  $region4: #{tpu_custom_call.1} parent=0 // pred_region
    _
  $region5: #{tpu_custom_call.1} parent=0 // pred_fallthru
    _
  // Predicated region
  $region6: #{tpu_custom_call.1} parent=0 // pred_check
    _
  $region7: #{tpu_custom_call.1} parent=0 // pred_check_branch
    %15 = sbr.rel (0) target = $region9
  $region8: #{tpu_custom_call.1} parent=0 // pred_region
    _
  $region9: #{tpu_custom_call.1} parent=0 // pred_fallthru
    _
  // Predicated region
  $region10: #{tpu_custom_call.1} parent=0 // pred_check
    _
  $region11: #{tpu_custom_call.1} parent=0 // pred_check_branch
    %17 = sbr.rel (0) target = $region13
  $region12: #{tpu_custom_call.1} parent=0 // pred_region
    _
  $region13: #{tpu_custom_call.1} parent=0 // pred_fallthru
    _
  // Predicated region
  $region14: #{tpu_custom_call.1} parent=0 // pred_check
    _
  $region15: #{tpu_custom_call.1} parent=0 // pred_check_branch
    %19 = sbr.rel (0) target = $region17
  $region16: #{tpu_custom_call.1} parent=0 // pred_region
    _
  $region17: #{tpu_custom_call.1} parent=0 // pred_fallthru
    _
  // Predicated region
  $region18: #{tpu_custom_call.1} parent=0 // pred_check
    _
  $region19: #{tpu_custom_call.1} parent=0 // pred_check_branch
    %21 = sbr.rel (0) target = $region21
  $region20: #{tpu_custom_call.1} parent=0 // pred_region
    _
  $region21: #{tpu_custom_call.1} parent=0 // pred_fallthru
    _
  %v22 = vld [vmem:[%s0] sm:$0xff]
  %v23 = vld [vmem:[%s1] sm:$0xff]
  %v24 = vld [vmem:[%s2] sm:$0xff]
  %v25 = vld [vmem:[%s2 + $0x8] sm:$0xff]
  %v26 = vld [vmem:[%s2 + $0x10] sm:$0xff]
  %v27 = vld [vmem:[%s2 + $0x18] sm:$0xff]
  %v28 = vld [vmem:[%s3] sm:$0xff]
  %v29 = vld [vmem:[%s3 + $0x8] sm:$0xff]
  %v30 = vld [vmem:[%s3 + $0x10] sm:$0xff]
  %v31 = vld [vmem:[%s3 + $0x18] sm:$0xff]
  %v32 = vld [vmem:[%s4] sm:$0xff]
  %v33 = vmul.f32 %v22, %v23
  %vm34 = vcmask 261120
  %v35 = vsel %vm34, %v33, 0.0
  %36 = vadd.xlane.f32.xlu0 %v35
  %v37 = vpop.xlane.xlu0 %36
  %v38 = vmul.f32 %v37, 10.0
  %v39 = vmul.f32 %v38, 1.442695
  %v40 = vpow.pop %v39
  %v41 = vmul.f32 %v22, 10.0
  %v42 = vmul.f32 %v23, 10.0
  %s43 = smul.u32 0, 8
  %v44 = vlaneseq
  %v45 = vand.u32 %v44, 127
  %v46 = vlaneseq
  %v47 = vshrl.u32 %v46, 7
  %v48 = vstv %s43
  %v49 = vadd.s32 %v47, %v48
  %vm50 = vcmp.eq.s32.totalorder %v45, %v49
  %v52 = vsel %vm34, %v41, 0
  %54 = vmatprep.subr.mxu0 0.0
  %v55 = vand.u32 %v28, 4294901760
  %56 = vmatpush1.msra.mxu0 %v55
  %57 = vmatprep.subr.mxu0 0.0
  %v58 = vand.u32 %v29, 4294901760
  %59 = vmatpush1.msra.mxu0 %v58
  %60 = vmatprep.subr.mxu0 0.0
  %v61 = vand.u32 %v30, 4294901760
  %62 = vmatpush1.msra.mxu0 %v61
  %63 = vmatprep.subr.mxu0 0.0
  %v64 = vand.u32 %v31, 4294901760
  %65 = vmatpush1.msra.mxu0 %v64
  %66 = vmatprep.subr.mxu0 0.0
  %67 = vmatpush1.msra.mxu0 0.0
  %68 = vmatprep.subr.mxu0 0.0
  %69 = vmatpush1.msra.mxu0 0.0
  %70 = vmatprep.subr.mxu0 0.0
  %71 = vmatpush1.msra.mxu0 0.0
  %72 = vmatprep.subr.mxu0 0.0
  %73 = vmatpush1.msra.mxu0 0.0
  %74 = vmatprep.subr.mxu0 0.0
  %75 = vmatpush1.msra.mxu0 0.0
  %76 = vmatprep.subr.mxu0 0.0
  %77 = vmatpush1.msra.mxu0 0.0
  %78 = vmatprep.subr.mxu0 0.0
  %79 = vmatpush1.msra.mxu0 0.0
  %80 = vmatprep.subr.mxu0 0.0
  %81 = vmatpush1.msra.mxu0 0.0
  %82 = vmatprep.subr.mxu0 0.0
  %83 = vmatpush1.msra.mxu0 0.0
  %84 = vmatprep.subr.mxu0 0.0
  %85 = vmatpush1.msra.mxu0 0.0
  %86 = vmatprep.subr.mxu0 0.0
  %87 = vmatpush1.msra.mxu0 0.0
  %88 = vmatprep.subr.mxu0 0.0
  %89 = vmatpush1.msra.mxu0 0.0
  %90 = vmatprep.subr.mxu0 0.0
  %91 = vmatpush1.msra.mxu0 0.0
  %92 = vmatprep.subr.mxu0 0.0
  %93 = vmatpush1.msra.mxu0 0.0
  %94 = vmatprep.subr.mxu0 0.0
  %95 = vmatpush1.msra.mxu0 0.0
  %96 = vmatprep.subr.mxu0 0.0
  %97 = vmatpush1.msra.mxu0 0.0
  %98 = vmatprep.subr.mxu0 0.0
  %99 = vmatpush1.msra.mxu0 0.0
  %100 = vmatprep.subr.mxu0 0.0
  %101 = vmatpush1.msra.mxu0 0.0
  %102 = vmatprep.subr.mxu0 0.0
  %103 = vmatpush1.msra.mxu0 0.0
  %104 = vmatprep.subr.mxu0 0.0
  %105 = vmatpush1.msra.mxu0 0.0
  %106 = vmatprep.subr.mxu0 0.0
  %107 = vmatpush1.msra.mxu0 0.0
  %108 = vmatprep.subr.mxu0 0.0
  %109 = vmatpush1.msra.mxu0 0.0
  %110 = vmatprep.subr.mxu0 0.0
  %111 = vmatpush1.msra.mxu0 0.0
  %112 = vmatprep.subr.mxu0 0.0
  %113 = vmatpush1.msra.mxu0 0.0
  %114 = vmatprep.subr.mxu0 0.0
  %115 = vmatpush1.msra.mxu0 0.0
  %116 = vmatprep.subr.mxu0 0.0
  %117 = vmatpush1.msra.mxu0 0.0
  %118 = vmatprep.subr.mxu0 0.0
  %119 = vmatpush1.msra.mxu0 0.0
  %120 = vmatprep.subr.mxu0 0.0
  %121 = vmatpush1.msra.mxu0 0.0
  %122 = vmatprep.mubr.f32.mxu0 0.0
  %v123 = vand.u32 %v52, 4294901760
  %v124 = vsub.f32 %v52, %v123
  %v125 = vand.u32 %v124, 4294901760
  %v126 = vsub.f32 %v124, %v125
  %v127 = vand.u32 %v126, 4294901760
  %128 = vmatmul.mubr.f32.gmra.mrb[0].mxu0 %v127
  %v129 = vpop.f32.mrb[0].mxu0
  %v130 = vadd.f32 0.0, %v129
  %v131 = vpop.f32.mrb[0].mxu0
  %132 = vdwg.mxu0
  %133 = vmatprep.subr.mxu0 0.0
  %v134 = vand.u32 %v28, 4294901760
  %v135 = vsub.f32 %v28, %v134
  %v136 = vand.u32 %v135, 4294901760
  %v137 = vsub.f32 %v135, %v136
  %v138 = vand.u32 %v137, 4294901760
  %139 = vmatpush1.msra.mxu0 %v138
  %140 = vmatprep.subr.mxu0 0.0
  %v141 = vand.u32 %v29, 4294901760
  %v142 = vsub.f32 %v29, %v141
  %v143 = vand.u32 %v142, 4294901760
  %v144 = vsub.f32 %v142, %v143
  %v145 = vand.u32 %v144, 4294901760
  %146 = vmatpush1.msra.mxu0 %v145
  %147 = vmatprep.subr.mxu0 0.0
  %v148 = vand.u32 %v30, 4294901760
  %v149 = vsub.f32 %v30, %v148
  %v150 = vand.u32 %v149, 4294901760
  %v151 = vsub.f32 %v149, %v150
  %v152 = vand.u32 %v151, 4294901760
  %153 = vmatpush1.msra.mxu0 %v152
  %154 = vmatprep.subr.mxu0 0.0
  %v155 = vand.u32 %v31, 4294901760
  %v156 = vsub.f32 %v31, %v155
  %v157 = vand.u32 %v156, 4294901760
  %v158 = vsub.f32 %v156, %v157
  %v159 = vand.u32 %v158, 4294901760
  %160 = vmatpush1.msra.mxu0 %v159
  %161 = vmatprep.subr.mxu0 0.0
  %162 = vmatpush1.msra.mxu0 0.0
  %163 = vmatprep.subr.mxu0 0.0
  %164 = vmatpush1.msra.mxu0 0.0
  %165 = vmatprep.subr.mxu0 0.0
  %166 = vmatpush1.msra.mxu0 0.0
  %167 = vmatprep.subr.mxu0 0.0
  %168 = vmatpush1.msra.mxu0 0.0
  %169 = vmatprep.subr.mxu0 0.0
  %170 = vmatpush1.msra.mxu0 0.0
  %171 = vmatprep.subr.mxu0 0.0
  %172 = vmatpush1.msra.mxu0 0.0
  %173 = vmatprep.subr.mxu0 0.0
  %174 = vmatpush1.msra.mxu0 0.0
  %175 = vmatprep.subr.mxu0 0.0
  %176 = vmatpush1.msra.mxu0 0.0
  %177 = vmatprep.subr.mxu0 0.0
  %178 = vmatpush1.msra.mxu0 0.0
  %179 = vmatprep.subr.mxu0 0.0
  %180 = vmatpush1.msra.mxu0 0.0
  %181 = vmatprep.subr.mxu0 0.0
  %182 = vmatpush1.msra.mxu0 0.0
  %183 = vmatprep.subr.mxu0 0.0
  %184 = vmatpush1.msra.mxu0 0.0
  %185 = vmatprep.subr.mxu0 0.0
  %186 = vmatpush1.msra.mxu0 0.0
  %187 = vmatprep.subr.mxu0 0.0
  %188 = vmatpush1.msra.mxu0 0.0
  %189 = vmatprep.subr.mxu0 0.0
  %190 = vmatpush1.msra.mxu0 0.0
  %191 = vmatprep.subr.mxu0 0.0
  %192 = vmatpush1.msra.mxu0 0.0
  %193 = vmatprep.subr.mxu0 0.0
  %194 = vmatpush1.msra.mxu0 0.0
  %195 = vmatprep.subr.mxu0 0.0
  %196 = vmatpush1.msra.mxu0 0.0
  %197 = vmatprep.subr.mxu0 0.0
  %198 = vmatpush1.msra.mxu0 0.0
  %199 = vmatprep.subr.mxu0 0.0
  %200 = vmatpush1.msra.mxu0 0.0
  %201 = vmatprep.subr.mxu0 0.0
  %202 = vmatpush1.msra.mxu0 0.0
  %203 = vmatprep.subr.mxu0 0.0
  %204 = vmatpush1.msra.mxu0 0.0
  %205 = vmatprep.subr.mxu0 0.0
  %206 = vmatpush1.msra.mxu0 0.0
  %207 = vmatprep.subr.mxu0 0.0
  %208 = vmatpush1.msra.mxu0 0.0
  %209 = vmatprep.subr.mxu0 0.0
  %210 = vmatpush1.msra.mxu0 0.0
  %211 = vmatprep.subr.mxu0 0.0
  %212 = vmatpush1.msra.mxu0 0.0
  %213 = vmatprep.subr.mxu0 0.0
  %214 = vmatpush1.msra.mxu0 0.0
  %215 = vmatprep.subr.mxu0 0.0
  %216 = vmatpush1.msra.mxu0 0.0
  %217 = vmatprep.mubr.f32.mxu0 0.0
  %v218 = vand.u32 %v52, 4294901760
  %219 = vmatmul.mubr.f32.gmra.mrb[0].mxu0 %v218
  %v220 = vpop.f32.mrb[0].mxu0
  %v221 = vadd.f32 %v130, %v220
  %v222 = vpop.f32.mrb[0].mxu0
  %223 = vdwg.mxu0
  %224 = vmatprep.subr.mxu0 0.0
  %v225 = vand.u32 %v28, 4294901760
  %v226 = vsub.f32 %v28, %v225
  %227 = vmatpush1.msra.mxu0 %v226
  %228 = vmatprep.subr.mxu0 0.0
  %v229 = vand.u32 %v29, 4294901760
  %v230 = vsub.f32 %v29, %v229
  %231 = vmatpush1.msra.mxu0 %v230
  %232 = vmatprep.subr.mxu0 0.0
  %v233 = vand.u32 %v30, 4294901760
  %v234 = vsub.f32 %v30, %v233
  %235 = vmatpush1.msra.mxu0 %v234
  %236 = vmatprep.subr.mxu0 0.0
  %v237 = vand.u32 %v31, 4294901760
  %v238 = vsub.f32 %v31, %v237
  %239 = vmatpush1.msra.mxu0 %v238
  %240 = vmatprep.subr.mxu0 0.0
  %241 = vmatpush1.msra.mxu0 0.0
  %242 = vmatprep.subr.mxu0 0.0
  %243 = vmatpush1.msra.mxu0 0.0
  %244 = vmatprep.subr.mxu0 0.0
  %245 = vmatpush1.msra.mxu0 0.0
  %246 = vmatprep.subr.mxu0 0.0
  %247 = vmatpush1.msra.mxu0 0.0
  %248 = vmatprep.subr.mxu0 0.0
  %249 = vmatpush1.msra.mxu0 0.0
  %250 = vmatprep.subr.mxu0 0.0
  %251 = vmatpush1.msra.mxu0 0.0
  %252 = vmatprep.subr.mxu0 0.0
  %253 = vmatpush1.msra.mxu0 0.0
  %254 = vmatprep.subr.mxu0 0.0
  %255 = vmatpush1.msra.mxu0 0.0
  %256 = vmatprep.subr.mxu0 0.0
  %257 = vmatpush1.msra.mxu0 0.0
  %258 = vmatprep.subr.mxu0 0.0
  %259 = vmatpush1.msra.mxu0 0.0
  %260 = vmatprep.subr.mxu0 0.0
  %261 = vmatpush1.msra.mxu0 0.0
  %262 = vmatprep.subr.mxu0 0.0
  %263 = vmatpush1.msra.mxu0 0.0
  %264 = vmatprep.subr.mxu0 0.0
  %265 = vmatpush1.msra.mxu0 0.0
  %266 = vmatprep.subr.mxu0 0.0
  %267 = vmatpush1.msra.mxu0 0.0
  %268 = vmatprep.subr.mxu0 0.0
  %269 = vmatpush1.msra.mxu0 0.0
  %270 = vmatprep.subr.mxu0 0.0
  %271 = vmatpush1.msra.mxu0 0.0
  %272 = vmatprep.subr.mxu0 0.0
  %273 = vmatpush1.msra.mxu0 0.0
  %274 = vmatprep.subr.mxu0 0.0
  %275 = vmatpush1.msra.mxu0 0.0
  %276 = vmatprep.subr.mxu0 0.0
  %277 = vmatpush1.msra.mxu0 0.0
  %278 = vmatprep.subr.mxu0 0.0
  %279 = vmatpush1.msra.mxu0 0.0
  %280 = vmatprep.subr.mxu0 0.0
  %281 = vmatpush1.msra.mxu0 0.0
  %282 = vmatprep.subr.mxu0 0.0
  %283 = vmatpush1.msra.mxu0 0.0
  %284 = vmatprep.subr.mxu0 0.0
  %285 = vmatpush1.msra.mxu0 0.0
  %286 = vmatprep.subr.mxu0 0.0
  %287 = vmatpush1.msra.mxu0 0.0
  %288 = vmatprep.subr.mxu0 0.0
  %289 = vmatpush1.msra.mxu0 0.0
  %290 = vmatprep.subr.mxu0 0.0
  %291 = vmatpush1.msra.mxu0 0.0
  %292 = vmatprep.subr.mxu0 0.0
  %293 = vmatpush1.msra.mxu0 0.0
  %294 = vmatprep.subr.mxu0 0.0
  %295 = vmatpush1.msra.mxu0 0.0
  %296 = vmatprep.mubr.f32.mxu0 0.0
  %v297 = vand.u32 %v52, 4294901760
  %v298 = vsub.f32 %v52, %v297
  %299 = vmatmul.mubr.f32.gmra.mrb[0].mxu0 %v298
  %v300 = vpop.f32.mrb[0].mxu0
  %v301 = vadd.f32 %v221, %v300
  %v302 = vpop.f32.mrb[0].mxu0
  %303 = vdwg.mxu0
  %304 = vmatprep.subr.mxu0 0.0
  %v305 = vand.u32 %v28, 4294901760
  %306 = vmatpush1.msra.mxu0 %v305
  %307 = vmatprep.subr.mxu0 0.0
  %v308 = vand.u32 %v29, 4294901760
  %309 = vmatpush1.msra.mxu0 %v308
  %310 = vmatprep.subr.mxu0 0.0
  %v311 = vand.u32 %v30, 4294901760
  %312 = vmatpush1.msra.mxu0 %v311
  %313 = vmatprep.subr.mxu0 0.0
  %v314 = vand.u32 %v31, 4294901760
  %315 = vmatpush1.msra.mxu0 %v314
  %316 = vmatprep.subr.mxu0 0.0
  %317 = vmatpush1.msra.mxu0 0.0
  %318 = vmatprep.subr.mxu0 0.0
  %319 = vmatpush1.msra.mxu0 0.0
  %320 = vmatprep.subr.mxu0 0.0
  %321 = vmatpush1.msra.mxu0 0.0
  %322 = vmatprep.subr.mxu0 0.0
  %323 = vmatpush1.msra.mxu0 0.0
  %324 = vmatprep.subr.mxu0 0.0
  %325 = vmatpush1.msra.mxu0 0.0
  %326 = vmatprep.subr.mxu0 0.0
  %327 = vmatpush1.msra.mxu0 0.0
  %328 = vmatprep.subr.mxu0 0.0
  %329 = vmatpush1.msra.mxu0 0.0
  %330 = vmatprep.subr.mxu0 0.0
  %331 = vmatpush1.msra.mxu0 0.0
  %332 = vmatprep.subr.mxu0 0.0
  %333 = vmatpush1.msra.mxu0 0.0
  %334 = vmatprep.subr.mxu0 0.0
  %335 = vmatpush1.msra.mxu0 0.0
  %336 = vmatprep.subr.mxu0 0.0
  %337 = vmatpush1.msra.mxu0 0.0
  %338 = vmatprep.subr.mxu0 0.0
  %339 = vmatpush1.msra.mxu0 0.0
  %340 = vmatprep.subr.mxu0 0.0
  %341 = vmatpush1.msra.mxu0 0.0
  %342 = vmatprep.subr.mxu0 0.0
  %343 = vmatpush1.msra.mxu0 0.0
  %344 = vmatprep.subr.mxu0 0.0
  %345 = vmatpush1.msra.mxu0 0.0
  %346 = vmatprep.subr.mxu0 0.0
  %347 = vmatpush1.msra.mxu0 0.0
  %348 = vmatprep.subr.mxu0 0.0
  %349 = vmatpush1.msra.mxu0 0.0
  %350 = vmatprep.subr.mxu0 0.0
  %351 = vmatpush1.msra.mxu0 0.0
  %352 = vmatprep.subr.mxu0 0.0
  %353 = vmatpush1.msra.mxu0 0.0
  %354 = vmatprep.subr.mxu0 0.0
  %355 = vmatpush1.msra.mxu0 0.0
  %356 = vmatprep.subr.mxu0 0.0
  %357 = vmatpush1.msra.mxu0 0.0
  %358 = vmatprep.subr.mxu0 0.0
  %359 = vmatpush1.msra.mxu0 0.0
  %360 = vmatprep.subr.mxu0 0.0
  %361 = vmatpush1.msra.mxu0 0.0
  %362 = vmatprep.subr.mxu0 0.0
  %363 = vmatpush1.msra.mxu0 0.0
  %364 = vmatprep.subr.mxu0 0.0
  %365 = vmatpush1.msra.mxu0 0.0
  %366 = vmatprep.subr.mxu0 0.0
  %367 = vmatpush1.msra.mxu0 0.0
  %368 = vmatprep.subr.mxu0 0.0
  %369 = vmatpush1.msra.mxu0 0.0
  %370 = vmatprep.subr.mxu0 0.0
  %371 = vmatpush1.msra.mxu0 0.0
  %372 = vmatprep.mubr.f32.mxu0 0.0
  %v373 = vand.u32 %v52, 4294901760
  %v374 = vsub.f32 %v52, %v373
  %v375 = vand.u32 %v374, 4294901760
  %376 = vmatmul.mubr.f32.gmra.mrb[0].mxu0 %v375
  %v377 = vpop.f32.mrb[0].mxu0
  %v378 = vadd.f32 %v301, %v377
  %v379 = vpop.f32.mrb[0].mxu0
  %380 = vdwg.mxu0
  %381 = vmatprep.subr.mxu0 0.0
  %v382 = vand.u32 %v28, 4294901760
  %v383 = vsub.f32 %v28, %v382
  %v384 = vand.u32 %v383, 4294901760
  %385 = vmatpush1.msra.mxu0 %v384
  %386 = vmatprep.subr.mxu0 0.0
  %v387 = vand.u32 %v29, 4294901760
  %v388 = vsub.f32 %v29, %v387
  %v389 = vand.u32 %v388, 4294901760
  %390 = vmatpush1.msra.mxu0 %v389
  %391 = vmatprep.subr.mxu0 0.0
  %v392 = vand.u32 %v30, 4294901760
  %v393 = vsub.f32 %v30, %v392
  %v394 = vand.u32 %v393, 4294901760
  %395 = vmatpush1.msra.mxu0 %v394
  %396 = vmatprep.subr.mxu0 0.0
  %v397 = vand.u32 %v31, 4294901760
  %v398 = vsub.f32 %v31, %v397
  %v399 = vand.u32 %v398, 4294901760
  %400 = vmatpush1.msra.mxu0 %v399
  %401 = vmatprep.subr.mxu0 0.0
  %402 = vmatpush1.msra.mxu0 0.0
  %403 = vmatprep.subr.mxu0 0.0
  %404 = vmatpush1.msra.mxu0 0.0
  %405 = vmatprep.subr.mxu0 0.0
  %406 = vmatpush1.msra.mxu0 0.0
  %407 = vmatprep.subr.mxu0 0.0
  %408 = vmatpush1.msra.mxu0 0.0
  %409 = vmatprep.subr.mxu0 0.0
  %410 = vmatpush1.msra.mxu0 0.0
  %411 = vmatprep.subr.mxu0 0.0
  %412 = vmatpush1.msra.mxu0 0.0
  %413 = vmatprep.subr.mxu0 0.0
  %414 = vmatpush1.msra.mxu0 0.0
  %415 = vmatprep.subr.mxu0 0.0
  %416 = vmatpush1.msra.mxu0 0.0
  %417 = vmatprep.subr.mxu0 0.0
  %418 = vmatpush1.msra.mxu0 0.0
  %419 = vmatprep.subr.mxu0 0.0
  %420 = vmatpush1.msra.mxu0 0.0
  %421 = vmatprep.subr.mxu0 0.0
  %422 = vmatpush1.msra.mxu0 0.0
  %423 = vmatprep.subr.mxu0 0.0
  %424 = vmatpush1.msra.mxu0 0.0
  %425 = vmatprep.subr.mxu0 0.0
  %426 = vmatpush1.msra.mxu0 0.0
  %427 = vmatprep.subr.mxu0 0.0
  %428 = vmatpush1.msra.mxu0 0.0
  %429 = vmatprep.subr.mxu0 0.0
  %430 = vmatpush1.msra.mxu0 0.0
  %431 = vmatprep.subr.mxu0 0.0
  %432 = vmatpush1.msra.mxu0 0.0
  %433 = vmatprep.subr.mxu0 0.0
  %434 = vmatpush1.msra.mxu0 0.0
  %435 = vmatprep.subr.mxu0 0.0
  %436 = vmatpush1.msra.mxu0 0.0
  %437 = vmatprep.subr.mxu0 0.0
  %438 = vmatpush1.msra.mxu0 0.0
  %439 = vmatprep.subr.mxu0 0.0
  %440 = vmatpush1.msra.mxu0 0.0
  %441 = vmatprep.subr.mxu0 0.0
  %442 = vmatpush1.msra.mxu0 0.0
  %443 = vmatprep.subr.mxu0 0.0
  %444 = vmatpush1.msra.mxu0 0.0
  %445 = vmatprep.subr.mxu0 0.0
  %446 = vmatpush1.msra.mxu0 0.0
  %447 = vmatprep.subr.mxu0 0.0
  %448 = vmatpush1.msra.mxu0 0.0
  %449 = vmatprep.subr.mxu0 0.0
  %450 = vmatpush1.msra.mxu0 0.0
  %451 = vmatprep.subr.mxu0 0.0
  %452 = vmatpush1.msra.mxu0 0.0
  %453 = vmatprep.subr.mxu0 0.0
  %454 = vmatpush1.msra.mxu0 0.0
  %455 = vmatprep.subr.mxu0 0.0
  %456 = vmatpush1.msra.mxu0 0.0
  %457 = vmatprep.mubr.f32.mxu0 0.0
  %v458 = vand.u32 %v52, 4294901760
  %459 = vmatmul.mubr.f32.gmra.mrb[0].mxu0 %v458
  %v460 = vpop.f32.mrb[0].mxu0
  %v461 = vadd.f32 %v378, %v460
  %v462 = vpop.f32.mrb[0].mxu0
  %463 = vdwg.mxu0
  %464 = vmatprep.subr.mxu0 0.0
  %v465 = vand.u32 %v28, 4294901760
  %466 = vmatpush1.msra.mxu0 %v465
  %467 = vmatprep.subr.mxu0 0.0
  %v468 = vand.u32 %v29, 4294901760
  %469 = vmatpush1.msra.mxu0 %v468
  %470 = vmatprep.subr.mxu0 0.0
  %v471 = vand.u32 %v30, 4294901760
  %472 = vmatpush1.msra.mxu0 %v471
  %473 = vmatprep.subr.mxu0 0.0
  %v474 = vand.u32 %v31, 4294901760
  %475 = vmatpush1.msra.mxu0 %v474
  %476 = vmatprep.subr.mxu0 0.0
  %477 = vmatpush1.msra.mxu0 0.0
  %478 = vmatprep.subr.mxu0 0.0
  %479 = vmatpush1.msra.mxu0 0.0
  %480 = vmatprep.subr.mxu0 0.0
  %481 = vmatpush1.msra.mxu0 0.0
  %482 = vmatprep.subr.mxu0 0.0
  %483 = vmatpush1.msra.mxu0 0.0
  %484 = vmatprep.subr.mxu0 0.0
  %485 = vmatpush1.msra.mxu0 0.0
  %486 = vmatprep.subr.mxu0 0.0
  %487 = vmatpush1.msra.mxu0 0.0
  %488 = vmatprep.subr.mxu0 0.0
  %489 = vmatpush1.msra.mxu0 0.0
  %490 = vmatprep.subr.mxu0 0.0
  %491 = vmatpush1.msra.mxu0 0.0
  %492 = vmatprep.subr.mxu0 0.0
  %493 = vmatpush1.msra.mxu0 0.0
  %494 = vmatprep.subr.mxu0 0.0
  %495 = vmatpush1.msra.mxu0 0.0
  %496 = vmatprep.subr.mxu0 0.0
  %497 = vmatpush1.msra.mxu0 0.0
  %498 = vmatprep.subr.mxu0 0.0
  %499 = vmatpush1.msra.mxu0 0.0
  %500 = vmatprep.subr.mxu0 0.0
  %501 = vmatpush1.msra.mxu0 0.0
  %502 = vmatprep.subr.mxu0 0.0
  %503 = vmatpush1.msra.mxu0 0.0
  %504 = vmatprep.subr.mxu0 0.0
  %505 = vmatpush1.msra.mxu0 0.0
  %506 = vmatprep.subr.mxu0 0.0
  %507 = vmatpush1.msra.mxu0 0.0
  %508 = vmatprep.subr.mxu0 0.0
  %509 = vmatpush1.msra.mxu0 0.0
  %510 = vmatprep.subr.mxu0 0.0
  %511 = vmatpush1.msra.mxu0 0.0
  %512 = vmatprep.subr.mxu0 0.0
  %513 = vmatpush1.msra.mxu0 0.0
  %514 = vmatprep.subr.mxu0 0.0
  %515 = vmatpush1.msra.mxu0 0.0
  %516 = vmatprep.subr.mxu0 0.0
  %517 = vmatpush1.msra.mxu0 0.0
  %518 = vmatprep.subr.mxu0 0.0
  %519 = vmatpush1.msra.mxu0 0.0
  %520 = vmatprep.subr.mxu0 0.0
  %521 = vmatpush1.msra.mxu0 0.0
  %522 = vmatprep.subr.mxu0 0.0
  %523 = vmatpush1.msra.mxu0 0.0
  %524 = vmatprep.subr.mxu0 0.0
  %525 = vmatpush1.msra.mxu0 0.0
  %526 = vmatprep.subr.mxu0 0.0
  %527 = vmatpush1.msra.mxu0 0.0
  %528 = vmatprep.subr.mxu0 0.0
  %529 = vmatpush1.msra.mxu0 0.0
  %530 = vmatprep.subr.mxu0 0.0
  %531 = vmatpush1.msra.mxu0 0.0
  %532 = vmatprep.mubr.f32.mxu0 0.0
  %v533 = vand.u32 %v52, 4294901760
  %534 = vmatmul.mubr.f32.gmra.mrb[0].mxu0 %v533
  %v535 = vpop.f32.mrb[0].mxu0
  %v536 = vadd.f32 %v461, %v535
  %v537 = vpop.f32.mrb[0].mxu0
  %538 = vdwg.mxu0
  %v539 = vmul.f32 %v536, 1.442695
  %v540 = vpow.pop %v539
  %vm541 = vcmask 64512
  %v542 = vsel %vm541, %v540, 0.0
  %543 = vadd.xlane.f32.xlu0 %v542
  %v544 = vpop.xlane.xlu0 %543
  %v545 = vmul.f32 %v540, %v536
  %v546 = vsel %vm541, %v545, 0.0
  %547 = vadd.xlane.f32.xlu0 %v546
  %v548 = vpop.xlane.xlu0 %547
  %549 = vmatprep.subr.mxu0 0.0
  %v550 = vand.u32 %v24, 4294901760
  %551 = vmatpush1.msra.mxu0 %v550
  %552 = vmatprep.subr.mxu0 0.0
  %v553 = vand.u32 %v25, 4294901760
  %554 = vmatpush1.msra.mxu0 %v553
  %555 = vmatprep.subr.mxu0 0.0
  %v556 = vand.u32 %v26, 4294901760
  %557 = vmatpush1.msra.mxu0 %v556
  %558 = vmatprep.subr.mxu0 0.0
  %v559 = vand.u32 %v27, 4294901760
  %560 = vmatpush1.msra.mxu0 %v559
  %561 = vmatprep.subr.mxu0 0.0
  %562 = vmatpush1.msra.mxu0 0.0
  %563 = vmatprep.subr.mxu0 0.0
  %564 = vmatpush1.msra.mxu0 0.0
  %565 = vmatprep.subr.mxu0 0.0
  %566 = vmatpush1.msra.mxu0 0.0
  %567 = vmatprep.subr.mxu0 0.0
  %568 = vmatpush1.msra.mxu0 0.0
  %569 = vmatprep.subr.mxu0 0.0
  %570 = vmatpush1.msra.mxu0 0.0
  %571 = vmatprep.subr.mxu0 0.0
  %572 = vmatpush1.msra.mxu0 0.0
  %573 = vmatprep.subr.mxu0 0.0
  %574 = vmatpush1.msra.mxu0 0.0
  %575 = vmatprep.subr.mxu0 0.0
  %576 = vmatpush1.msra.mxu0 0.0
  %577 = vmatprep.subr.mxu0 0.0
  %578 = vmatpush1.msra.mxu0 0.0
  %579 = vmatprep.subr.mxu0 0.0
  %580 = vmatpush1.msra.mxu0 0.0
  %581 = vmatprep.subr.mxu0 0.0
  %582 = vmatpush1.msra.mxu0 0.0
  %583 = vmatprep.subr.mxu0 0.0
  %584 = vmatpush1.msra.mxu0 0.0
  %585 = vmatprep.subr.mxu0 0.0
  %586 = vmatpush1.msra.mxu0 0.0
  %587 = vmatprep.subr.mxu0 0.0
  %588 = vmatpush1.msra.mxu0 0.0
  %589 = vmatprep.subr.mxu0 0.0
  %590 = vmatpush1.msra.mxu0 0.0
  %591 = vmatprep.subr.mxu0 0.0
  %592 = vmatpush1.msra.mxu0 0.0
  %593 = vmatprep.subr.mxu0 0.0
  %594 = vmatpush1.msra.mxu0 0.0
  %595 = vmatprep.subr.mxu0 0.0
  %596 = vmatpush1.msra.mxu0 0.0
  %597 = vmatprep.subr.mxu0 0.0
  %598 = vmatpush1.msra.mxu0 0.0
  %599 = vmatprep.subr.mxu0 0.0
  %600 = vmatpush1.msra.mxu0 0.0
  %601 = vmatprep.subr.mxu0 0.0
  %602 = vmatpush1.msra.mxu0 0.0
  %603 = vmatprep.subr.mxu0 0.0
  %604 = vmatpush1.msra.mxu0 0.0
  %605 = vmatprep.subr.mxu0 0.0
  %606 = vmatpush1.msra.mxu0 0.0
  %607 = vmatprep.subr.mxu0 0.0
  %608 = vmatpush1.msra.mxu0 0.0
  %609 = vmatprep.subr.mxu0 0.0
  %610 = vmatpush1.msra.mxu0 0.0
  %611 = vmatprep.subr.mxu0 0.0
  %612 = vmatpush1.msra.mxu0 0.0
  %613 = vmatprep.subr.mxu0 0.0
  %614 = vmatpush1.msra.mxu0 0.0
  %615 = vmatprep.subr.mxu0 0.0
  %616 = vmatpush1.msra.mxu0 0.0
  %617 = vmatprep.mubr.f32.mxu0 0.0
  %v618 = vand.u32 %v52, 4294901760
  %v619 = vsub.f32 %v52, %v618
  %v620 = vand.u32 %v619, 4294901760
  %v621 = vsub.f32 %v619, %v620
  %v622 = vand.u32 %v621, 4294901760
  %623 = vmatmul.mubr.f32.gmra.mrb[0].mxu0 %v622
  %v624 = vpop.f32.mrb[0].mxu0
  %v625 = vadd.f32 0.0, %v624
  %v626 = vpop.f32.mrb[0].mxu0
  %627 = vdwg.mxu0
  %628 = vmatprep.subr.mxu0 0.0
  %v629 = vand.u32 %v24, 4294901760
  %v630 = vsub.f32 %v24, %v629
  %v631 = vand.u32 %v630, 4294901760
  %v632 = vsub.f32 %v630, %v631
  %v633 = vand.u32 %v632, 4294901760
  %634 = vmatpush1.msra.mxu0 %v633
  %635 = vmatprep.subr.mxu0 0.0
  %v636 = vand.u32 %v25, 4294901760
  %v637 = vsub.f32 %v25, %v636
  %v638 = vand.u32 %v637, 4294901760
  %v639 = vsub.f32 %v637, %v638
  %v640 = vand.u32 %v639, 4294901760
  %641 = vmatpush1.msra.mxu0 %v640
  %642 = vmatprep.subr.mxu0 0.0
  %v643 = vand.u32 %v26, 4294901760
  %v644 = vsub.f32 %v26, %v643
  %v645 = vand.u32 %v644, 4294901760
  %v646 = vsub.f32 %v644, %v645
  %v647 = vand.u32 %v646, 4294901760
  %648 = vmatpush1.msra.mxu0 %v647
  %649 = vmatprep.subr.mxu0 0.0
  %v650 = vand.u32 %v27, 4294901760
  %v651 = vsub.f32 %v27, %v650
  %v652 = vand.u32 %v651, 4294901760
  %v653 = vsub.f32 %v651, %v652
  %v654 = vand.u32 %v653, 4294901760
  %655 = vmatpush1.msra.mxu0 %v654
  %656 = vmatprep.subr.mxu0 0.0
  %657 = vmatpush1.msra.mxu0 0.0
  %658 = vmatprep.subr.mxu0 0.0
  %659 = vmatpush1.msra.mxu0 0.0
  %660 = vmatprep.subr.mxu0 0.0
  %661 = vmatpush1.msra.mxu0 0.0
  %662 = vmatprep.subr.mxu0 0.0
  %663 = vmatpush1.msra.mxu0 0.0
  %664 = vmatprep.subr.mxu0 0.0
  %665 = vmatpush1.msra.mxu0 0.0
  %666 = vmatprep.subr.mxu0 0.0
  %667 = vmatpush1.msra.mxu0 0.0
  %668 = vmatprep.subr.mxu0 0.0
  %669 = vmatpush1.msra.mxu0 0.0
  %670 = vmatprep.subr.mxu0 0.0
  %671 = vmatpush1.msra.mxu0 0.0
  %672 = vmatprep.subr.mxu0 0.0
  %673 = vmatpush1.msra.mxu0 0.0
  %674 = vmatprep.subr.mxu0 0.0
  %675 = vmatpush1.msra.mxu0 0.0
  %676 = vmatprep.subr.mxu0 0.0
  %677 = vmatpush1.msra.mxu0 0.0
  %678 = vmatprep.subr.mxu0 0.0
  %679 = vmatpush1.msra.mxu0 0.0
  %680 = vmatprep.subr.mxu0 0.0
  %681 = vmatpush1.msra.mxu0 0.0
  %682 = vmatprep.subr.mxu0 0.0
  %683 = vmatpush1.msra.mxu0 0.0
  %684 = vmatprep.subr.mxu0 0.0
  %685 = vmatpush1.msra.mxu0 0.0
  %686 = vmatprep.subr.mxu0 0.0
  %687 = vmatpush1.msra.mxu0 0.0
  %688 = vmatprep.subr.mxu0 0.0
  %689 = vmatpush1.msra.mxu0 0.0
  %690 = vmatprep.subr.mxu0 0.0
  %691 = vmatpush1.msra.mxu0 0.0
  %692 = vmatprep.subr.mxu0 0.0
  %693 = vmatpush1.msra.mxu0 0.0
  %694 = vmatprep.subr.mxu0 0.0
  %695 = vmatpush1.msra.mxu0 0.0
  %696 = vmatprep.subr.mxu0 0.0
  %697 = vmatpush1.msra.mxu0 0.0
  %698 = vmatprep.subr.mxu0 0.0
  %699 = vmatpush1.msra.mxu0 0.0
  %700 = vmatprep.subr.mxu0 0.0
  %701 = vmatpush1.msra.mxu0 0.0
  %702 = vmatprep.subr.mxu0 0.0
  %703 = vmatpush1.msra.mxu0 0.0
  %704 = vmatprep.subr.mxu0 0.0
  %705 = vmatpush1.msra.mxu0 0.0
  %706 = vmatprep.subr.mxu0 0.0
  %707 = vmatpush1.msra.mxu0 0.0
  %708 = vmatprep.subr.mxu0 0.0
  %709 = vmatpush1.msra.mxu0 0.0
  %710 = vmatprep.subr.mxu0 0.0
  %711 = vmatpush1.msra.mxu0 0.0
  %712 = vmatprep.mubr.f32.mxu0 0.0
  %v713 = vand.u32 %v52, 4294901760
  %714 = vmatmul.mubr.f32.gmra.mrb[0].mxu0 %v713
  %v715 = vpop.f32.mrb[0].mxu0
  %v716 = vadd.f32 %v625, %v715
  %v717 = vpop.f32.mrb[0].mxu0
  %718 = vdwg.mxu0
  %719 = vmatprep.subr.mxu0 0.0
  %v720 = vand.u32 %v24, 4294901760
  %v721 = vsub.f32 %v24, %v720
  %722 = vmatpush1.msra.mxu0 %v721
  %723 = vmatprep.subr.mxu0 0.0
  %v724 = vand.u32 %v25, 4294901760
  %v725 = vsub.f32 %v25, %v724
  %726 = vmatpush1.msra.mxu0 %v725
  %727 = vmatprep.subr.mxu0 0.0
  %v728 = vand.u32 %v26, 4294901760
  %v729 = vsub.f32 %v26, %v728
  %730 = vmatpush1.msra.mxu0 %v729
  %731 = vmatprep.subr.mxu0 0.0
  %v732 = vand.u32 %v27, 4294901760
  %v733 = vsub.f32 %v27, %v732
  %734 = vmatpush1.msra.mxu0 %v733
  %735 = vmatprep.subr.mxu0 0.0
  %736 = vmatpush1.msra.mxu0 0.0
  %737 = vmatprep.subr.mxu0 0.0
  %738 = vmatpush1.msra.mxu0 0.0
  %739 = vmatprep.subr.mxu0 0.0
  %740 = vmatpush1.msra.mxu0 0.0
  %741 = vmatprep.subr.mxu0 0.0
  %742 = vmatpush1.msra.mxu0 0.0
  %743 = vmatprep.subr.mxu0 0.0
  %744 = vmatpush1.msra.mxu0 0.0
  %745 = vmatprep.subr.mxu0 0.0
  %746 = vmatpush1.msra.mxu0 0.0
  %747 = vmatprep.subr.mxu0 0.0
  %748 = vmatpush1.msra.mxu0 0.0
  %749 = vmatprep.subr.mxu0 0.0
  %750 = vmatpush1.msra.mxu0 0.0
  %751 = vmatprep.subr.mxu0 0.0
  %752 = vmatpush1.msra.mxu0 0.0
  %753 = vmatprep.subr.mxu0 0.0
  %754 = vmatpush1.msra.mxu0 0.0
  %755 = vmatprep.subr.mxu0 0.0
  %756 = vmatpush1.msra.mxu0 0.0
  %757 = vmatprep.subr.mxu0 0.0
  %758 = vmatpush1.msra.mxu0 0.0
  %759 = vmatprep.subr.mxu0 0.0
  %760 = vmatpush1.msra.mxu0 0.0
  %761 = vmatprep.subr.mxu0 0.0
  %762 = vmatpush1.msra.mxu0 0.0
  %763 = vmatprep.subr.mxu0 0.0
  %764 = vmatpush1.msra.mxu0 0.0
  %765 = vmatprep.subr.mxu0 0.0
  %766 = vmatpush1.msra.mxu0 0.0
  %767 = vmatprep.subr.mxu0 0.0
  %768 = vmatpush1.msra.mxu0 0.0
  %769 = vmatprep.subr.mxu0 0.0
  %770 = vmatpush1.msra.mxu0 0.0
  %771 = vmatprep.subr.mxu0 0.0
  %772 = vmatpush1.msra.mxu0 0.0
  %773 = vmatprep.subr.mxu0 0.0
  %774 = vmatpush1.msra.mxu0 0.0
  %775 = vmatprep.subr.mxu0 0.0
  %776 = vmatpush1.msra.mxu0 0.0
  %777 = vmatprep.subr.mxu0 0.0
  %778 = vmatpush1.msra.mxu0 0.0
  %779 = vmatprep.subr.mxu0 0.0
  %780 = vmatpush1.msra.mxu0 0.0
  %781 = vmatprep.subr.mxu0 0.0
  %782 = vmatpush1.msra.mxu0 0.0
  %783 = vmatprep.subr.mxu0 0.0
  %784 = vmatpush1.msra.mxu0 0.0
  %785 = vmatprep.subr.mxu0 0.0
  %786 = vmatpush1.msra.mxu0 0.0
  %787 = vmatprep.subr.mxu0 0.0
  %788 = vmatpush1.msra.mxu0 0.0
  %789 = vmatprep.subr.mxu0 0.0
  %790 = vmatpush1.msra.mxu0 0.0
  %791 = vmatprep.mubr.f32.mxu0 0.0
  %v792 = vand.u32 %v52, 4294901760
  %v793 = vsub.f32 %v52, %v792
  %794 = vmatmul.mubr.f32.gmra.mrb[0].mxu0 %v793
  %v795 = vpop.f32.mrb[0].mxu0
  %v796 = vadd.f32 %v716, %v795
  %v797 = vpop.f32.mrb[0].mxu0
  %798 = vdwg.mxu0
  %799 = vmatprep.subr.mxu0 0.0
  %v800 = vand.u32 %v24, 4294901760
  %801 = vmatpush1.msra.mxu0 %v800
  %802 = vmatprep.subr.mxu0 0.0
  %v803 = vand.u32 %v25, 4294901760
  %804 = vmatpush1.msra.mxu0 %v803
  %805 = vmatprep.subr.mxu0 0.0
  %v806 = vand.u32 %v26, 4294901760
  %807 = vmatpush1.msra.mxu0 %v806
  %808 = vmatprep.subr.mxu0 0.0
  %v809 = vand.u32 %v27, 4294901760
  %810 = vmatpush1.msra.mxu0 %v809
  %811 = vmatprep.subr.mxu0 0.0
  %812 = vmatpush1.msra.mxu0 0.0
  %813 = vmatprep.subr.mxu0 0.0
  %814 = vmatpush1.msra.mxu0 0.0
  %815 = vmatprep.subr.mxu0 0.0
  %816 = vmatpush1.msra.mxu0 0.0
  %817 = vmatprep.subr.mxu0 0.0
  %818 = vmatpush1.msra.mxu0 0.0
  %819 = vmatprep.subr.mxu0 0.0
  %820 = vmatpush1.msra.mxu0 0.0
  %821 = vmatprep.subr.mxu0 0.0
  %822 = vmatpush1.msra.mxu0 0.0
  %823 = vmatprep.subr.mxu0 0.0
  %824 = vmatpush1.msra.mxu0 0.0
  %825 = vmatprep.subr.mxu0 0.0
  %826 = vmatpush1.msra.mxu0 0.0
  %827 = vmatprep.subr.mxu0 0.0
  %828 = vmatpush1.msra.mxu0 0.0
  %829 = vmatprep.subr.mxu0 0.0
  %830 = vmatpush1.msra.mxu0 0.0
  %831 = vmatprep.subr.mxu0 0.0
  %832 = vmatpush1.msra.mxu0 0.0
  %833 = vmatprep.subr.mxu0 0.0
  %834 = vmatpush1.msra.mxu0 0.0
  %835 = vmatprep.subr.mxu0 0.0
  %836 = vmatpush1.msra.mxu0 0.0
  %837 = vmatprep.subr.mxu0 0.0
  %838 = vmatpush1.msra.mxu0 0.0
  %839 = vmatprep.subr.mxu0 0.0
  %840 = vmatpush1.msra.mxu0 0.0
  %841 = vmatprep.subr.mxu0 0.0
  %842 = vmatpush1.msra.mxu0 0.0
  %843 = vmatprep.subr.mxu0 0.0
  %844 = vmatpush1.msra.mxu0 0.0
  %845 = vmatprep.subr.mxu0 0.0
  %846 = vmatpush1.msra.mxu0 0.0
  %847 = vmatprep.subr.mxu0 0.0
  %848 = vmatpush1.msra.mxu0 0.0
  %849 = vmatprep.subr.mxu0 0.0
  %850 = vmatpush1.msra.mxu0 0.0
  %851 = vmatprep.subr.mxu0 0.0
  %852 = vmatpush1.msra.mxu0 0.0
  %853 = vmatprep.subr.mxu0 0.0
  %854 = vmatpush1.msra.mxu0 0.0
  %855 = vmatprep.subr.mxu0 0.0
  %856 = vmatpush1.msra.mxu0 0.0
  %857 = vmatprep.subr.mxu0 0.0
  %858 = vmatpush1.msra.mxu0 0.0
  %859 = vmatprep.subr.mxu0 0.0
  %860 = vmatpush1.msra.mxu0 0.0
  %861 = vmatprep.subr.mxu0 0.0
  %862 = vmatpush1.msra.mxu0 0.0
  %863 = vmatprep.subr.mxu0 0.0
  %864 = vmatpush1.msra.mxu0 0.0
  %865 = vmatprep.subr.mxu0 0.0
  %866 = vmatpush1.msra.mxu0 0.0
  %867 = vmatprep.mubr.f32.mxu0 0.0
  %v868 = vand.u32 %v52, 4294901760
  %v869 = vsub.f32 %v52, %v868
  %v870 = vand.u32 %v869, 4294901760
  %871 = vmatmul.mubr.f32.gmra.mrb[0].mxu0 %v870
  %v872 = vpop.f32.mrb[0].mxu0
  %v873 = vadd.f32 %v796, %v872
  %v874 = vpop.f32.mrb[0].mxu0
  %875 = vdwg.mxu0
  %876 = vmatprep.subr.mxu0 0.0
  %v877 = vand.u32 %v24, 4294901760
  %v878 = vsub.f32 %v24, %v877
  %v879 = vand.u32 %v878, 4294901760
  %880 = vmatpush1.msra.mxu0 %v879
  %881 = vmatprep.subr.mxu0 0.0
  %v882 = vand.u32 %v25, 4294901760
  %v883 = vsub.f32 %v25, %v882
  %v884 = vand.u32 %v883, 4294901760
  %885 = vmatpush1.msra.mxu0 %v884
  %886 = vmatprep.subr.mxu0 0.0
  %v887 = vand.u32 %v26, 4294901760
  %v888 = vsub.f32 %v26, %v887
  %v889 = vand.u32 %v888, 4294901760
  %890 = vmatpush1.msra.mxu0 %v889
  %891 = vmatprep.subr.mxu0 0.0
  %v892 = vand.u32 %v27, 4294901760
  %v893 = vsub.f32 %v27, %v892
  %v894 = vand.u32 %v893, 4294901760
  %895 = vmatpush1.msra.mxu0 %v894
  %896 = vmatprep.subr.mxu0 0.0
  %897 = vmatpush1.msra.mxu0 0.0
  %898 = vmatprep.subr.mxu0 0.0
  %899 = vmatpush1.msra.mxu0 0.0
  %900 = vmatprep.subr.mxu0 0.0
  %901 = vmatpush1.msra.mxu0 0.0
  %902 = vmatprep.subr.mxu0 0.0
  %903 = vmatpush1.msra.mxu0 0.0
  %904 = vmatprep.subr.mxu0 0.0
  %905 = vmatpush1.msra.mxu0 0.0
  %906 = vmatprep.subr.mxu0 0.0
  %907 = vmatpush1.msra.mxu0 0.0
  %908 = vmatprep.subr.mxu0 0.0
  %909 = vmatpush1.msra.mxu0 0.0
  %910 = vmatprep.subr.mxu0 0.0
  %911 = vmatpush1.msra.mxu0 0.0
  %912 = vmatprep.subr.mxu0 0.0
  %913 = vmatpush1.msra.mxu0 0.0
  %914 = vmatprep.subr.mxu0 0.0
  %915 = vmatpush1.msra.mxu0 0.0
  %916 = vmatprep.subr.mxu0 0.0
  %917 = vmatpush1.msra.mxu0 0.0
  %918 = vmatprep.subr.mxu0 0.0
  %919 = vmatpush1.msra.mxu0 0.0
  %920 = vmatprep.subr.mxu0 0.0
  %921 = vmatpush1.msra.mxu0 0.0
  %922 = vmatprep.subr.mxu0 0.0
  %923 = vmatpush1.msra.mxu0 0.0
  %924 = vmatprep.subr.mxu0 0.0
  %925 = vmatpush1.msra.mxu0 0.0
  %926 = vmatprep.subr.mxu0 0.0
  %927 = vmatpush1.msra.mxu0 0.0
  %928 = vmatprep.subr.mxu0 0.0
  %929 = vmatpush1.msra.mxu0 0.0
  %930 = vmatprep.subr.mxu0 0.0
  %931 = vmatpush1.msra.mxu0 0.0
  %932 = vmatprep.subr.mxu0 0.0
  %933 = vmatpush1.msra.mxu0 0.0
  %934 = vmatprep.subr.mxu0 0.0
  %935 = vmatpush1.msra.mxu0 0.0
  %936 = vmatprep.subr.mxu0 0.0
  %937 = vmatpush1.msra.mxu0 0.0
  %938 = vmatprep.subr.mxu0 0.0
  %939 = vmatpush1.msra.mxu0 0.0
  %940 = vmatprep.subr.mxu0 0.0
  %941 = vmatpush1.msra.mxu0 0.0
  %942 = vmatprep.subr.mxu0 0.0
  %943 = vmatpush1.msra.mxu0 0.0
  %944 = vmatprep.subr.mxu0 0.0
  %945 = vmatpush1.msra.mxu0 0.0
  %946 = vmatprep.subr.mxu0 0.0
  %947 = vmatpush1.msra.mxu0 0.0
  %948 = vmatprep.subr.mxu0 0.0
  %949 = vmatpush1.msra.mxu0 0.0
  %950 = vmatprep.subr.mxu0 0.0
  %951 = vmatpush1.msra.mxu0 0.0
  %952 = vmatprep.mubr.f32.mxu0 0.0
  %v953 = vand.u32 %v52, 4294901760
  %954 = vmatmul.mubr.f32.gmra.mrb[0].mxu0 %v953
  %v955 = vpop.f32.mrb[0].mxu0
  %v956 = vadd.f32 %v873, %v955
  %v957 = vpop.f32.mrb[0].mxu0
  %958 = vdwg.mxu0
  %959 = vmatprep.subr.mxu0 0.0
  %v960 = vand.u32 %v24, 4294901760
  %961 = vmatpush1.msra.mxu0 %v960
  %962 = vmatprep.subr.mxu0 0.0
  %v963 = vand.u32 %v25, 4294901760
  %964 = vmatpush1.msra.mxu0 %v963
  %965 = vmatprep.subr.mxu0 0.0
  %v966 = vand.u32 %v26, 4294901760
  %967 = vmatpush1.msra.mxu0 %v966
  %968 = vmatprep.subr.mxu0 0.0
  %v969 = vand.u32 %v27, 4294901760
  %970 = vmatpush1.msra.mxu0 %v969
  %971 = vmatprep.subr.mxu0 0.0
  %972 = vmatpush1.msra.mxu0 0.0
  %973 = vmatprep.subr.mxu0 0.0
  %974 = vmatpush1.msra.mxu0 0.0
  %975 = vmatprep.subr.mxu0 0.0
  %976 = vmatpush1.msra.mxu0 0.0
  %977 = vmatprep.subr.mxu0 0.0
  %978 = vmatpush1.msra.mxu0 0.0
  %979 = vmatprep.subr.mxu0 0.0
  %980 = vmatpush1.msra.mxu0 0.0
  %981 = vmatprep.subr.mxu0 0.0
  %982 = vmatpush1.msra.mxu0 0.0
  %983 = vmatprep.subr.mxu0 0.0
  %984 = vmatpush1.msra.mxu0 0.0
  %985 = vmatprep.subr.mxu0 0.0
  %986 = vmatpush1.msra.mxu0 0.0
  %987 = vmatprep.subr.mxu0 0.0
  %988 = vmatpush1.msra.mxu0 0.0
  %989 = vmatprep.subr.mxu0 0.0
  %990 = vmatpush1.msra.mxu0 0.0
  %991 = vmatprep.subr.mxu0 0.0
  %992 = vmatpush1.msra.mxu0 0.0
  %993 = vmatprep.subr.mxu0 0.0
  %994 = vmatpush1.msra.mxu0 0.0
  %995 = vmatprep.subr.mxu0 0.0
  %996 = vmatpush1.msra.mxu0 0.0
  %997 = vmatprep.subr.mxu0 0.0
  %998 = vmatpush1.msra.mxu0 0.0
  %999 = vmatprep.subr.mxu0 0.0
  %1000 = vmatpush1.msra.mxu0 0.0
  %1001 = vmatprep.subr.mxu0 0.0
  %1002 = vmatpush1.msra.mxu0 0.0
  %1003 = vmatprep.subr.mxu0 0.0
  %1004 = vmatpush1.msra.mxu0 0.0
  %1005 = vmatprep.subr.mxu0 0.0
  %1006 = vmatpush1.msra.mxu0 0.0
  %1007 = vmatprep.subr.mxu0 0.0
  %1008 = vmatpush1.msra.mxu0 0.0
  %1009 = vmatprep.subr.mxu0 0.0
  %1010 = vmatpush1.msra.mxu0 0.0
  %1011 = vmatprep.subr.mxu0 0.0
  %1012 = vmatpush1.msra.mxu0 0.0
  %1013 = vmatprep.subr.mxu0 0.0
  %1014 = vmatpush1.msra.mxu0 0.0
  %1015 = vmatprep.subr.mxu0 0.0
  %1016 = vmatpush1.msra.mxu0 0.0
  %1017 = vmatprep.subr.mxu0 0.0
  %1018 = vmatpush1.msra.mxu0 0.0
  %1019 = vmatprep.subr.mxu0 0.0
  %1020 = vmatpush1.msra.mxu0 0.0
  %1021 = vmatprep.subr.mxu0 0.0
  %1022 = vmatpush1.msra.mxu0 0.0
  %1023 = vmatprep.subr.mxu0 0.0
  %1024 = vmatpush1.msra.mxu0 0.0
  %1025 = vmatprep.subr.mxu0 0.0
  %1026 = vmatpush1.msra.mxu0 0.0
  %1027 = vmatprep.mubr.f32.mxu0 0.0
  %v1028 = vand.u32 %v52, 4294901760
  %1029 = vmatmul.mubr.f32.gmra.mrb[0].mxu0 %v1028
  %v1030 = vpop.f32.mrb[0].mxu0
  %v1031 = vadd.f32 %v956, %v1030
  %v1032 = vpop.f32.mrb[0].mxu0
  %1033 = vdwg.mxu0
  %v1034 = vmul.f32 %v1031, 1.442695
  %v1035 = vpow.pop %v1034
  %v1036 = vsel %vm50, 0.0, %v1035
  %v1037 = vsel %vm541, %v1036, 0.0
  %1038 = vadd.xlane.f32.xlu0 %v1037
  %v1039 = vpop.xlane.xlu0 %1038
  %v1040 = vadd.f32 %v544, %v1039
  %v1041 = vmul.f32 %v1036, %v1031
  %v1042 = vsel %vm541, %v1041, 0.0
  %1043 = vadd.xlane.f32.xlu0 %v1042
  %v1044 = vpop.xlane.xlu0 %1043
  %v1045 = vadd.f32 %v548, %v1044
  %v1046 = vsub.f32 %v1040, %v40
  %v1047 = vmul.f32 %v1045, 0.1
  %v1048 = vmul.f32 %v37, %v40
  %v1049 = vsub.f32 %v1047, %v1048
  %v1050 = vmul.f32 %v32, 0.2
  %v1051 = vmul.f32 %v1046, 0.8
  %v1052 = vrcp.pop 14.0
  %v1053 = vmul.f32 %v1051, %v1052
  %v1054 = vadd.f32 %v1050, %v1053
  %v1055 = vmul.f32 %v1054, 14.0
  %v1056 = vrcp.pop %v1055
  %v1057 = vmul.f32 %v1049, %v1056
  %v1059 = vsel %vm34, %v42, 0
  %1061 = vmatprep.subr.mxu0 0.0
  %v1062 = vand.u32 %v24, 4294901760
  %1063 = vmatpush1.msra.mxu0 %v1062
  %1064 = vmatprep.subr.mxu0 0.0
  %v1065 = vand.u32 %v25, 4294901760
  %1066 = vmatpush1.msra.mxu0 %v1065
  %1067 = vmatprep.subr.mxu0 0.0
  %v1068 = vand.u32 %v26, 4294901760
  %1069 = vmatpush1.msra.mxu0 %v1068
  %1070 = vmatprep.subr.mxu0 0.0
  %v1071 = vand.u32 %v27, 4294901760
  %1072 = vmatpush1.msra.mxu0 %v1071
  %1073 = vmatprep.subr.mxu0 0.0
  %1074 = vmatpush1.msra.mxu0 0.0
  %1075 = vmatprep.subr.mxu0 0.0
  %1076 = vmatpush1.msra.mxu0 0.0
  %1077 = vmatprep.subr.mxu0 0.0
  %1078 = vmatpush1.msra.mxu0 0.0
  %1079 = vmatprep.subr.mxu0 0.0
  %1080 = vmatpush1.msra.mxu0 0.0
  %1081 = vmatprep.subr.mxu0 0.0
  %1082 = vmatpush1.msra.mxu0 0.0
  %1083 = vmatprep.subr.mxu0 0.0
  %1084 = vmatpush1.msra.mxu0 0.0
  %1085 = vmatprep.subr.mxu0 0.0
  %1086 = vmatpush1.msra.mxu0 0.0
  %1087 = vmatprep.subr.mxu0 0.0
  %1088 = vmatpush1.msra.mxu0 0.0
  %1089 = vmatprep.subr.mxu0 0.0
  %1090 = vmatpush1.msra.mxu0 0.0
  %1091 = vmatprep.subr.mxu0 0.0
  %1092 = vmatpush1.msra.mxu0 0.0
  %1093 = vmatprep.subr.mxu0 0.0
  %1094 = vmatpush1.msra.mxu0 0.0
  %1095 = vmatprep.subr.mxu0 0.0
  %1096 = vmatpush1.msra.mxu0 0.0
  %1097 = vmatprep.subr.mxu0 0.0
  %1098 = vmatpush1.msra.mxu0 0.0
  %1099 = vmatprep.subr.mxu0 0.0
  %1100 = vmatpush1.msra.mxu0 0.0
  %1101 = vmatprep.subr.mxu0 0.0
  %1102 = vmatpush1.msra.mxu0 0.0
  %1103 = vmatprep.subr.mxu0 0.0
  %1104 = vmatpush1.msra.mxu0 0.0
  %1105 = vmatprep.subr.mxu0 0.0
  %1106 = vmatpush1.msra.mxu0 0.0
  %1107 = vmatprep.subr.mxu0 0.0
  %1108 = vmatpush1.msra.mxu0 0.0
  %1109 = vmatprep.subr.mxu0 0.0
  %1110 = vmatpush1.msra.mxu0 0.0
  %1111 = vmatprep.subr.mxu0 0.0
  %1112 = vmatpush1.msra.mxu0 0.0
  %1113 = vmatprep.subr.mxu0 0.0
  %1114 = vmatpush1.msra.mxu0 0.0
  %1115 = vmatprep.subr.mxu0 0.0
  %1116 = vmatpush1.msra.mxu0 0.0
  %1117 = vmatprep.subr.mxu0 0.0
  %1118 = vmatpush1.msra.mxu0 0.0
  %1119 = vmatprep.subr.mxu0 0.0
  %1120 = vmatpush1.msra.mxu0 0.0
  %1121 = vmatprep.subr.mxu0 0.0
  %1122 = vmatpush1.msra.mxu0 0.0
  %1123 = vmatprep.subr.mxu0 0.0
  %1124 = vmatpush1.msra.mxu0 0.0
  %1125 = vmatprep.subr.mxu0 0.0
  %1126 = vmatpush1.msra.mxu0 0.0
  %1127 = vmatprep.subr.mxu0 0.0
  %1128 = vmatpush1.msra.mxu0 0.0
  %1129 = vmatprep.mubr.f32.mxu0 0.0
  %v1130 = vand.u32 %v1059, 4294901760
  %v1131 = vsub.f32 %v1059, %v1130
  %v1132 = vand.u32 %v1131, 4294901760
  %v1133 = vsub.f32 %v1131, %v1132
  %v1134 = vand.u32 %v1133, 4294901760
  %1135 = vmatmul.mubr.f32.gmra.mrb[0].mxu0 %v1134
  %v1136 = vpop.f32.mrb[0].mxu0
  %v1137 = vadd.f32 0.0, %v1136
  %v1138 = vpop.f32.mrb[0].mxu0
  %1139 = vdwg.mxu0
  %1140 = vmatprep.subr.mxu0 0.0
  %v1141 = vand.u32 %v24, 4294901760
  %v1142 = vsub.f32 %v24, %v1141
  %v1143 = vand.u32 %v1142, 4294901760
  %v1144 = vsub.f32 %v1142, %v1143
  %v1145 = vand.u32 %v1144, 4294901760
  %1146 = vmatpush1.msra.mxu0 %v1145
  %1147 = vmatprep.subr.mxu0 0.0
  %v1148 = vand.u32 %v25, 4294901760
  %v1149 = vsub.f32 %v25, %v1148
  %v1150 = vand.u32 %v1149, 4294901760
  %v1151 = vsub.f32 %v1149, %v1150
  %v1152 = vand.u32 %v1151, 4294901760
  %1153 = vmatpush1.msra.mxu0 %v1152
  %1154 = vmatprep.subr.mxu0 0.0
  %v1155 = vand.u32 %v26, 4294901760
  %v1156 = vsub.f32 %v26, %v1155
  %v1157 = vand.u32 %v1156, 4294901760
  %v1158 = vsub.f32 %v1156, %v1157
  %v1159 = vand.u32 %v1158, 4294901760
  %1160 = vmatpush1.msra.mxu0 %v1159
  %1161 = vmatprep.subr.mxu0 0.0
  %v1162 = vand.u32 %v27, 4294901760
  %v1163 = vsub.f32 %v27, %v1162
  %v1164 = vand.u32 %v1163, 4294901760
  %v1165 = vsub.f32 %v1163, %v1164
  %v1166 = vand.u32 %v1165, 4294901760
  %1167 = vmatpush1.msra.mxu0 %v1166
  %1168 = vmatprep.subr.mxu0 0.0
  %1169 = vmatpush1.msra.mxu0 0.0
  %1170 = vmatprep.subr.mxu0 0.0
  %1171 = vmatpush1.msra.mxu0 0.0
  %1172 = vmatprep.subr.mxu0 0.0
  %1173 = vmatpush1.msra.mxu0 0.0
  %1174 = vmatprep.subr.mxu0 0.0
  %1175 = vmatpush1.msra.mxu0 0.0
  %1176 = vmatprep.subr.mxu0 0.0
  %1177 = vmatpush1.msra.mxu0 0.0
  %1178 = vmatprep.subr.mxu0 0.0
  %1179 = vmatpush1.msra.mxu0 0.0
  %1180 = vmatprep.subr.mxu0 0.0
  %1181 = vmatpush1.msra.mxu0 0.0
  %1182 = vmatprep.subr.mxu0 0.0
  %1183 = vmatpush1.msra.mxu0 0.0
  %1184 = vmatprep.subr.mxu0 0.0
  %1185 = vmatpush1.msra.mxu0 0.0
  %1186 = vmatprep.subr.mxu0 0.0
  %1187 = vmatpush1.msra.mxu0 0.0
  %1188 = vmatprep.subr.mxu0 0.0
  %1189 = vmatpush1.msra.mxu0 0.0
  %1190 = vmatprep.subr.mxu0 0.0
  %1191 = vmatpush1.msra.mxu0 0.0
  %1192 = vmatprep.subr.mxu0 0.0
  %1193 = vmatpush1.msra.mxu0 0.0
  %1194 = vmatprep.subr.mxu0 0.0
  %1195 = vmatpush1.msra.mxu0 0.0
  %1196 = vmatprep.subr.mxu0 0.0
  %1197 = vmatpush1.msra.mxu0 0.0
  %1198 = vmatprep.subr.mxu0 0.0
  %1199 = vmatpush1.msra.mxu0 0.0
  %1200 = vmatprep.subr.mxu0 0.0
  %1201 = vmatpush1.msra.mxu0 0.0
  %1202 = vmatprep.subr.mxu0 0.0
  %1203 = vmatpush1.msra.mxu0 0.0
  %1204 = vmatprep.subr.mxu0 0.0
  %1205 = vmatpush1.msra.mxu0 0.0
  %1206 = vmatprep.subr.mxu0 0.0
  %1207 = vmatpush1.msra.mxu0 0.0
  %1208 = vmatprep.subr.mxu0 0.0
  %1209 = vmatpush1.msra.mxu0 0.0
  %1210 = vmatprep.subr.mxu0 0.0
  %1211 = vmatpush1.msra.mxu0 0.0
  %1212 = vmatprep.subr.mxu0 0.0
  %1213 = vmatpush1.msra.mxu0 0.0
  %1214 = vmatprep.subr.mxu0 0.0
  %1215 = vmatpush1.msra.mxu0 0.0
  %1216 = vmatprep.subr.mxu0 0.0
  %1217 = vmatpush1.msra.mxu0 0.0
  %1218 = vmatprep.subr.mxu0 0.0
  %1219 = vmatpush1.msra.mxu0 0.0
  %1220 = vmatprep.subr.mxu0 0.0
  %1221 = vmatpush1.msra.mxu0 0.0
  %1222 = vmatprep.subr.mxu0 0.0
  %1223 = vmatpush1.msra.mxu0 0.0
  %1224 = vmatprep.mubr.f32.mxu0 0.0
  %v1225 = vand.u32 %v1059, 4294901760
  %1226 = vmatmul.mubr.f32.gmra.mrb[0].mxu0 %v1225
  %v1227 = vpop.f32.mrb[0].mxu0
  %v1228 = vadd.f32 %v1137, %v1227
  %v1229 = vpop.f32.mrb[0].mxu0
  %1230 = vdwg.mxu0
  %1231 = vmatprep.subr.mxu0 0.0
  %v1232 = vand.u32 %v24, 4294901760
  %v1233 = vsub.f32 %v24, %v1232
  %1234 = vmatpush1.msra.mxu0 %v1233
  %1235 = vmatprep.subr.mxu0 0.0
  %v1236 = vand.u32 %v25, 4294901760
  %v1237 = vsub.f32 %v25, %v1236
  %1238 = vmatpush1.msra.mxu0 %v1237
  %1239 = vmatprep.subr.mxu0 0.0
  %v1240 = vand.u32 %v26, 4294901760
  %v1241 = vsub.f32 %v26, %v1240
  %1242 = vmatpush1.msra.mxu0 %v1241
  %1243 = vmatprep.subr.mxu0 0.0
  %v1244 = vand.u32 %v27, 4294901760
  %v1245 = vsub.f32 %v27, %v1244
  %1246 = vmatpush1.msra.mxu0 %v1245
  %1247 = vmatprep.subr.mxu0 0.0
  %1248 = vmatpush1.msra.mxu0 0.0
  %1249 = vmatprep.subr.mxu0 0.0
  %1250 = vmatpush1.msra.mxu0 0.0
  %1251 = vmatprep.subr.mxu0 0.0
  %1252 = vmatpush1.msra.mxu0 0.0
  %1253 = vmatprep.subr.mxu0 0.0
  %1254 = vmatpush1.msra.mxu0 0.0
  %1255 = vmatprep.subr.mxu0 0.0
  %1256 = vmatpush1.msra.mxu0 0.0
  %1257 = vmatprep.subr.mxu0 0.0
  %1258 = vmatpush1.msra.mxu0 0.0
  %1259 = vmatprep.subr.mxu0 0.0
  %1260 = vmatpush1.msra.mxu0 0.0
  %1261 = vmatprep.subr.mxu0 0.0
  %1262 = vmatpush1.msra.mxu0 0.0
  %1263 = vmatprep.subr.mxu0 0.0
  %1264 = vmatpush1.msra.mxu0 0.0
  %1265 = vmatprep.subr.mxu0 0.0
  %1266 = vmatpush1.msra.mxu0 0.0
  %1267 = vmatprep.subr.mxu0 0.0
  %1268 = vmatpush1.msra.mxu0 0.0
  %1269 = vmatprep.subr.mxu0 0.0
  %1270 = vmatpush1.msra.mxu0 0.0
  %1271 = vmatprep.subr.mxu0 0.0
  %1272 = vmatpush1.msra.mxu0 0.0
  %1273 = vmatprep.subr.mxu0 0.0
  %1274 = vmatpush1.msra.mxu0 0.0
  %1275 = vmatprep.subr.mxu0 0.0
  %1276 = vmatpush1.msra.mxu0 0.0
  %1277 = vmatprep.subr.mxu0 0.0
  %1278 = vmatpush1.msra.mxu0 0.0
  %1279 = vmatprep.subr.mxu0 0.0
  %1280 = vmatpush1.msra.mxu0 0.0
  %1281 = vmatprep.subr.mxu0 0.0
  %1282 = vmatpush1.msra.mxu0 0.0
  %1283 = vmatprep.subr.mxu0 0.0
  %1284 = vmatpush1.msra.mxu0 0.0
  %1285 = vmatprep.subr.mxu0 0.0
  %1286 = vmatpush1.msra.mxu0 0.0
  %1287 = vmatprep.subr.mxu0 0.0
  %1288 = vmatpush1.msra.mxu0 0.0
  %1289 = vmatprep.subr.mxu0 0.0
  %1290 = vmatpush1.msra.mxu0 0.0
  %1291 = vmatprep.subr.mxu0 0.0
  %1292 = vmatpush1.msra.mxu0 0.0
  %1293 = vmatprep.subr.mxu0 0.0
  %1294 = vmatpush1.msra.mxu0 0.0
  %1295 = vmatprep.subr.mxu0 0.0
  %1296 = vmatpush1.msra.mxu0 0.0
  %1297 = vmatprep.subr.mxu0 0.0
  %1298 = vmatpush1.msra.mxu0 0.0
  %1299 = vmatprep.subr.mxu0 0.0
  %1300 = vmatpush1.msra.mxu0 0.0
  %1301 = vmatprep.subr.mxu0 0.0
  %1302 = vmatpush1.msra.mxu0 0.0
  %1303 = vmatprep.mubr.f32.mxu0 0.0
  %v1304 = vand.u32 %v1059, 4294901760
  %v1305 = vsub.f32 %v1059, %v1304
  %1306 = vmatmul.mubr.f32.gmra.mrb[0].mxu0 %v1305
  %v1307 = vpop.f32.mrb[0].mxu0
  %v1308 = vadd.f32 %v1228, %v1307
  %v1309 = vpop.f32.mrb[0].mxu0
  %1310 = vdwg.mxu0
  %1311 = vmatprep.subr.mxu0 0.0
  %v1312 = vand.u32 %v24, 4294901760
  %1313 = vmatpush1.msra.mxu0 %v1312
  %1314 = vmatprep.subr.mxu0 0.0
  %v1315 = vand.u32 %v25, 4294901760
  %1316 = vmatpush1.msra.mxu0 %v1315
  %1317 = vmatprep.subr.mxu0 0.0
  %v1318 = vand.u32 %v26, 4294901760
  %1319 = vmatpush1.msra.mxu0 %v1318
  %1320 = vmatprep.subr.mxu0 0.0
  %v1321 = vand.u32 %v27, 4294901760
  %1322 = vmatpush1.msra.mxu0 %v1321
  %1323 = vmatprep.subr.mxu0 0.0
  %1324 = vmatpush1.msra.mxu0 0.0
  %1325 = vmatprep.subr.mxu0 0.0
  %1326 = vmatpush1.msra.mxu0 0.0
  %1327 = vmatprep.subr.mxu0 0.0
  %1328 = vmatpush1.msra.mxu0 0.0
  %1329 = vmatprep.subr.mxu0 0.0
  %1330 = vmatpush1.msra.mxu0 0.0
  %1331 = vmatprep.subr.mxu0 0.0
  %1332 = vmatpush1.msra.mxu0 0.0
  %1333 = vmatprep.subr.mxu0 0.0
  %1334 = vmatpush1.msra.mxu0 0.0
  %1335 = vmatprep.subr.mxu0 0.0
  %1336 = vmatpush1.msra.mxu0 0.0
  %1337 = vmatprep.subr.mxu0 0.0
  %1338 = vmatpush1.msra.mxu0 0.0
  %1339 = vmatprep.subr.mxu0 0.0
  %1340 = vmatpush1.msra.mxu0 0.0
  %1341 = vmatprep.subr.mxu0 0.0
  %1342 = vmatpush1.msra.mxu0 0.0
  %1343 = vmatprep.subr.mxu0 0.0
  %1344 = vmatpush1.msra.mxu0 0.0
  %1345 = vmatprep.subr.mxu0 0.0
  %1346 = vmatpush1.msra.mxu0 0.0
  %1347 = vmatprep.subr.mxu0 0.0
  %1348 = vmatpush1.msra.mxu0 0.0
  %1349 = vmatprep.subr.mxu0 0.0
  %1350 = vmatpush1.msra.mxu0 0.0
  %1351 = vmatprep.subr.mxu0 0.0
  %1352 = vmatpush1.msra.mxu0 0.0
  %1353 = vmatprep.subr.mxu0 0.0
  %1354 = vmatpush1.msra.mxu0 0.0
  %1355 = vmatprep.subr.mxu0 0.0
  %1356 = vmatpush1.msra.mxu0 0.0
  %1357 = vmatprep.subr.mxu0 0.0
  %1358 = vmatpush1.msra.mxu0 0.0
  %1359 = vmatprep.subr.mxu0 0.0
  %1360 = vmatpush1.msra.mxu0 0.0
  %1361 = vmatprep.subr.mxu0 0.0
  %1362 = vmatpush1.msra.mxu0 0.0
  %1363 = vmatprep.subr.mxu0 0.0
  %1364 = vmatpush1.msra.mxu0 0.0
  %1365 = vmatprep.subr.mxu0 0.0
  %1366 = vmatpush1.msra.mxu0 0.0
  %1367 = vmatprep.subr.mxu0 0.0
  %1368 = vmatpush1.msra.mxu0 0.0
  %1369 = vmatprep.subr.mxu0 0.0
  %1370 = vmatpush1.msra.mxu0 0.0
  %1371 = vmatprep.subr.mxu0 0.0
  %1372 = vmatpush1.msra.mxu0 0.0
  %1373 = vmatprep.subr.mxu0 0.0
  %1374 = vmatpush1.msra.mxu0 0.0
  %1375 = vmatprep.subr.mxu0 0.0
  %1376 = vmatpush1.msra.mxu0 0.0
  %1377 = vmatprep.subr.mxu0 0.0
  %1378 = vmatpush1.msra.mxu0 0.0
  %1379 = vmatprep.mubr.f32.mxu0 0.0
  %v1380 = vand.u32 %v1059, 4294901760
  %v1381 = vsub.f32 %v1059, %v1380
  %v1382 = vand.u32 %v1381, 4294901760
  %1383 = vmatmul.mubr.f32.gmra.mrb[0].mxu0 %v1382
  %v1384 = vpop.f32.mrb[0].mxu0
  %v1385 = vadd.f32 %v1308, %v1384
  %v1386 = vpop.f32.mrb[0].mxu0
  %1387 = vdwg.mxu0
  %1388 = vmatprep.subr.mxu0 0.0
  %v1389 = vand.u32 %v24, 4294901760
  %v1390 = vsub.f32 %v24, %v1389
  %v1391 = vand.u32 %v1390, 4294901760
  %1392 = vmatpush1.msra.mxu0 %v1391
  %1393 = vmatprep.subr.mxu0 0.0
  %v1394 = vand.u32 %v25, 4294901760
  %v1395 = vsub.f32 %v25, %v1394
  %v1396 = vand.u32 %v1395, 4294901760
  %1397 = vmatpush1.msra.mxu0 %v1396
  %1398 = vmatprep.subr.mxu0 0.0
  %v1399 = vand.u32 %v26, 4294901760
  %v1400 = vsub.f32 %v26, %v1399
  %v1401 = vand.u32 %v1400, 4294901760
  %1402 = vmatpush1.msra.mxu0 %v1401
  %1403 = vmatprep.subr.mxu0 0.0
  %v1404 = vand.u32 %v27, 4294901760
  %v1405 = vsub.f32 %v27, %v1404
  %v1406 = vand.u32 %v1405, 4294901760
  %1407 = vmatpush1.msra.mxu0 %v1406
  %1408 = vmatprep.subr.mxu0 0.0
  %1409 = vmatpush1.msra.mxu0 0.0
  %1410 = vmatprep.subr.mxu0 0.0
  %1411 = vmatpush1.msra.mxu0 0.0
  %1412 = vmatprep.subr.mxu0 0.0
  %1413 = vmatpush1.msra.mxu0 0.0
  %1414 = vmatprep.subr.mxu0 0.0
  %1415 = vmatpush1.msra.mxu0 0.0
  %1416 = vmatprep.subr.mxu0 0.0
  %1417 = vmatpush1.msra.mxu0 0.0
  %1418 = vmatprep.subr.mxu0 0.0
  %1419 = vmatpush1.msra.mxu0 0.0
  %1420 = vmatprep.subr.mxu0 0.0
  %1421 = vmatpush1.msra.mxu0 0.0
  %1422 = vmatprep.subr.mxu0 0.0
  %1423 = vmatpush1.msra.mxu0 0.0
  %1424 = vmatprep.subr.mxu0 0.0
  %1425 = vmatpush1.msra.mxu0 0.0
  %1426 = vmatprep.subr.mxu0 0.0
  %1427 = vmatpush1.msra.mxu0 0.0
  %1428 = vmatprep.subr.mxu0 0.0
  %1429 = vmatpush1.msra.mxu0 0.0
  %1430 = vmatprep.subr.mxu0 0.0
  %1431 = vmatpush1.msra.mxu0 0.0
  %1432 = vmatprep.subr.mxu0 0.0
  %1433 = vmatpush1.msra.mxu0 0.0
  %1434 = vmatprep.subr.mxu0 0.0
  %1435 = vmatpush1.msra.mxu0 0.0
  %1436 = vmatprep.subr.mxu0 0.0
  %1437 = vmatpush1.msra.mxu0 0.0
  %1438 = vmatprep.subr.mxu0 0.0
  %1439 = vmatpush1.msra.mxu0 0.0
  %1440 = vmatprep.subr.mxu0 0.0
  %1441 = vmatpush1.msra.mxu0 0.0
  %1442 = vmatprep.subr.mxu0 0.0
  %1443 = vmatpush1.msra.mxu0 0.0
  %1444 = vmatprep.subr.mxu0 0.0
  %1445 = vmatpush1.msra.mxu0 0.0
  %1446 = vmatprep.subr.mxu0 0.0
  %1447 = vmatpush1.msra.mxu0 0.0
  %1448 = vmatprep.subr.mxu0 0.0
  %1449 = vmatpush1.msra.mxu0 0.0
  %1450 = vmatprep.subr.mxu0 0.0
  %1451 = vmatpush1.msra.mxu0 0.0
  %1452 = vmatprep.subr.mxu0 0.0
  %1453 = vmatpush1.msra.mxu0 0.0
  %1454 = vmatprep.subr.mxu0 0.0
  %1455 = vmatpush1.msra.mxu0 0.0
  %1456 = vmatprep.subr.mxu0 0.0
  %1457 = vmatpush1.msra.mxu0 0.0
  %1458 = vmatprep.subr.mxu0 0.0
  %1459 = vmatpush1.msra.mxu0 0.0
  %1460 = vmatprep.subr.mxu0 0.0
  %1461 = vmatpush1.msra.mxu0 0.0
  %1462 = vmatprep.subr.mxu0 0.0
  %1463 = vmatpush1.msra.mxu0 0.0
  %1464 = vmatprep.mubr.f32.mxu0 0.0
  %v1465 = vand.u32 %v1059, 4294901760
  %1466 = vmatmul.mubr.f32.gmra.mrb[0].mxu0 %v1465
  %v1467 = vpop.f32.mrb[0].mxu0
  %v1468 = vadd.f32 %v1385, %v1467
  %v1469 = vpop.f32.mrb[0].mxu0
  %1470 = vdwg.mxu0
  %1471 = vmatprep.subr.mxu0 0.0
  %v1472 = vand.u32 %v24, 4294901760
  %1473 = vmatpush1.msra.mxu0 %v1472
  %1474 = vmatprep.subr.mxu0 0.0
  %v1475 = vand.u32 %v25, 4294901760
  %1476 = vmatpush1.msra.mxu0 %v1475
  %1477 = vmatprep.subr.mxu0 0.0
  %v1478 = vand.u32 %v26, 4294901760
  %1479 = vmatpush1.msra.mxu0 %v1478
  %1480 = vmatprep.subr.mxu0 0.0
  %v1481 = vand.u32 %v27, 4294901760
  %1482 = vmatpush1.msra.mxu0 %v1481
  %1483 = vmatprep.subr.mxu0 0.0
  %1484 = vmatpush1.msra.mxu0 0.0
  %1485 = vmatprep.subr.mxu0 0.0
  %1486 = vmatpush1.msra.mxu0 0.0
  %1487 = vmatprep.subr.mxu0 0.0
  %1488 = vmatpush1.msra.mxu0 0.0
  %1489 = vmatprep.subr.mxu0 0.0
  %1490 = vmatpush1.msra.mxu0 0.0
  %1491 = vmatprep.subr.mxu0 0.0
  %1492 = vmatpush1.msra.mxu0 0.0
  %1493 = vmatprep.subr.mxu0 0.0
  %1494 = vmatpush1.msra.mxu0 0.0
  %1495 = vmatprep.subr.mxu0 0.0
  %1496 = vmatpush1.msra.mxu0 0.0
  %1497 = vmatprep.subr.mxu0 0.0
  %1498 = vmatpush1.msra.mxu0 0.0
  %1499 = vmatprep.subr.mxu0 0.0
  %1500 = vmatpush1.msra.mxu0 0.0
  %1501 = vmatprep.subr.mxu0 0.0
  %1502 = vmatpush1.msra.mxu0 0.0
  %1503 = vmatprep.subr.mxu0 0.0
  %1504 = vmatpush1.msra.mxu0 0.0
  %1505 = vmatprep.subr.mxu0 0.0
  %1506 = vmatpush1.msra.mxu0 0.0
  %1507 = vmatprep.subr.mxu0 0.0
  %1508 = vmatpush1.msra.mxu0 0.0
  %1509 = vmatprep.subr.mxu0 0.0
  %1510 = vmatpush1.msra.mxu0 0.0
  %1511 = vmatprep.subr.mxu0 0.0
  %1512 = vmatpush1.msra.mxu0 0.0
  %1513 = vmatprep.subr.mxu0 0.0
  %1514 = vmatpush1.msra.mxu0 0.0
  %1515 = vmatprep.subr.mxu0 0.0
  %1516 = vmatpush1.msra.mxu0 0.0
  %1517 = vmatprep.subr.mxu0 0.0
  %1518 = vmatpush1.msra.mxu0 0.0
  %1519 = vmatprep.subr.mxu0 0.0
  %1520 = vmatpush1.msra.mxu0 0.0
  %1521 = vmatprep.subr.mxu0 0.0
  %1522 = vmatpush1.msra.mxu0 0.0
  %1523 = vmatprep.subr.mxu0 0.0
  %1524 = vmatpush1.msra.mxu0 0.0
  %1525 = vmatprep.subr.mxu0 0.0
  %1526 = vmatpush1.msra.mxu0 0.0
  %1527 = vmatprep.subr.mxu0 0.0
  %1528 = vmatpush1.msra.mxu0 0.0
  %1529 = vmatprep.subr.mxu0 0.0
  %1530 = vmatpush1.msra.mxu0 0.0
  %1531 = vmatprep.subr.mxu0 0.0
  %1532 = vmatpush1.msra.mxu0 0.0
  %1533 = vmatprep.subr.mxu0 0.0
  %1534 = vmatpush1.msra.mxu0 0.0
  %1535 = vmatprep.subr.mxu0 0.0
  %1536 = vmatpush1.msra.mxu0 0.0
  %1537 = vmatprep.subr.mxu0 0.0
  %1538 = vmatpush1.msra.mxu0 0.0
  %1539 = vmatprep.mubr.f32.mxu0 0.0
  %v1540 = vand.u32 %v1059, 4294901760
  %1541 = vmatmul.mubr.f32.gmra.mrb[0].mxu0 %v1540
  %v1542 = vpop.f32.mrb[0].mxu0
  %v1543 = vadd.f32 %v1468, %v1542
  %v1544 = vpop.f32.mrb[0].mxu0
  %1545 = vdwg.mxu0
  %v1546 = vmul.f32 %v1543, 1.442695
  %v1547 = vpow.pop %v1546
  %v1548 = vsel %vm541, %v1547, 0.0
  %1549 = vadd.xlane.f32.xlu0 %v1548
  %v1550 = vpop.xlane.xlu0 %1549
  %v1551 = vmul.f32 %v1547, %v1543
  %v1552 = vsel %vm541, %v1551, 0.0
  %1553 = vadd.xlane.f32.xlu0 %v1552
  %v1554 = vpop.xlane.xlu0 %1553
  %1555 = vmatprep.subr.mxu0 0.0
  %v1556 = vand.u32 %v28, 4294901760
  %1557 = vmatpush1.msra.mxu0 %v1556
  %1558 = vmatprep.subr.mxu0 0.0
  %v1559 = vand.u32 %v29, 4294901760
  %1560 = vmatpush1.msra.mxu0 %v1559
  %1561 = vmatprep.subr.mxu0 0.0
  %v1562 = vand.u32 %v30, 4294901760
  %1563 = vmatpush1.msra.mxu0 %v1562
  %1564 = vmatprep.subr.mxu0 0.0
  %v1565 = vand.u32 %v31, 4294901760
  %1566 = vmatpush1.msra.mxu0 %v1565
  %1567 = vmatprep.subr.mxu0 0.0
  %1568 = vmatpush1.msra.mxu0 0.0
  %1569 = vmatprep.subr.mxu0 0.0
  %1570 = vmatpush1.msra.mxu0 0.0
  %1571 = vmatprep.subr.mxu0 0.0
  %1572 = vmatpush1.msra.mxu0 0.0
  %1573 = vmatprep.subr.mxu0 0.0
  %1574 = vmatpush1.msra.mxu0 0.0
  %1575 = vmatprep.subr.mxu0 0.0
  %1576 = vmatpush1.msra.mxu0 0.0
  %1577 = vmatprep.subr.mxu0 0.0
  %1578 = vmatpush1.msra.mxu0 0.0
  %1579 = vmatprep.subr.mxu0 0.0
  %1580 = vmatpush1.msra.mxu0 0.0
  %1581 = vmatprep.subr.mxu0 0.0
  %1582 = vmatpush1.msra.mxu0 0.0
  %1583 = vmatprep.subr.mxu0 0.0
  %1584 = vmatpush1.msra.mxu0 0.0
  %1585 = vmatprep.subr.mxu0 0.0
  %1586 = vmatpush1.msra.mxu0 0.0
  %1587 = vmatprep.subr.mxu0 0.0
  %1588 = vmatpush1.msra.mxu0 0.0
  %1589 = vmatprep.subr.mxu0 0.0
  %1590 = vmatpush1.msra.mxu0 0.0
  %1591 = vmatprep.subr.mxu0 0.0
  %1592 = vmatpush1.msra.mxu0 0.0
  %1593 = vmatprep.subr.mxu0 0.0
  %1594 = vmatpush1.msra.mxu0 0.0
  %1595 = vmatprep.subr.mxu0 0.0
  %1596 = vmatpush1.msra.mxu0 0.0
  %1597 = vmatprep.subr.mxu0 0.0
  %1598 = vmatpush1.msra.mxu0 0.0
  %1599 = vmatprep.subr.mxu0 0.0
  %1600 = vmatpush1.msra.mxu0 0.0
  %1601 = vmatprep.subr.mxu0 0.0
  %1602 = vmatpush1.msra.mxu0 0.0
  %1603 = vmatprep.subr.mxu0 0.0
  %1604 = vmatpush1.msra.mxu0 0.0
  %1605 = vmatprep.subr.mxu0 0.0
  %1606 = vmatpush1.msra.mxu0 0.0
  %1607 = vmatprep.subr.mxu0 0.0
  %1608 = vmatpush1.msra.mxu0 0.0
  %1609 = vmatprep.subr.mxu0 0.0
  %1610 = vmatpush1.msra.mxu0 0.0
  %1611 = vmatprep.subr.mxu0 0.0
  %1612 = vmatpush1.msra.mxu0 0.0
  %1613 = vmatprep.subr.mxu0 0.0
  %1614 = vmatpush1.msra.mxu0 0.0
  %1615 = vmatprep.subr.mxu0 0.0
  %1616 = vmatpush1.msra.mxu0 0.0
  %1617 = vmatprep.subr.mxu0 0.0
  %1618 = vmatpush1.msra.mxu0 0.0
  %1619 = vmatprep.subr.mxu0 0.0
  %1620 = vmatpush1.msra.mxu0 0.0
  %1621 = vmatprep.subr.mxu0 0.0
  %1622 = vmatpush1.msra.mxu0 0.0
  %1623 = vmatprep.mubr.f32.mxu0 0.0
  %v1624 = vand.u32 %v1059, 4294901760
  %v1625 = vsub.f32 %v1059, %v1624
  %v1626 = vand.u32 %v1625, 4294901760
  %v1627 = vsub.f32 %v1625, %v1626
  %v1628 = vand.u32 %v1627, 4294901760
  %1629 = vmatmul.mubr.f32.gmra.mrb[0].mxu0 %v1628
  %v1630 = vpop.f32.mrb[0].mxu0
  %v1631 = vadd.f32 0.0, %v1630
  %v1632 = vpop.f32.mrb[0].mxu0
  %1633 = vdwg.mxu0
  %1634 = vmatprep.subr.mxu0 0.0
  %v1635 = vand.u32 %v28, 4294901760
  %v1636 = vsub.f32 %v28, %v1635
  %v1637 = vand.u32 %v1636, 4294901760
  %v1638 = vsub.f32 %v1636, %v1637
  %v1639 = vand.u32 %v1638, 4294901760
  %1640 = vmatpush1.msra.mxu0 %v1639
  %1641 = vmatprep.subr.mxu0 0.0
  %v1642 = vand.u32 %v29, 4294901760
  %v1643 = vsub.f32 %v29, %v1642
  %v1644 = vand.u32 %v1643, 4294901760
  %v1645 = vsub.f32 %v1643, %v1644
  %v1646 = vand.u32 %v1645, 4294901760
  %1647 = vmatpush1.msra.mxu0 %v1646
  %1648 = vmatprep.subr.mxu0 0.0
  %v1649 = vand.u32 %v30, 4294901760
  %v1650 = vsub.f32 %v30, %v1649
  %v1651 = vand.u32 %v1650, 4294901760
  %v1652 = vsub.f32 %v1650, %v1651
  %v1653 = vand.u32 %v1652, 4294901760
  %1654 = vmatpush1.msra.mxu0 %v1653
  %1655 = vmatprep.subr.mxu0 0.0
  %v1656 = vand.u32 %v31, 4294901760
  %v1657 = vsub.f32 %v31, %v1656
  %v1658 = vand.u32 %v1657, 4294901760
  %v1659 = vsub.f32 %v1657, %v1658
  %v1660 = vand.u32 %v1659, 4294901760
  %1661 = vmatpush1.msra.mxu0 %v1660
  %1662 = vmatprep.subr.mxu0 0.0
  %1663 = vmatpush1.msra.mxu0 0.0
  %1664 = vmatprep.subr.mxu0 0.0
  %1665 = vmatpush1.msra.mxu0 0.0
  %1666 = vmatprep.subr.mxu0 0.0
  %1667 = vmatpush1.msra.mxu0 0.0
  %1668 = vmatprep.subr.mxu0 0.0
  %1669 = vmatpush1.msra.mxu0 0.0
  %1670 = vmatprep.subr.mxu0 0.0
  %1671 = vmatpush1.msra.mxu0 0.0
  %1672 = vmatprep.subr.mxu0 0.0
  %1673 = vmatpush1.msra.mxu0 0.0
  %1674 = vmatprep.subr.mxu0 0.0
  %1675 = vmatpush1.msra.mxu0 0.0
  %1676 = vmatprep.subr.mxu0 0.0
  %1677 = vmatpush1.msra.mxu0 0.0
  %1678 = vmatprep.subr.mxu0 0.0
  %1679 = vmatpush1.msra.mxu0 0.0
  %1680 = vmatprep.subr.mxu0 0.0
  %1681 = vmatpush1.msra.mxu0 0.0
  %1682 = vmatprep.subr.mxu0 0.0
  %1683 = vmatpush1.msra.mxu0 0.0
  %1684 = vmatprep.subr.mxu0 0.0
  %1685 = vmatpush1.msra.mxu0 0.0
  %1686 = vmatprep.subr.mxu0 0.0
  %1687 = vmatpush1.msra.mxu0 0.0
  %1688 = vmatprep.subr.mxu0 0.0
  %1689 = vmatpush1.msra.mxu0 0.0
  %1690 = vmatprep.subr.mxu0 0.0
  %1691 = vmatpush1.msra.mxu0 0.0
  %1692 = vmatprep.subr.mxu0 0.0
  %1693 = vmatpush1.msra.mxu0 0.0
  %1694 = vmatprep.subr.mxu0 0.0
  %1695 = vmatpush1.msra.mxu0 0.0
  %1696 = vmatprep.subr.mxu0 0.0
  %1697 = vmatpush1.msra.mxu0 0.0
  %1698 = vmatprep.subr.mxu0 0.0
  %1699 = vmatpush1.msra.mxu0 0.0
  %1700 = vmatprep.subr.mxu0 0.0
  %1701 = vmatpush1.msra.mxu0 0.0
  %1702 = vmatprep.subr.mxu0 0.0
  %1703 = vmatpush1.msra.mxu0 0.0
  %1704 = vmatprep.subr.mxu0 0.0
  %1705 = vmatpush1.msra.mxu0 0.0
  %1706 = vmatprep.subr.mxu0 0.0
  %1707 = vmatpush1.msra.mxu0 0.0
  %1708 = vmatprep.subr.mxu0 0.0
  %1709 = vmatpush1.msra.mxu0 0.0
  %1710 = vmatprep.subr.mxu0 0.0
  %1711 = vmatpush1.msra.mxu0 0.0
  %1712 = vmatprep.subr.mxu0 0.0
  %1713 = vmatpush1.msra.mxu0 0.0
  %1714 = vmatprep.subr.mxu0 0.0
  %1715 = vmatpush1.msra.mxu0 0.0
  %1716 = vmatprep.subr.mxu0 0.0
  %1717 = vmatpush1.msra.mxu0 0.0
  %1718 = vmatprep.mubr.f32.mxu0 0.0
  %v1719 = vand.u32 %v1059, 4294901760
  %1720 = vmatmul.mubr.f32.gmra.mrb[0].mxu0 %v1719
  %v1721 = vpop.f32.mrb[0].mxu0
  %v1722 = vadd.f32 %v1631, %v1721
  %v1723 = vpop.f32.mrb[0].mxu0
  %1724 = vdwg.mxu0
  %1725 = vmatprep.subr.mxu0 0.0
  %v1726 = vand.u32 %v28, 4294901760
  %v1727 = vsub.f32 %v28, %v1726
  %1728 = vmatpush1.msra.mxu0 %v1727
  %1729 = vmatprep.subr.mxu0 0.0
  %v1730 = vand.u32 %v29, 4294901760
  %v1731 = vsub.f32 %v29, %v1730
  %1732 = vmatpush1.msra.mxu0 %v1731
  %1733 = vmatprep.subr.mxu0 0.0
  %v1734 = vand.u32 %v30, 4294901760
  %v1735 = vsub.f32 %v30, %v1734
  %1736 = vmatpush1.msra.mxu0 %v1735
  %1737 = vmatprep.subr.mxu0 0.0
  %v1738 = vand.u32 %v31, 4294901760
  %v1739 = vsub.f32 %v31, %v1738
  %1740 = vmatpush1.msra.mxu0 %v1739
  %1741 = vmatprep.subr.mxu0 0.0
  %1742 = vmatpush1.msra.mxu0 0.0
  %1743 = vmatprep.subr.mxu0 0.0
  %1744 = vmatpush1.msra.mxu0 0.0
  %1745 = vmatprep.subr.mxu0 0.0
  %1746 = vmatpush1.msra.mxu0 0.0
  %1747 = vmatprep.subr.mxu0 0.0
  %1748 = vmatpush1.msra.mxu0 0.0
  %1749 = vmatprep.subr.mxu0 0.0
  %1750 = vmatpush1.msra.mxu0 0.0
  %1751 = vmatprep.subr.mxu0 0.0
  %1752 = vmatpush1.msra.mxu0 0.0
  %1753 = vmatprep.subr.mxu0 0.0
  %1754 = vmatpush1.msra.mxu0 0.0
  %1755 = vmatprep.subr.mxu0 0.0
  %1756 = vmatpush1.msra.mxu0 0.0
  %1757 = vmatprep.subr.mxu0 0.0
  %1758 = vmatpush1.msra.mxu0 0.0
  %1759 = vmatprep.subr.mxu0 0.0
  %1760 = vmatpush1.msra.mxu0 0.0
  %1761 = vmatprep.subr.mxu0 0.0
  %1762 = vmatpush1.msra.mxu0 0.0
  %1763 = vmatprep.subr.mxu0 0.0
  %1764 = vmatpush1.msra.mxu0 0.0
  %1765 = vmatprep.subr.mxu0 0.0
  %1766 = vmatpush1.msra.mxu0 0.0
  %1767 = vmatprep.subr.mxu0 0.0
  %1768 = vmatpush1.msra.mxu0 0.0
  %1769 = vmatprep.subr.mxu0 0.0
  %1770 = vmatpush1.msra.mxu0 0.0
  %1771 = vmatprep.subr.mxu0 0.0
  %1772 = vmatpush1.msra.mxu0 0.0
  %1773 = vmatprep.subr.mxu0 0.0
  %1774 = vmatpush1.msra.mxu0 0.0
  %1775 = vmatprep.subr.mxu0 0.0
  %1776 = vmatpush1.msra.mxu0 0.0
  %1777 = vmatprep.subr.mxu0 0.0
  %1778 = vmatpush1.msra.mxu0 0.0
  %1779 = vmatprep.subr.mxu0 0.0
  %1780 = vmatpush1.msra.mxu0 0.0
  %1781 = vmatprep.subr.mxu0 0.0
  %1782 = vmatpush1.msra.mxu0 0.0
  %1783 = vmatprep.subr.mxu0 0.0
  %1784 = vmatpush1.msra.mxu0 0.0
  %1785 = vmatprep.subr.mxu0 0.0
  %1786 = vmatpush1.msra.mxu0 0.0
  %1787 = vmatprep.subr.mxu0 0.0
  %1788 = vmatpush1.msra.mxu0 0.0
  %1789 = vmatprep.subr.mxu0 0.0
  %1790 = vmatpush1.msra.mxu0 0.0
  %1791 = vmatprep.subr.mxu0 0.0
  %1792 = vmatpush1.msra.mxu0 0.0
  %1793 = vmatprep.subr.mxu0 0.0
  %1794 = vmatpush1.msra.mxu0 0.0
  %1795 = vmatprep.subr.mxu0 0.0
  %1796 = vmatpush1.msra.mxu0 0.0
  %1797 = vmatprep.mubr.f32.mxu0 0.0
  %v1798 = vand.u32 %v1059, 4294901760
  %v1799 = vsub.f32 %v1059, %v1798
  %1800 = vmatmul.mubr.f32.gmra.mrb[0].mxu0 %v1799
  %v1801 = vpop.f32.mrb[0].mxu0
  %v1802 = vadd.f32 %v1722, %v1801
  %v1803 = vpop.f32.mrb[0].mxu0
  %1804 = vdwg.mxu0
  %1805 = vmatprep.subr.mxu0 0.0
  %v1806 = vand.u32 %v28, 4294901760
  %1807 = vmatpush1.msra.mxu0 %v1806
  %1808 = vmatprep.subr.mxu0 0.0
  %v1809 = vand.u32 %v29, 4294901760
  %1810 = vmatpush1.msra.mxu0 %v1809
  %1811 = vmatprep.subr.mxu0 0.0
  %v1812 = vand.u32 %v30, 4294901760
  %1813 = vmatpush1.msra.mxu0 %v1812
  %1814 = vmatprep.subr.mxu0 0.0
  %v1815 = vand.u32 %v31, 4294901760
  %1816 = vmatpush1.msra.mxu0 %v1815
  %1817 = vmatprep.subr.mxu0 0.0
  %1818 = vmatpush1.msra.mxu0 0.0
  %1819 = vmatprep.subr.mxu0 0.0
  %1820 = vmatpush1.msra.mxu0 0.0
  %1821 = vmatprep.subr.mxu0 0.0
  %1822 = vmatpush1.msra.mxu0 0.0
  %1823 = vmatprep.subr.mxu0 0.0
  %1824 = vmatpush1.msra.mxu0 0.0
  %1825 = vmatprep.subr.mxu0 0.0
  %1826 = vmatpush1.msra.mxu0 0.0
  %1827 = vmatprep.subr.mxu0 0.0
  %1828 = vmatpush1.msra.mxu0 0.0
  %1829 = vmatprep.subr.mxu0 0.0
  %1830 = vmatpush1.msra.mxu0 0.0
  %1831 = vmatprep.subr.mxu0 0.0
  %1832 = vmatpush1.msra.mxu0 0.0
  %1833 = vmatprep.subr.mxu0 0.0
  %1834 = vmatpush1.msra.mxu0 0.0
  %1835 = vmatprep.subr.mxu0 0.0
  %1836 = vmatpush1.msra.mxu0 0.0
  %1837 = vmatprep.subr.mxu0 0.0
  %1838 = vmatpush1.msra.mxu0 0.0
  %1839 = vmatprep.subr.mxu0 0.0
  %1840 = vmatpush1.msra.mxu0 0.0
  %1841 = vmatprep.subr.mxu0 0.0
  %1842 = vmatpush1.msra.mxu0 0.0
  %1843 = vmatprep.subr.mxu0 0.0
  %1844 = vmatpush1.msra.mxu0 0.0
  %1845 = vmatprep.subr.mxu0 0.0
  %1846 = vmatpush1.msra.mxu0 0.0
  %1847 = vmatprep.subr.mxu0 0.0
  %1848 = vmatpush1.msra.mxu0 0.0
  %1849 = vmatprep.subr.mxu0 0.0
  %1850 = vmatpush1.msra.mxu0 0.0
  %1851 = vmatprep.subr.mxu0 0.0
  %1852 = vmatpush1.msra.mxu0 0.0
  %1853 = vmatprep.subr.mxu0 0.0
  %1854 = vmatpush1.msra.mxu0 0.0
  %1855 = vmatprep.subr.mxu0 0.0
  %1856 = vmatpush1.msra.mxu0 0.0
  %1857 = vmatprep.subr.mxu0 0.0
  %1858 = vmatpush1.msra.mxu0 0.0
  %1859 = vmatprep.subr.mxu0 0.0
  %1860 = vmatpush1.msra.mxu0 0.0
  %1861 = vmatprep.subr.mxu0 0.0
  %1862 = vmatpush1.msra.mxu0 0.0
  %1863 = vmatprep.subr.mxu0 0.0
  %1864 = vmatpush1.msra.mxu0 0.0
  %1865 = vmatprep.subr.mxu0 0.0
  %1866 = vmatpush1.msra.mxu0 0.0
  %1867 = vmatprep.subr.mxu0 0.0
  %1868 = vmatpush1.msra.mxu0 0.0
  %1869 = vmatprep.subr.mxu0 0.0
  %1870 = vmatpush1.msra.mxu0 0.0
  %1871 = vmatprep.subr.mxu0 0.0
  %1872 = vmatpush1.msra.mxu0 0.0
  %1873 = vmatprep.mubr.f32.mxu0 0.0
  %v1874 = vand.u32 %v1059, 4294901760
  %v1875 = vsub.f32 %v1059, %v1874
  %v1876 = vand.u32 %v1875, 4294901760
  %1877 = vmatmul.mubr.f32.gmra.mrb[0].mxu0 %v1876
  %v1878 = vpop.f32.mrb[0].mxu0
  %v1879 = vadd.f32 %v1802, %v1878
  %v1880 = vpop.f32.mrb[0].mxu0
  %1881 = vdwg.mxu0
  %1882 = vmatprep.subr.mxu0 0.0
  %v1883 = vand.u32 %v28, 4294901760
  %v1884 = vsub.f32 %v28, %v1883
  %v1885 = vand.u32 %v1884, 4294901760
  %1886 = vmatpush1.msra.mxu0 %v1885
  %1887 = vmatprep.subr.mxu0 0.0
  %v1888 = vand.u32 %v29, 4294901760
  %v1889 = vsub.f32 %v29, %v1888
  %v1890 = vand.u32 %v1889, 4294901760
  %1891 = vmatpush1.msra.mxu0 %v1890
  %1892 = vmatprep.subr.mxu0 0.0
  %v1893 = vand.u32 %v30, 4294901760
  %v1894 = vsub.f32 %v30, %v1893
  %v1895 = vand.u32 %v1894, 4294901760
  %1896 = vmatpush1.msra.mxu0 %v1895
  %1897 = vmatprep.subr.mxu0 0.0
  %v1898 = vand.u32 %v31, 4294901760
  %v1899 = vsub.f32 %v31, %v1898
  %v1900 = vand.u32 %v1899, 4294901760
  %1901 = vmatpush1.msra.mxu0 %v1900
  %1902 = vmatprep.subr.mxu0 0.0
  %1903 = vmatpush1.msra.mxu0 0.0
  %1904 = vmatprep.subr.mxu0 0.0
  %1905 = vmatpush1.msra.mxu0 0.0
  %1906 = vmatprep.subr.mxu0 0.0
  %1907 = vmatpush1.msra.mxu0 0.0
  %1908 = vmatprep.subr.mxu0 0.0
  %1909 = vmatpush1.msra.mxu0 0.0
  %1910 = vmatprep.subr.mxu0 0.0
  %1911 = vmatpush1.msra.mxu0 0.0
  %1912 = vmatprep.subr.mxu0 0.0
  %1913 = vmatpush1.msra.mxu0 0.0
  %1914 = vmatprep.subr.mxu0 0.0
  %1915 = vmatpush1.msra.mxu0 0.0
  %1916 = vmatprep.subr.mxu0 0.0
  %1917 = vmatpush1.msra.mxu0 0.0
  %1918 = vmatprep.subr.mxu0 0.0
  %1919 = vmatpush1.msra.mxu0 0.0
  %1920 = vmatprep.subr.mxu0 0.0
  %1921 = vmatpush1.msra.mxu0 0.0
  %1922 = vmatprep.subr.mxu0 0.0
  %1923 = vmatpush1.msra.mxu0 0.0
  %1924 = vmatprep.subr.mxu0 0.0
  %1925 = vmatpush1.msra.mxu0 0.0
  %1926 = vmatprep.subr.mxu0 0.0
  %1927 = vmatpush1.msra.mxu0 0.0
  %1928 = vmatprep.subr.mxu0 0.0
  %1929 = vmatpush1.msra.mxu0 0.0
  %1930 = vmatprep.subr.mxu0 0.0
  %1931 = vmatpush1.msra.mxu0 0.0
  %1932 = vmatprep.subr.mxu0 0.0
  %1933 = vmatpush1.msra.mxu0 0.0
  %1934 = vmatprep.subr.mxu0 0.0
  %1935 = vmatpush1.msra.mxu0 0.0
  %1936 = vmatprep.subr.mxu0 0.0
  %1937 = vmatpush1.msra.mxu0 0.0
  %1938 = vmatprep.subr.mxu0 0.0
  %1939 = vmatpush1.msra.mxu0 0.0
  %1940 = vmatprep.subr.mxu0 0.0
  %1941 = vmatpush1.msra.mxu0 0.0
  %1942 = vmatprep.subr.mxu0 0.0
  %1943 = vmatpush1.msra.mxu0 0.0
  %1944 = vmatprep.subr.mxu0 0.0
  %1945 = vmatpush1.msra.mxu0 0.0
  %1946 = vmatprep.subr.mxu0 0.0
  %1947 = vmatpush1.msra.mxu0 0.0
  %1948 = vmatprep.subr.mxu0 0.0
  %1949 = vmatpush1.msra.mxu0 0.0
  %1950 = vmatprep.subr.mxu0 0.0
  %1951 = vmatpush1.msra.mxu0 0.0
  %1952 = vmatprep.subr.mxu0 0.0
  %1953 = vmatpush1.msra.mxu0 0.0
  %1954 = vmatprep.subr.mxu0 0.0
  %1955 = vmatpush1.msra.mxu0 0.0
  %1956 = vmatprep.subr.mxu0 0.0
  %1957 = vmatpush1.msra.mxu0 0.0
  %1958 = vmatprep.mubr.f32.mxu0 0.0
  %v1959 = vand.u32 %v1059, 4294901760
  %1960 = vmatmul.mubr.f32.gmra.mrb[0].mxu0 %v1959
  %v1961 = vpop.f32.mrb[0].mxu0
  %v1962 = vadd.f32 %v1879, %v1961
  %v1963 = vpop.f32.mrb[0].mxu0
  %1964 = vdwg.mxu0
  %1965 = vmatprep.subr.mxu0 0.0
  %v1966 = vand.u32 %v28, 4294901760
  %1967 = vmatpush1.msra.mxu0 %v1966
  %1968 = vmatprep.subr.mxu0 0.0
  %v1969 = vand.u32 %v29, 4294901760
  %1970 = vmatpush1.msra.mxu0 %v1969
  %1971 = vmatprep.subr.mxu0 0.0
  %v1972 = vand.u32 %v30, 4294901760
  %1973 = vmatpush1.msra.mxu0 %v1972
  %1974 = vmatprep.subr.mxu0 0.0
  %v1975 = vand.u32 %v31, 4294901760
  %1976 = vmatpush1.msra.mxu0 %v1975
  %1977 = vmatprep.subr.mxu0 0.0
  %1978 = vmatpush1.msra.mxu0 0.0
  %1979 = vmatprep.subr.mxu0 0.0
  %1980 = vmatpush1.msra.mxu0 0.0
  %1981 = vmatprep.subr.mxu0 0.0
  %1982 = vmatpush1.msra.mxu0 0.0
  %1983 = vmatprep.subr.mxu0 0.0
  %1984 = vmatpush1.msra.mxu0 0.0
  %1985 = vmatprep.subr.mxu0 0.0
  %1986 = vmatpush1.msra.mxu0 0.0
  %1987 = vmatprep.subr.mxu0 0.0
  %1988 = vmatpush1.msra.mxu0 0.0
  %1989 = vmatprep.subr.mxu0 0.0
  %1990 = vmatpush1.msra.mxu0 0.0
  %1991 = vmatprep.subr.mxu0 0.0
  %1992 = vmatpush1.msra.mxu0 0.0
  %1993 = vmatprep.subr.mxu0 0.0
  %1994 = vmatpush1.msra.mxu0 0.0
  %1995 = vmatprep.subr.mxu0 0.0
  %1996 = vmatpush1.msra.mxu0 0.0
  %1997 = vmatprep.subr.mxu0 0.0
  %1998 = vmatpush1.msra.mxu0 0.0
  %1999 = vmatprep.subr.mxu0 0.0
  %2000 = vmatpush1.msra.mxu0 0.0
  %2001 = vmatprep.subr.mxu0 0.0
  %2002 = vmatpush1.msra.mxu0 0.0
  %2003 = vmatprep.subr.mxu0 0.0
  %2004 = vmatpush1.msra.mxu0 0.0
  %2005 = vmatprep.subr.mxu0 0.0
  %2006 = vmatpush1.msra.mxu0 0.0
  %2007 = vmatprep.subr.mxu0 0.0
  %2008 = vmatpush1.msra.mxu0 0.0
  %2009 = vmatprep.subr.mxu0 0.0
  %2010 = vmatpush1.msra.mxu0 0.0
  %2011 = vmatprep.subr.mxu0 0.0
  %2012 = vmatpush1.msra.mxu0 0.0
  %2013 = vmatprep.subr.mxu0 0.0
  %2014 = vmatpush1.msra.mxu0 0.0
  %2015 = vmatprep.subr.mxu0 0.0
  %2016 = vmatpush1.msra.mxu0 0.0
  %2017 = vmatprep.subr.mxu0 0.0
  %2018 = vmatpush1.msra.mxu0 0.0
  %2019 = vmatprep.subr.mxu0 0.0
  %2020 = vmatpush1.msra.mxu0 0.0
  %2021 = vmatprep.subr.mxu0 0.0
  %2022 = vmatpush1.msra.mxu0 0.0
  %2023 = vmatprep.subr.mxu0 0.0
  %2024 = vmatpush1.msra.mxu0 0.0
  %2025 = vmatprep.subr.mxu0 0.0
  %2026 = vmatpush1.msra.mxu0 0.0
  %2027 = vmatprep.subr.mxu0 0.0
  %2028 = vmatpush1.msra.mxu0 0.0
  %2029 = vmatprep.subr.mxu0 0.0
  %2030 = vmatpush1.msra.mxu0 0.0
  %2031 = vmatprep.subr.mxu0 0.0
  %2032 = vmatpush1.msra.mxu0 0.0
  %2033 = vmatprep.mubr.f32.mxu0 0.0
  %v2034 = vand.u32 %v1059, 4294901760
  %2035 = vmatmul.mubr.f32.gmra.mrb[0].mxu0 %v2034
  %v2036 = vpop.f32.mrb[0].mxu0
  %v2037 = vadd.f32 %v1962, %v2036
  %v2038 = vpop.f32.mrb[0].mxu0
  %2039 = vdwg.mxu0
  %v2040 = vmul.f32 %v2037, 1.442695
  %v2041 = vpow.pop %v2040
  %v2042 = vsel %vm50, 0.0, %v2041
  %v2043 = vsel %vm541, %v2042, 0.0
  %2044 = vadd.xlane.f32.xlu0 %v2043
  %v2045 = vpop.xlane.xlu0 %2044
  %v2046 = vadd.f32 %v1550, %v2045
  %v2047 = vmul.f32 %v2042, %v2037
  %v2048 = vsel %vm541, %v2047, 0.0
  %2049 = vadd.xlane.f32.xlu0 %v2048
  %v2050 = vpop.xlane.xlu0 %2049
  %v2051 = vadd.f32 %v1554, %v2050
  %v2052 = vsub.f32 %v2046, %v40
  %v2053 = vmul.f32 %v2051, 0.1
  %v2054 = vsub.f32 %v2053, %v1048
  %v2055 = vmul.f32 %v2052, 0.8
  %v2056 = vmul.f32 %v2055, %v1052
  %v2057 = vadd.f32 %v1050, %v2056
  %v2058 = vmul.f32 %v2057, 14.0
  %v2059 = vrcp.pop %v2058
  %v2060 = vmul.f32 %v2054, %v2059
  %v2061 = vadd.f32 %v1054, %v2057
  %vm2062 = vcmask 7168
  %2063 = vst.msk [vmem:[%s5] sm:$0xff] %vm2062, %v2061
  %v2064 = vsub.f32 %v1057, %v37
  %v2065 = vsub.f32 %v2060, %v37
  %v2066 = vadd.f32 %v2064, %v2065
  %2067 = vst.msk [vmem:[%s6] sm:$0xff] %vm2062, %v2066
  // Predicated region
  $region22: #{tpu_custom_call.1} parent=0 // pred_check
    _
  $region23: #{tpu_custom_call.1} parent=0 // pred_check_branch
    %2069 = sbr.rel (0) target = $region25
  $region24: #{tpu_custom_call.1} parent=0 // pred_region
    _
  $region25: #{tpu_custom_call.1} parent=0 // pred_fallthru
    _
  // Predicated region
  $region26: #{tpu_custom_call.1} parent=0 // pred_check
    _
  $region27: #{tpu_custom_call.1} parent=0 // pred_check_branch
    %2071 = sbr.rel (0) target = $region29
  $region28: #{tpu_custom_call.1} parent=0 // pred_region
    _
  $region29: #{tpu_custom_call.1} parent=0 // pred_fallthru
    _
  // Predicated region
  $region30: #{tpu_custom_call.1} parent=0 // pred_check
    _
  $region31: #{tpu_custom_call.1} parent=0 // pred_check_branch
    %2073 = sbr.rel (0) target = $region33
  $region32: #{tpu_custom_call.1} parent=0 // pred_region
    _
  $region33: #{tpu_custom_call.1} parent=0 // pred_fallthru
    _
  // Predicated region
  $region34: #{tpu_custom_call.1} parent=0 // pred_check
    _
  $region35: #{tpu_custom_call.1} parent=0 // pred_check_branch
    %2075 = sbr.rel (0) target = $region37
  $region36: #{tpu_custom_call.1} parent=0 // pred_region
    _
  $region37: #{tpu_custom_call.1} parent=0 // pred_fallthru
    _

</llo_original>
